<compile_context>
chip_gen: v5e
topology: v5e:2x2
jax: 0.10.0
libtpu: 0.0.40
codegen_flags: <defaults>
</compile_context>

<pallas_src>
import jax
import jax.numpy as jnp
from jax.experimental import pallas as pl
from jax.experimental.pallas import tpu as pltpu

EPS = 1e-5                      # nn.InstanceNorm2d default (affine=False, biased var)
MXU_DTYPE = jnp.bfloat16        # MXU operand dtype (accumulation stays f32)
VMEM_LIMIT = 48 * 1024 * 1024   # generation-aware scoped-VMEM limit (< v7x 64 MiB phys)


# ------------------------------ small helpers --------------------------------

def _in_relu(x):
    """InstanceNorm (affine=False, biased variance) + ReLU over the lane (HW) axis."""
    mean = jnp.mean(x, axis=1, keepdims=True)
    var = jnp.mean(jnp.square(x - mean), axis=1, keepdims=True)
    return jnp.maximum((x - mean) * jax.lax.rsqrt(var + EPS), 0.0)


def _w_spec(shape):
    """BlockSpec for a small weight replicated across the grid."""
    return pl.BlockSpec(shape, lambda n: (0,) * len(shape))


# ------------- upsample: phase-decomposed ConvTranspose2d(4, s=2, p=1) -------

def _upsample_kernel(p_ref, w_ref, b_ref, o_ref):
    acc = jnp.dot(w_ref[...], p_ref[0], preferred_element_type=jnp.float32)
    o_ref[0] = (acc + b_ref[...]).astype(o_ref.dtype)


def upsample_conv_transpose(x1_nchw, pp):
    """ConvTranspose2d(C1, C1//2, k=4, s=2, p=1), channels-first, bf16.

    Returns `up` as (N, CH, OH*OW) bf16.
    """
    N, C1, H, W = x1_nchw.shape
    CH = pp['up_wmat'].shape[0] // 4
    OH, OW = 2 * H, 2 * W
    Mi = (H + 1) * (W + 1)

    # 2x2 patches of the 1-padded input, channels-first (no NHWC transpose of x1).
    x1p = jnp.pad(x1_nchw, ((0, 0), (0, 0), (1, 1), (1, 1))).astype(MXU_DTYPE)
    patches = jnp.concatenate(
        [x1p[:, :, dy:dy + H + 1, dx:dx + W + 1] for dy in (0, 1) for dx in (0, 1)],
        axis=1).reshape(N, 4 * C1, Mi)                                  # (N, 4*C1, Mi)

    up4 = pl.pallas_call(
        _upsample_kernel,
        out_shape=jax.ShapeDtypeStruct((N, 4 * CH, Mi), MXU_DTYPE),
        grid=(N,),
        in_specs=[pl.BlockSpec((1, 4 * C1, Mi), lambda n: (n, 0, 0)),
                  _w_spec((4 * CH, 4 * C1)),
                  _w_spec((4 * CH, 1))],
        out_specs=pl.BlockSpec((1, 4 * CH, Mi), lambda n: (n, 0, 0)),
        compiler_params=pltpu.CompilerParams(
            dimension_semantics=("parallel",),
            vmem_limit_bytes=VMEM_LIMIT),
    )(patches, pp['up_wmat'], pp['up_bvec'])

    # Pixel shuffle (phase interleave) + crop — a single XLA transpose on bf16 data.
    # TODO(synk): fold this interleave into the fused kernel to drop the HBM pass.
    up4 = up4.reshape(N, 2, 2, CH, H + 1, W + 1)                        # (N,u,v,ch,i,j)
    up = jnp.transpose(up4, (0, 3, 4, 1, 5, 2)).reshape(N, CH, OH + 2, OW + 2)
    return up[:, :, 1:OH + 1, 1:OW + 1].reshape(N, CH, OH * OW)


# ------ fused: attention gate + projection + bottleneck + residual + IN ------

def fused_attention_bottleneck(x2, up, pp, OH, OW):
    """x2: (N, C2, HW) bf16; up: (N, CH, HW) bf16.  Returns (N, CO, HW) f32."""
    N, C2, HW = x2.shape
    CH = up.shape[1]
    Ci = pp['att_wx'].shape[0]
    CO = pp['bn1_w'].shape[0]
    assert OH * OW == HW

    def kernel(x2_ref, up_ref, wx_ref, wg_ref, ba_ref, wp_ref, bp_ref,
               wpx_ref, wpu_ref, bpr_ref, w1_ref, b1_ref, w2_ref, b2_ref,
               w3_ref, b3_ref, out_ref):
        x2b = x2_ref[0]                                       # (C2, HW) bf16
        upb = up_ref[0]                                       # (CH, HW) bf16

        # --- additive attention gate: psi = sigmoid(W_p relu(W_x x2 + W_g up)) ---
        a = (jnp.dot(wx_ref[...], x2b, preferred_element_type=jnp.float32)
             + jnp.dot(wg_ref[...], upb, preferred_element_type=jnp.float32)
             + ba_ref[...])
        a = jnp.maximum(a, 0.0)                               # (Ci, HW) f32
        psi = jax.nn.sigmoid(
            jnp.sum(a * wp_ref[...], axis=0, keepdims=True) + bp_ref[...])   # (1, HW)
        gated = (x2b.astype(jnp.float32) * psi).astype(MXU_DTYPE)

        # --- 1x1 projection of concat([x2*psi, up]) as two dots (no concat) ---
        xproj = (jnp.dot(wpx_ref[...], gated, preferred_element_type=jnp.float32)
                 + jnp.dot(wpu_ref[...], upb, preferred_element_type=jnp.float32)
                 + bpr_ref[...])                              # (CO, HW) f32

        # --- bottleneck: 1x1 -> InstanceNorm -> ReLU ---
        h = jnp.dot(w1_ref[...], xproj.astype(MXU_DTYPE),
                    preferred_element_type=jnp.float32) + b1_ref[...]
        hb = _in_relu(h).astype(MXU_DTYPE)                    # (CO, HW) bf16

        # --- 3x3 conv (pad=1) as ONE stacked matmul over 9 lane-shifted taps ---
        # Zero lane-padding supplies the top/bottom (y) halo; only the left/right
        # (x) row-wrap needs masking.  No per-tap strided slice + reshape relayout.
        zpad = jnp.zeros((CO, OW + 1), hb.dtype)
        hext = jnp.concatenate([zpad, hb, zpad], axis=1)      # (CO, HW + 2*OW + 2)
        xpos = jax.lax.broadcasted_iota(jnp.int32, (1, HW), 1) % OW
        taps = []
        for dy in range(3):
            for dx in range(3):
                start = (OW + 1) + (dy - 1) * OW + (dx - 1)
                tap = hext[:, start:start + HW]
                if dx == 0:
                    tap = jnp.where(xpos >= 1, tap, jnp.zeros_like(tap))
                elif dx == 2:
                    tap = jnp.where(xpos <= OW - 2, tap, jnp.zeros_like(tap))
                taps.append(tap)
        stacked = jnp.concatenate(taps, axis=0)               # (9*CO, HW) bf16
        h2 = jnp.dot(w2_ref[...], stacked,
                     preferred_element_type=jnp.float32) + b2_ref[...]
        h2 = _in_relu(h2).astype(MXU_DTYPE)                   # IN -> ReLU

        # --- bottleneck final 1x1 + residual + out_block (IN -> ReLU) ---
        y = jnp.dot(w3_ref[...], h2, preferred_element_type=jnp.float32) + b3_ref[...]
        out_ref[0] = _in_relu(y + xproj)                      # (CO, HW) f32, lane-dense

    return pl.pallas_call(
        kernel,
        out_shape=jax.ShapeDtypeStruct((N, CO, HW), jnp.float32),
        grid=(N,),
        in_specs=[
            pl.BlockSpec((1, C2, HW), lambda n: (n, 0, 0)),
            pl.BlockSpec((1, CH, HW), lambda n: (n, 0, 0)),
            _w_spec((Ci, C2)), _w_spec((Ci, CH)), _w_spec((Ci, 1)),
            _w_spec((Ci, 1)), _w_spec((1, 1)),
            _w_spec((CO, C2)), _w_spec((CO, CH)), _w_spec((CO, 1)),
            _w_spec((CO, CO)), _w_spec((CO, 1)),
            _w_spec((CO, 9 * CO)), _w_spec((CO, 1)),
            _w_spec((CO, CO)), _w_spec((CO, 1)),
        ],
        out_specs=pl.BlockSpec((1, CO, HW), lambda n: (n, 0, 0)),
        compiler_params=pltpu.CompilerParams(
            dimension_semantics=("parallel",),
            vmem_limit_bytes=VMEM_LIMIT),
    )(x2, up,
      pp['att_wx'], pp['att_wg'], pp['att_b'], pp['att_wp'], pp['att_bp'],
      pp['proj_wx'], pp['proj_wu'], pp['proj_b'],
      pp['bn1_w'], pp['bn1_b'], pp['bn2_w'], pp['bn2_b'],
      pp['bn3_w'], pp['bn3_b'])


# ------------------------------ parameters -----------------------------------

def init_params(key, c1, c2, co):
    """PyTorch-layout parameters for the module."""
    ch = c1 // 2
    ci = c2
    ks = jax.random.split(key, 16)

    def w(k, shape, scale=0.1):
        return (scale * jax.random.normal(k, shape)).astype(jnp.float32)

    return {
        # ConvTranspose2d(c1, c1//2, k=4, s=2, p=1): weight (c_in, c_out, 4, 4)
        'up_w': w(ks[0], (c1, ch, 4, 4)), 'up_b': w(ks[1], (ch,)),
        # AttentionBlock(F_l=c2, F_g=c1//2, F_int=c2): 1x1 convs (out, in, 1, 1)
        'att_wx': w(ks[2], (ci, c2, 1, 1)), 'att_bx': w(ks[3], (ci,)),
        'att_wg': w(ks[4], (ci, ch, 1, 1)), 'att_bg': w(ks[5], (ci,)),
        'att_wp': w(ks[6], (1, ci, 1, 1)), 'att_bp': w(ks[7], (1,)),
        # projection Conv2d(c1//2 + c2, co, 1)
        'proj_w': w(ks[8], (co, ch + c2, 1, 1)), 'proj_b': w(ks[9], (co,)),
        # bottleneck: 1x1 -> IN -> ReLU -> 3x3 -> IN -> ReLU -> 1x1
        'bn1_w': w(ks[10], (co, co, 1, 1)), 'bn1_b': w(ks[11], (co,)),
        'bn2_w': w(ks[12], (co, co, 3, 3)), 'bn2_b': w(ks[13], (co,)),
        'bn3_w': w(ks[14], (co, co, 1, 1)), 'bn3_b': w(ks[15], (co,)),
    }


def prepare_params(p):
    """One-time weight preprocessing into channels-first, MXU-ready form."""
    up_w = p['up_w']                         # (C1, CH, 4, 4)
    C1, CH = up_w.shape[0], up_w.shape[1]
    Ci = p['att_wx'].shape[0]
    C2 = p['att_wx'].shape[1]
    CO = p['proj_w'].shape[0]

    # Phase decomposition of ConvTranspose2d(k=4, s=2, p=1): pre-crop grid row
    # 2i+u = sum_{dy in 0..1} x1_padded[i+dy] * W[..., 2+u-2*dy, ...]  (same in x).
    phase_rows = []
    for u in (0, 1):
        for v in (0, 1):
            taps = []
            for dy in (0, 1):
                for dx in (0, 1):
                    taps.append(up_w[:, :, 2 + u - 2 * dy, 2 + v - 2 * dx].T)  # (CH, C1)
            phase_rows.append(jnp.concatenate(taps, axis=1))                   # (CH, 4*C1)
    up_wmat = jnp.concatenate(phase_rows, axis=0)                              # (4*CH, 4*C1)

    return {
        'up_wmat': up_wmat.astype(MXU_DTYPE),
        'up_bvec': jnp.tile(p['up_b'], 4).reshape(4 * CH, 1).astype(jnp.float32),
        'att_wx': p['att_wx'][:, :, 0, 0].astype(MXU_DTYPE),                  # (Ci, C2)
        'att_wg': p['att_wg'][:, :, 0, 0].astype(MXU_DTYPE),                  # (Ci, CH)
        'att_b': (p['att_bx'] + p['att_bg']).reshape(Ci, 1).astype(jnp.float32),
        'att_wp': p['att_wp'][0, :, 0, 0].reshape(Ci, 1).astype(jnp.float32),
        'att_bp': p['att_bp'].reshape(1, 1).astype(jnp.float32),
        # projection split into the x2-part and the up-part (cat order: [x2, up]).
        'proj_wx': p['proj_w'][:, :C2, 0, 0].astype(MXU_DTYPE),               # (CO, C2)
        'proj_wu': p['proj_w'][:, C2:, 0, 0].astype(MXU_DTYPE),               # (CO, CH)
        'proj_b': p['proj_b'].reshape(CO, 1).astype(jnp.float32),
        'bn1_w': p['bn1_w'][:, :, 0, 0].astype(MXU_DTYPE),
        'bn1_b': p['bn1_b'].reshape(CO, 1).astype(jnp.float32),
        # 3x3 conv taps stacked along the contraction axis: (CO, 9*CO), t = dy*3+dx.
        'bn2_w': jnp.concatenate(
            [p['bn2_w'][:, :, dy, dx] for dy in range(3) for dx in range(3)],
            axis=1).astype(MXU_DTYPE),
        'bn2_b': p['bn2_b'].reshape(CO, 1).astype(jnp.float32),
        'bn3_w': p['bn3_w'][:, :, 0, 0].astype(MXU_DTYPE),
        'bn3_b': p['bn3_b'].reshape(CO, 1).astype(jnp.float32),
    }


# --------------------------------- forward -----------------------------------

def attention_autoencoder_upsampling_block(x1_nchw, x2_nchw, pp):
    """Forward pass; NCHW in, NCHW out (matches the PyTorch module)."""
    N, C1, H, W = x1_nchw.shape
    _, C2, H2, W2 = x2_nchw.shape
    OH, OW = 2 * H, 2 * W
    assert (H2, W2) == (OH, OW)
    CO = pp['bn1_w'].shape[0]

    up = upsample_conv_transpose(x1_nchw, pp)                    # (N, CH, OH*OW) bf16
    x2 = x2_nchw.reshape(N, C2, OH * OW).astype(MXU_DTYPE)       # no transpose needed
    out = fused_attention_bottleneck(x2, up, pp, OH, OW)         # (N, CO, OH*OW) f32
    return out.reshape(N, CO, OH, OW)                            # no transpose needed


# ----------------------- pure-JAX (XLA, f32) reference -----------------------

def _conv2d_ref(x, w, b, padding=0):
    out = jax.lax.conv_general_dilated(
        x, w, window_strides=(1, 1), padding=[(padding, padding)] * 2,
        dimension_numbers=('NCHW', 'OIHW', 'NCHW'))
    return out + b.reshape(1, -1, 1, 1)


def conv_transpose2d_ref(x, w_pt, b, stride=2, padding=1):
    """PyTorch ConvTranspose2d via lhs-dilated conv with the flipped, io-swapped kernel."""
    k = w_pt.shape[2]
    w_conv = jnp.transpose(w_pt, (1, 0, 2, 3))[:, :, ::-1, ::-1]
    out = jax.lax.conv_general_dilated(
        x, w_conv, window_strides=(1, 1),
        padding=[(k - 1 - padding, k - 1 - padding)] * 2,
        lhs_dilation=(stride, stride),
        dimension_numbers=('NCHW', 'OIHW', 'NCHW'))
    return out + b.reshape(1, -1, 1, 1)


def _instance_norm_ref(x):
    mean = x.mean(axis=(2, 3), keepdims=True)
    var = jnp.square(x - mean).mean(axis=(2, 3), keepdims=True)
    return (x - mean) / jnp.sqrt(var + EPS)


def reference_forward(x1, x2, p):
    up = conv_transpose2d_ref(x1, p['up_w'], p['up_b'])
    a = jax.nn.relu(_conv2d_ref(x2, p['att_wx'], p['att_bx'])
                    + _conv2d_ref(up, p['att_wg'], p['att_bg']))
    psi = jax.nn.sigmoid(_conv2d_ref(a, p['att_wp'], p['att_bp']))
    x_ = _conv2d_ref(jnp.concatenate([x2 * psi, up], axis=1), p['proj_w'], p['proj_b'])
    h = jax.nn.relu(_instance_norm_ref(_conv2d_ref(x_, p['bn1_w'], p['bn1_b'])))
    h = jax.nn.relu(_instance_norm_ref(_conv2d_ref(h, p['bn2_w'], p['bn2_b'], padding=1)))
    y = _conv2d_ref(h, p['bn3_w'], p['bn3_b'])
    return jax.nn.relu(_instance_norm_ref(x_ + y))


# ----------------------------------- main -------------------------------------

if __name__ == "__main__":
    key = jax.random.PRNGKey(0)
    k1, k2, kp = jax.random.split(key, 3)
    N, C1, C2, CO = 2, 8, 4, 8
    H, W = 16, 16
    x1 = jax.random.normal(k1, (N, C1, H, W), jnp.float32)             # low-res features
    x2 = jax.random.normal(k2, (N, C2, 2 * H, 2 * W), jnp.float32)     # skip features

    params = init_params(kp, C1, C2, CO)
    prepped = prepare_params(params)                                   # hoisted weight prep

    fwd = jax.jit(attention_autoencoder_upsampling_block)
    out = jax.block_until_ready(fwd(x1, x2, prepped))
    assert out.shape == (N, CO, 2 * H, 2 * W), out.shape
    assert bool(jnp.all(jnp.isfinite(out)))

    # (a) tight check of the phase-decomposed ConvTranspose2d (only bf16 cast noise)
    up_pallas = jax.jit(upsample_conv_transpose)(x1, prepped)
    up_pallas = up_pallas.astype(jnp.float32).reshape(N, C1 // 2, 2 * H, 2 * W)
    up_ref = conv_transpose2d_ref(x1, params['up_w'], params['up_b'])
    up_err = float(jnp.max(jnp.abs(up_pallas - up_ref)))
    assert up_err < 5e-2, f"upsample mismatch: max err {up_err}"

    # (b) end-to-end check vs f32 XLA reference (loose: bf16 MXU operands in kernel)
    ref = reference_forward(x1, x2, params)
    err = float(jnp.max(jnp.abs(out - ref)))
    assert err < 3e-1, f"forward mismatch: max err {err}"

    print("KERNEL_OK")
</pallas_src>

<mosaic_0001>
module attributes {stable_mosaic.version = 11 : i64} {
  func.func @_upsample_kernel(%arg0: i32, %arg1: memref<1x32x289xbf16, #tpu.memory_space<vmem>>, %arg2: memref<16x32xbf16, #tpu.memory_space<vmem>>, %arg3: memref<16x1xf32, #tpu.memory_space<vmem>>, %arg4: memref<1x16x289xbf16, #tpu.memory_space<vmem>>) attributes {dimension_semantics = [#tpu.dimension_semantics<parallel>], iteration_bounds = array<i64: 2>, scalar_prefetch = 0 : i64, scratch_operands = 0 : i64, tpu.core_type = #tpu.core_type<tc>, window_params = [{transform_indices = @transform_0, window_bounds = array<i64: 1, 32, 289>}, {pipeline_mode = #tpu.pipeline_mode<synchronous>, transform_indices = @transform_1, window_bounds = array<i64: 16, 32>}, {pipeline_mode = #tpu.pipeline_mode<synchronous>, transform_indices = @transform_2, window_bounds = array<i64: 16, 1>}, {transform_indices = @transform_3, window_bounds = array<i64: 1, 16, 289>}]} {
    %c0 = arith.constant 0 : index
    %c0_0 = arith.constant 0 : index
    %0 = vector.load %arg2[%c0, %c0_0] : memref<16x32xbf16, #tpu.memory_space<vmem>>, vector<16x32xbf16>
    %c0_1 = arith.constant 0 : index
    %c0_2 = arith.constant 0 : index
    %c0_3 = arith.constant 0 : index
    %1 = vector.load %arg1[%c0_1, %c0_2, %c0_3] : memref<1x32x289xbf16, #tpu.memory_space<vmem>>, vector<1x32x289xbf16>
    %2 = vector.shape_cast %1 : vector<1x32x289xbf16> to vector<32x289xbf16>
    %cst = arith.constant dense<0.000000e+00> : vector<16x289xf32>
    %3 = tpu.matmul %0, %2, %cst {dimension_numbers = #tpu.dot_dimension_numbers<[1], [0], [0], [1], [0, 0, 1, 1], [], []>} : vector<16x32xbf16>, vector<32x289xbf16>, vector<16x289xf32> -> vector<16x289xf32>
    %c0_4 = arith.constant 0 : index
    %c0_5 = arith.constant 0 : index
    %4 = vector.load %arg3[%c0_4, %c0_5] : memref<16x1xf32, #tpu.memory_space<vmem>>, vector<16x1xf32>
    %5 = vector.broadcast %4 : vector<16x1xf32> to vector<16x289xf32>
    %6 = arith.addf %3, %5 : vector<16x289xf32>
    %7 = arith.truncf %6 : vector<16x289xf32> to vector<16x289xbf16>
    %c0_6 = arith.constant 0 : index
    %c0_7 = arith.constant 0 : index
    %c0_8 = arith.constant 0 : index
    %8 = vector.load %arg4[%c0_6, %c0_7, %c0_8] : memref<1x16x289xbf16, #tpu.memory_space<vmem>>, vector<1x16x289xbf16>
    %9 = vector.shape_cast %8 : vector<1x16x289xbf16> to vector<16x289xbf16>
    %10 = vector.shape_cast %7 : vector<16x289xbf16> to vector<1x16x289xbf16>
    tpu.vector_store %arg4[%c0_6, %c0_7, %c0_8], %10 {strides = array<i32>} : memref<1x16x289xbf16, #tpu.memory_space<vmem>>, vector<1x16x289xbf16>,
    return
  }
  func.func @transform_0(%arg0: i32) -> (i32, i32, i32) {
    %c0_i32 = arith.constant 0 : i32
    %c0_i32_0 = arith.constant 0 : i32
    %c0_i32_1 = arith.constant 0 : i32
    return %arg0, %c0_i32, %c0_i32_0 : i32, i32, i32
  }
  func.func @transform_1(%arg0: i32) -> (i32, i32) {
    %c0_i32 = arith.constant 0 : i32
    %c0_i32_0 = arith.constant 0 : i32
    %c0_i32_1 = arith.constant 0 : i32
    return %c0_i32, %c0_i32_0 : i32, i32
  }
  func.func @transform_2(%arg0: i32) -> (i32, i32) {
    %c0_i32 = arith.constant 0 : i32
    %c0_i32_0 = arith.constant 0 : i32
    %c0_i32_1 = arith.constant 0 : i32
    return %c0_i32, %c0_i32_0 : i32, i32
  }
  func.func @transform_3(%arg0: i32) -> (i32, i32, i32) {
    %c0_i32 = arith.constant 0 : i32
    %c0_i32_0 = arith.constant 0 : i32
    %c0_i32_1 = arith.constant 0 : i32
    return %arg0, %c0_i32, %c0_i32_0 : i32, i32, i32
  }
}

module attributes {stable_mosaic.version = 11 : i64} {
  func.func @kernel(%arg0: i32, %arg1: memref<1x4x1024xbf16, #tpu.memory_space<vmem>>, %arg2: memref<1x4x1024xbf16, #tpu.memory_space<vmem>>, %arg3: memref<4x4xbf16, #tpu.memory_space<vmem>>, %arg4: memref<4x4xbf16, #tpu.memory_space<vmem>>, %arg5: memref<4x1xf32, #tpu.memory_space<vmem>>, %arg6: memref<4x1xf32, #tpu.memory_space<vmem>>, %arg7: memref<1x1xf32, #tpu.memory_space<vmem>>, %arg8: memref<8x4xbf16, #tpu.memory_space<vmem>>, %arg9: memref<8x4xbf16, #tpu.memory_space<vmem>>, %arg10: memref<8x1xf32, #tpu.memory_space<vmem>>, %arg11: memref<8x8xbf16, #tpu.memory_space<vmem>>, %arg12: memref<8x1xf32, #tpu.memory_space<vmem>>, %arg13: memref<8x72xbf16, #tpu.memory_space<vmem>>, %arg14: memref<8x1xf32, #tpu.memory_space<vmem>>, %arg15: memref<8x8xbf16, #tpu.memory_space<vmem>>, %arg16: memref<8x1xf32, #tpu.memory_space<vmem>>, %arg17: memref<1x8x1024xf32, #tpu.memory_space<vmem>>) attributes {dimension_semantics = [#tpu.dimension_semantics<parallel>], iteration_bounds = array<i64: 2>, scalar_prefetch = 0 : i64, scratch_operands = 0 : i64, tpu.core_type = #tpu.core_type<tc>, window_params = [{transform_indices = @transform_0, window_bounds = array<i64: 1, 4, 1024>}, {transform_indices = @transform_1, window_bounds = array<i64: 1, 4, 1024>}, {pipeline_mode = #tpu.pipeline_mode<synchronous>, transform_indices = @transform_2, window_bounds = array<i64: 4, 4>}, {pipeline_mode = #tpu.pipeline_mode<synchronous>, transform_indices = @transform_3, window_bounds = array<i64: 4, 4>}, {pipeline_mode = #tpu.pipeline_mode<synchronous>, transform_indices = @transform_4, window_bounds = array<i64: 4, 1>}, {pipeline_mode = #tpu.pipeline_mode<synchronous>, transform_indices = @transform_5, window_bounds = array<i64: 4, 1>}, {pipeline_mode = #tpu.pipeline_mode<synchronous>, transform_indices = @transform_6, window_bounds = array<i64: 1, 1>}, {pipeline_mode = #tpu.pipeline_mode<synchronous>, transform_indices = @transform_7, window_bounds = array<i64: 8, 4>}, {pipeline_mode = #tpu.pipeline_mode<synchronous>, transform_indices = @transform_8, window_bounds = array<i64: 8, 4>}, {pipeline_mode = #tpu.pipeline_mode<synchronous>, transform_indices = @transform_9, window_bounds = array<i64: 8, 1>}, {pipeline_mode = #tpu.pipeline_mode<synchronous>, transform_indices = @transform_10, window_bounds = array<i64: 8, 8>}, {pipeline_mode = #tpu.pipeline_mode<synchronous>, transform_indices = @transform_11, window_bounds = array<i64: 8, 1>}, {pipeline_mode = #tpu.pipeline_mode<synchronous>, transform_indices = @transform_12, window_bounds = array<i64: 8, 72>}, {pipeline_mode = #tpu.pipeline_mode<synchronous>, transform_indices = @transform_13, window_bounds = array<i64: 8, 1>}, {pipeline_mode = #tpu.pipeline_mode<synchronous>, transform_indices = @transform_14, window_bounds = array<i64: 8, 8>}, {pipeline_mode = #tpu.pipeline_mode<synchronous>, transform_indices = @transform_15, window_bounds = array<i64: 8, 1>}, {transform_indices = @transform_16, window_bounds = array<i64: 1, 8, 1024>}]} {
    %c0 = arith.constant 0 : index
    %c0_0 = arith.constant 0 : index
    %c0_1 = arith.constant 0 : index
    %0 = vector.load %arg1[%c0, %c0_0, %c0_1] : memref<1x4x1024xbf16, #tpu.memory_space<vmem>>, vector<1x4x1024xbf16>
    %1 = vector.shape_cast %0 : vector<1x4x1024xbf16> to vector<4x1024xbf16>
    %c0_2 = arith.constant 0 : index
    %c0_3 = arith.constant 0 : index
    %c0_4 = arith.constant 0 : index
    %2 = vector.load %arg2[%c0_2, %c0_3, %c0_4] : memref<1x4x1024xbf16, #tpu.memory_space<vmem>>, vector<1x4x1024xbf16>
    %3 = vector.shape_cast %2 : vector<1x4x1024xbf16> to vector<4x1024xbf16>
    %c0_5 = arith.constant 0 : index
    %c0_6 = arith.constant 0 : index
    %4 = vector.load %arg3[%c0_5, %c0_6] : memref<4x4xbf16, #tpu.memory_space<vmem>>, vector<4x4xbf16>
    %cst = arith.constant dense<0.000000e+00> : vector<4x1024xf32>
    %5 = tpu.matmul %4, %1, %cst {dimension_numbers = #tpu.dot_dimension_numbers<[1], [0], [0], [1], [0, 0, 1, 1], [], []>} : vector<4x4xbf16>, vector<4x1024xbf16>, vector<4x1024xf32> -> vector<4x1024xf32>
    %c0_7 = arith.constant 0 : index
    %c0_8 = arith.constant 0 : index
    %6 = vector.load %arg4[%c0_7, %c0_8] : memref<4x4xbf16, #tpu.memory_space<vmem>>, vector<4x4xbf16>
    %cst_9 = arith.constant dense<0.000000e+00> : vector<4x1024xf32>
    %7 = tpu.matmul %6, %3, %cst_9 {dimension_numbers = #tpu.dot_dimension_numbers<[1], [0], [0], [1], [0, 0, 1, 1], [], []>} : vector<4x4xbf16>, vector<4x1024xbf16>, vector<4x1024xf32> -> vector<4x1024xf32>
    %8 = arith.addf %5, %7 : vector<4x1024xf32>
    %c0_10 = arith.constant 0 : index
    %c0_11 = arith.constant 0 : index
    %9 = vector.load %arg5[%c0_10, %c0_11] : memref<4x1xf32, #tpu.memory_space<vmem>>, vector<4x1xf32>
    %10 = vector.broadcast %9 : vector<4x1xf32> to vector<4x1024xf32>
    %11 = arith.addf %8, %10 : vector<4x1024xf32>
    %cst_12 = arith.constant 0.000000e+00 : f32
    %12 = vector.broadcast %cst_12 : f32 to vector<4x1024xf32>
    %13 = arith.maximumf %11, %12 : vector<4x1024xf32>
    %c0_13 = arith.constant 0 : index
    %c0_14 = arith.constant 0 : index
    %14 = vector.load %arg6[%c0_13, %c0_14] : memref<4x1xf32, #tpu.memory_space<vmem>>, vector<4x1xf32>
    %15 = vector.broadcast %14 : vector<4x1xf32> to vector<4x1024xf32>
    %16 = arith.mulf %13, %15 : vector<4x1024xf32>
    %cst_15 = arith.constant dense<0.000000e+00> : vector<1024xf32>
    %17 = vector.multi_reduction <add>, %16, %cst_15 [0] : vector<4x1024xf32> to vector<1024xf32>
    %18 = vector.shape_cast %17 : vector<1024xf32> to vector<1x1024xf32>
    %c0_16 = arith.constant 0 : index
    %c0_17 = arith.constant 0 : index
    %19 = vector.load %arg7[%c0_16, %c0_17] : memref<1x1xf32, #tpu.memory_space<vmem>>, vector<1x1xf32>
    %20 = vector.broadcast %19 : vector<1x1xf32> to vector<1x1024xf32>
    %21 = arith.addf %18, %20 : vector<1x1024xf32>
    %22 = arith.negf %21 : vector<1x1024xf32>
    %23 = math.exp %22 : vector<1x1024xf32>
    %cst_18 = arith.constant 1.000000e+00 : f32
    %24 = vector.broadcast %cst_18 : f32 to vector<1x1024xf32>
    %25 = arith.addf %24, %23 : vector<1x1024xf32>
    %26 = arith.divf %24, %25 : vector<1x1024xf32>
    %27 = arith.extf %1 : vector<4x1024xbf16> to vector<4x1024xf32>
    %28 = vector.broadcast %26 : vector<1x1024xf32> to vector<4x1024xf32>
    %29 = arith.mulf %27, %28 : vector<4x1024xf32>
    %30 = arith.truncf %29 : vector<4x1024xf32> to vector<4x1024xbf16>
    %c0_19 = arith.constant 0 : index
    %c0_20 = arith.constant 0 : index
    %31 = vector.load %arg8[%c0_19, %c0_20] : memref<8x4xbf16, #tpu.memory_space<vmem>>, vector<8x4xbf16>
    %cst_21 = arith.constant dense<0.000000e+00> : vector<8x1024xf32>
    %32 = tpu.matmul %31, %30, %cst_21 {dimension_numbers = #tpu.dot_dimension_numbers<[1], [0], [0], [1], [0, 0, 1, 1], [], []>} : vector<8x4xbf16>, vector<4x1024xbf16>, vector<8x1024xf32> -> vector<8x1024xf32>
    %c0_22 = arith.constant 0 : index
    %c0_23 = arith.constant 0 : index
    %33 = vector.load %arg9[%c0_22, %c0_23] : memref<8x4xbf16, #tpu.memory_space<vmem>>, vector<8x4xbf16>
    %cst_24 = arith.constant dense<0.000000e+00> : vector<8x1024xf32>
    %34 = tpu.matmul %33, %3, %cst_24 {dimension_numbers = #tpu.dot_dimension_numbers<[1], [0], [0], [1], [0, 0, 1, 1], [], []>} : vector<8x4xbf16>, vector<4x1024xbf16>, vector<8x1024xf32> -> vector<8x1024xf32>
    %35 = arith.addf %32, %34 : vector<8x1024xf32>
    %c0_25 = arith.constant 0 : index
    %c0_26 = arith.constant 0 : index
    %36 = vector.load %arg10[%c0_25, %c0_26] : memref<8x1xf32, #tpu.memory_space<vmem>>, vector<8x1xf32>
    %37 = vector.broadcast %36 : vector<8x1xf32> to vector<8x1024xf32>
    %38 = arith.addf %35, %37 : vector<8x1024xf32>
    %c0_27 = arith.constant 0 : index
    %c0_28 = arith.constant 0 : index
    %39 = vector.load %arg11[%c0_27, %c0_28] : memref<8x8xbf16, #tpu.memory_space<vmem>>, vector<8x8xbf16>
    %40 = arith.truncf %38 : vector<8x1024xf32> to vector<8x1024xbf16>
    %cst_29 = arith.constant dense<0.000000e+00> : vector<8x1024xf32>
    %41 = tpu.matmul %39, %40, %cst_29 {dimension_numbers = #tpu.dot_dimension_numbers<[1], [0], [0], [1], [0, 0, 1, 1], [], []>} : vector<8x8xbf16>, vector<8x1024xbf16>, vector<8x1024xf32> -> vector<8x1024xf32>
    %c0_30 = arith.constant 0 : index
    %c0_31 = arith.constant 0 : index
    %42 = vector.load %arg12[%c0_30, %c0_31] : memref<8x1xf32, #tpu.memory_space<vmem>>, vector<8x1xf32>
    %43 = vector.broadcast %42 : vector<8x1xf32> to vector<8x1024xf32>
    %44 = arith.addf %41, %43 : vector<8x1024xf32>
    %cst_32 = arith.constant dense<0.000000e+00> : vector<8xf32>
    %45 = vector.multi_reduction <add>, %44, %cst_32 [1] : vector<8x1024xf32> to vector<8xf32>
    %46 = vector.shape_cast %45 : vector<8xf32> to vector<8x1xf32>
    %cst_33 = arith.constant 1.024000e+03 : f32
    %47 = vector.broadcast %cst_33 : f32 to vector<8x1xf32>
    %48 = arith.divf %46, %47 : vector<8x1xf32>
    %49 = vector.broadcast %48 : vector<8x1xf32> to vector<8x1024xf32>
    %50 = arith.subf %44, %49 : vector<8x1024xf32>
    %51 = arith.mulf %50, %50 : vector<8x1024xf32>
    %cst_34 = arith.constant dense<0.000000e+00> : vector<8xf32>
    %52 = vector.multi_reduction <add>, %51, %cst_34 [1] : vector<8x1024xf32> to vector<8xf32>
    %53 = vector.shape_cast %52 : vector<8xf32> to vector<8x1xf32>
    %cst_35 = arith.constant 1.024000e+03 : f32
    %54 = vector.broadcast %cst_35 : f32 to vector<8x1xf32>
    %55 = arith.divf %53, %54 : vector<8x1xf32>
    %56 = vector.broadcast %48 : vector<8x1xf32> to vector<8x1024xf32>
    %57 = arith.subf %44, %56 : vector<8x1024xf32>
    %cst_36 = arith.constant 9.99999974E-6 : f32
    %58 = vector.broadcast %cst_36 : f32 to vector<8x1xf32>
    %59 = arith.addf %55, %58 : vector<8x1xf32>
    %60 = math.rsqrt %59 : vector<8x1xf32>
    %61 = vector.broadcast %60 : vector<8x1xf32> to vector<8x1024xf32>
    %62 = arith.mulf %57, %61 : vector<8x1024xf32>
    %cst_37 = arith.constant 0.000000e+00 : f32
    %63 = vector.broadcast %cst_37 : f32 to vector<8x1024xf32>
    %64 = arith.maximumf %62, %63 : vector<8x1024xf32>
    %65 = arith.truncf %64 : vector<8x1024xf32> to vector<8x1024xbf16>
    %cst_38 = arith.constant 0.000000e+00 : bf16
    %66 = vector.broadcast %cst_38 : bf16 to vector<8x33xbf16>
    %67 = tpu.concatenate %66, %65, %66 in 1 : vector<8x33xbf16>, vector<8x1024xbf16>, vector<8x33xbf16> -> vector<8x1090xbf16>
    %68 = tpu.iota {dimensions = array<i32: 1>} : vector<1x1024xi32>
    %c32_i32 = arith.constant 32 : i32
    %c0_i32 = arith.constant 0 : i32
    %69 = arith.cmpi eq, %c32_i32, %c0_i32 : i32
    %c1_i32 = arith.constant 1 : i32
    %70 = arith.select %69, %c1_i32, %c32_i32 : i32
    %71 = vector.broadcast %70 : i32 to vector<1x1024xi32>
    %72 = arith.remsi %68, %71 : vector<1x1024xi32>
    %c0_i32_39 = arith.constant 0 : i32
    %73 = vector.broadcast %c0_i32_39 : i32 to vector<1x1024xi32>
    %74 = arith.cmpi ne, %72, %73 : vector<1x1024xi32>
    %c0_i32_40 = arith.constant 0 : i32
    %75 = vector.broadcast %c0_i32_40 : i32 to vector<1x1024xi32>
    %76 = arith.cmpi slt, %72, %75 : vector<1x1024xi32>
    %c0_i32_41 = arith.constant 0 : i32
    %77 = arith.cmpi slt, %70, %c0_i32_41 : i32
    %78 = vector.broadcast %77 : i1 to vector<1x1024xi1>
    %79 = vector.broadcast %78 : vector<1x1024xi1> to vector<1x1024xi1>
    %80 = arith.xori %76, %79 : vector<1x1024xi1>
    %81 = arith.andi %80, %74 : vector<1x1024xi1>
    %82 = vector.broadcast %70 : i32 to vector<1x1024xi32>
    %83 = arith.addi %72, %82 : vector<1x1024xi32>
    %84 = arith.select %81, %83, %72 : vector<1x1024xi1>, vector<1x1024xi32>
    %85 = vector.extract_strided_slice %67 {offsets = [0, 0], sizes = [8, 1024], strides = [1, 1]} : vector<8x1090xbf16> to vector<8x1024xbf16>
    %c1_i32_42 = arith.constant 1 : i32
    %86 = vector.broadcast %c1_i32_42 : i32 to vector<1x1024xi32>
    %87 = arith.cmpi sge, %84, %86 : vector<1x1024xi32>
    %cst_43 = arith.constant 0.000000e+00 : bf16
    %88 = vector.broadcast %cst_43 : bf16 to vector<8x1024xbf16>
    %89 = vector.shape_cast %87 : vector<1x1024xi1> to vector<1x1024xi1>
    %90 = vector.broadcast %89 : vector<1x1024xi1> to vector<8x1024xi1>
    %91 = arith.select %90, %85, %88 : vector<8x1024xi1>, vector<8x1024xbf16>
    %92 = vector.extract_strided_slice %67 {offsets = [0, 1], sizes = [8, 1024], strides = [1, 1]} : vector<8x1090xbf16> to vector<8x1024xbf16>
    %93 = vector.extract_strided_slice %67 {offsets = [0, 2], sizes = [8, 1024], strides = [1, 1]} : vector<8x1090xbf16> to vector<8x1024xbf16>
    %c30_i32 = arith.constant 30 : i32
    %94 = vector.broadcast %c30_i32 : i32 to vector<1x1024xi32>
    %95 = arith.cmpi sle, %84, %94 : vector<1x1024xi32>
    %cst_44 = arith.constant 0.000000e+00 : bf16
    %96 = vector.broadcast %cst_44 : bf16 to vector<8x1024xbf16>
    %97 = vector.shape_cast %95 : vector<1x1024xi1> to vector<1x1024xi1>
    %98 = vector.broadcast %97 : vector<1x1024xi1> to vector<8x1024xi1>
    %99 = arith.select %98, %93, %96 : vector<8x1024xi1>, vector<8x1024xbf16>
    %100 = vector.extract_strided_slice %67 {offsets = [0, 32], sizes = [8, 1024], strides = [1, 1]} : vector<8x1090xbf16> to vector<8x1024xbf16>
    %c1_i32_45 = arith.constant 1 : i32
    %101 = vector.broadcast %c1_i32_45 : i32 to vector<1x1024xi32>
    %102 = arith.cmpi sge, %84, %101 : vector<1x1024xi32>
    %cst_46 = arith.constant 0.000000e+00 : bf16
    %103 = vector.broadcast %cst_46 : bf16 to vector<8x1024xbf16>
    %104 = vector.shape_cast %102 : vector<1x1024xi1> to vector<1x1024xi1>
    %105 = vector.broadcast %104 : vector<1x1024xi1> to vector<8x1024xi1>
    %106 = arith.select %105, %100, %103 : vector<8x1024xi1>, vector<8x1024xbf16>
    %107 = vector.extract_strided_slice %67 {offsets = [0, 33], sizes = [8, 1024], strides = [1, 1]} : vector<8x1090xbf16> to vector<8x1024xbf16>
    %108 = vector.extract_strided_slice %67 {offsets = [0, 34], sizes = [8, 1024], strides = [1, 1]} : vector<8x1090xbf16> to vector<8x1024xbf16>
    %c30_i32_47 = arith.constant 30 : i32
    %109 = vector.broadcast %c30_i32_47 : i32 to vector<1x1024xi32>
    %110 = arith.cmpi sle, %84, %109 : vector<1x1024xi32>
    %cst_48 = arith.constant 0.000000e+00 : bf16
    %111 = vector.broadcast %cst_48 : bf16 to vector<8x1024xbf16>
    %112 = vector.shape_cast %110 : vector<1x1024xi1> to vector<1x1024xi1>
    %113 = vector.broadcast %112 : vector<1x1024xi1> to vector<8x1024xi1>
    %114 = arith.select %113, %108, %111 : vector<8x1024xi1>, vector<8x1024xbf16>
    %115 = vector.extract_strided_slice %67 {offsets = [0, 64], sizes = [8, 1024], strides = [1, 1]} : vector<8x1090xbf16> to vector<8x1024xbf16>
    %c1_i32_49 = arith.constant 1 : i32
    %116 = vector.broadcast %c1_i32_49 : i32 to vector<1x1024xi32>
    %117 = arith.cmpi sge, %84, %116 : vector<1x1024xi32>
    %cst_50 = arith.constant 0.000000e+00 : bf16
    %118 = vector.broadcast %cst_50 : bf16 to vector<8x1024xbf16>
    %119 = vector.shape_cast %117 : vector<1x1024xi1> to vector<1x1024xi1>
    %120 = vector.broadcast %119 : vector<1x1024xi1> to vector<8x1024xi1>
    %121 = arith.select %120, %115, %118 : vector<8x1024xi1>, vector<8x1024xbf16>
    %122 = vector.extract_strided_slice %67 {offsets = [0, 65], sizes = [8, 1024], strides = [1, 1]} : vector<8x1090xbf16> to vector<8x1024xbf16>
    %123 = vector.extract_strided_slice %67 {offsets = [0, 66], sizes = [8, 1024], strides = [1, 1]} : vector<8x1090xbf16> to vector<8x1024xbf16>
    %c30_i32_51 = arith.constant 30 : i32
    %124 = vector.broadcast %c30_i32_51 : i32 to vector<1x1024xi32>
    %125 = arith.cmpi sle, %84, %124 : vector<1x1024xi32>
    %cst_52 = arith.constant 0.000000e+00 : bf16
    %126 = vector.broadcast %cst_52 : bf16 to vector<8x1024xbf16>
    %127 = vector.shape_cast %125 : vector<1x1024xi1> to vector<1x1024xi1>
    %128 = vector.broadcast %127 : vector<1x1024xi1> to vector<8x1024xi1>
    %129 = arith.select %128, %123, %126 : vector<8x1024xi1>, vector<8x1024xbf16>
    %130 = tpu.concatenate %91, %92, %99, %106, %107, %114, %121, %122, %129 in 0 : vector<8x1024xbf16>, vector<8x1024xbf16>, vector<8x1024xbf16>, vector<8x1024xbf16>, vector<8x1024xbf16>, vector<8x1024xbf16>, vector<8x1024xbf16>, vector<8x1024xbf16>, vector<8x1024xbf16> -> vector<72x1024xbf16>
    %c0_53 = arith.constant 0 : index
    %c0_54 = arith.constant 0 : index
    %131 = vector.load %arg13[%c0_53, %c0_54] : memref<8x72xbf16, #tpu.memory_space<vmem>>, vector<8x72xbf16>
    %cst_55 = arith.constant dense<0.000000e+00> : vector<8x1024xf32>
    %132 = tpu.matmul %131, %130, %cst_55 {dimension_numbers = #tpu.dot_dimension_numbers<[1], [0], [0], [1], [0, 0, 1, 1], [], []>} : vector<8x72xbf16>, vector<72x1024xbf16>, vector<8x1024xf32> -> vector<8x1024xf32>
    %c0_56 = arith.constant 0 : index
    %c0_57 = arith.constant 0 : index
    %133 = vector.load %arg14[%c0_56, %c0_57] : memref<8x1xf32, #tpu.memory_space<vmem>>, vector<8x1xf32>
    %134 = vector.broadcast %133 : vector<8x1xf32> to vector<8x1024xf32>
    %135 = arith.addf %132, %134 : vector<8x1024xf32>
    %cst_58 = arith.constant dense<0.000000e+00> : vector<8xf32>
    %136 = vector.multi_reduction <add>, %135, %cst_58 [1] : vector<8x1024xf32> to vector<8xf32>
    %137 = vector.shape_cast %136 : vector<8xf32> to vector<8x1xf32>
    %cst_59 = arith.constant 1.024000e+03 : f32
    %138 = vector.broadcast %cst_59 : f32 to vector<8x1xf32>
    %139 = arith.divf %137, %138 : vector<8x1xf32>
    %140 = vector.broadcast %139 : vector<8x1xf32> to vector<8x1024xf32>
    %141 = arith.subf %135, %140 : vector<8x1024xf32>
    %142 = arith.mulf %141, %141 : vector<8x1024xf32>
    %cst_60 = arith.constant dense<0.000000e+00> : vector<8xf32>
    %143 = vector.multi_reduction <add>, %142, %cst_60 [1] : vector<8x1024xf32> to vector<8xf32>
    %144 = vector.shape_cast %143 : vector<8xf32> to vector<8x1xf32>
    %cst_61 = arith.constant 1.024000e+03 : f32
    %145 = vector.broadcast %cst_61 : f32 to vector<8x1xf32>
    %146 = arith.divf %144, %145 : vector<8x1xf32>
    %147 = vector.broadcast %139 : vector<8x1xf32> to vector<8x1024xf32>
    %148 = arith.subf %135, %147 : vector<8x1024xf32>
    %cst_62 = arith.constant 9.99999974E-6 : f32
    %149 = vector.broadcast %cst_62 : f32 to vector<8x1xf32>
    %150 = arith.addf %146, %149 : vector<8x1xf32>
    %151 = math.rsqrt %150 : vector<8x1xf32>
    %152 = vector.broadcast %151 : vector<8x1xf32> to vector<8x1024xf32>
    %153 = arith.mulf %148, %152 : vector<8x1024xf32>
    %cst_63 = arith.constant 0.000000e+00 : f32
    %154 = vector.broadcast %cst_63 : f32 to vector<8x1024xf32>
    %155 = arith.maximumf %153, %154 : vector<8x1024xf32>
    %156 = arith.truncf %155 : vector<8x1024xf32> to vector<8x1024xbf16>
    %c0_64 = arith.constant 0 : index
    %c0_65 = arith.constant 0 : index
    %157 = vector.load %arg15[%c0_64, %c0_65] : memref<8x8xbf16, #tpu.memory_space<vmem>>, vector<8x8xbf16>
    %cst_66 = arith.constant dense<0.000000e+00> : vector<8x1024xf32>
    %158 = tpu.matmul %157, %156, %cst_66 {dimension_numbers = #tpu.dot_dimension_numbers<[1], [0], [0], [1], [0, 0, 1, 1], [], []>} : vector<8x8xbf16>, vector<8x1024xbf16>, vector<8x1024xf32> -> vector<8x1024xf32>
    %c0_67 = arith.constant 0 : index
    %c0_68 = arith.constant 0 : index
    %159 = vector.load %arg16[%c0_67, %c0_68] : memref<8x1xf32, #tpu.memory_space<vmem>>, vector<8x1xf32>
    %160 = vector.broadcast %159 : vector<8x1xf32> to vector<8x1024xf32>
    %161 = arith.addf %158, %160 : vector<8x1024xf32>
    %162 = arith.addf %161, %38 : vector<8x1024xf32>
    %cst_69 = arith.constant dense<0.000000e+00> : vector<8xf32>
    %163 = vector.multi_reduction <add>, %162, %cst_69 [1] : vector<8x1024xf32> to vector<8xf32>
    %164 = vector.shape_cast %163 : vector<8xf32> to vector<8x1xf32>
    %cst_70 = arith.constant 1.024000e+03 : f32
    %165 = vector.broadcast %cst_70 : f32 to vector<8x1xf32>
    %166 = arith.divf %164, %165 : vector<8x1xf32>
    %167 = vector.broadcast %166 : vector<8x1xf32> to vector<8x1024xf32>
    %168 = arith.subf %162, %167 : vector<8x1024xf32>
    %169 = arith.mulf %168, %168 : vector<8x1024xf32>
    %cst_71 = arith.constant dense<0.000000e+00> : vector<8xf32>
    %170 = vector.multi_reduction <add>, %169, %cst_71 [1] : vector<8x1024xf32> to vector<8xf32>
    %171 = vector.shape_cast %170 : vector<8xf32> to vector<8x1xf32>
    %cst_72 = arith.constant 1.024000e+03 : f32
    %172 = vector.broadcast %cst_72 : f32 to vector<8x1xf32>
    %173 = arith.divf %171, %172 : vector<8x1xf32>
    %174 = vector.broadcast %166 : vector<8x1xf32> to vector<8x1024xf32>
    %175 = arith.subf %162, %174 : vector<8x1024xf32>
    %cst_73 = arith.constant 9.99999974E-6 : f32
    %176 = vector.broadcast %cst_73 : f32 to vector<8x1xf32>
    %177 = arith.addf %173, %176 : vector<8x1xf32>
    %178 = math.rsqrt %177 : vector<8x1xf32>
    %179 = vector.broadcast %178 : vector<8x1xf32> to vector<8x1024xf32>
    %180 = arith.mulf %175, %179 : vector<8x1024xf32>
    %cst_74 = arith.constant 0.000000e+00 : f32
    %181 = vector.broadcast %cst_74 : f32 to vector<8x1024xf32>
    %182 = arith.maximumf %180, %181 : vector<8x1024xf32>
    %c0_75 = arith.constant 0 : index
    %c0_76 = arith.constant 0 : index
    %c0_77 = arith.constant 0 : index
    %183 = vector.load %arg17[%c0_75, %c0_76, %c0_77] : memref<1x8x1024xf32, #tpu.memory_space<vmem>>, vector<1x8x1024xf32>
    %184 = vector.shape_cast %183 : vector<1x8x1024xf32> to vector<8x1024xf32>
    %185 = vector.shape_cast %182 : vector<8x1024xf32> to vector<1x8x1024xf32>
    tpu.vector_store %arg17[%c0_75, %c0_76, %c0_77], %185 {strides = array<i32>} : memref<1x8x1024xf32, #tpu.memory_space<vmem>>, vector<1x8x1024xf32>,
    return
  }
  func.func @transform_0(%arg0: i32) -> (i32, i32, i32) {
    %c0_i32 = arith.constant 0 : i32
    %c0_i32_0 = arith.constant 0 : i32
    %c0_i32_1 = arith.constant 0 : i32
    return %arg0, %c0_i32, %c0_i32_0 : i32, i32, i32
  }
  func.func @transform_1(%arg0: i32) -> (i32, i32, i32) {
    %c0_i32 = arith.constant 0 : i32
    %c0_i32_0 = arith.constant 0 : i32
    %c0_i32_1 = arith.constant 0 : i32
    return %arg0, %c0_i32, %c0_i32_0 : i32, i32, i32
  }
  func.func @transform_2(%arg0: i32) -> (i32, i32) {
    %c0_i32 = arith.constant 0 : i32
    %c0_i32_0 = arith.constant 0 : i32
    %c0_i32_1 = arith.constant 0 : i32
    return %c0_i32, %c0_i32_0 : i32, i32
  }
  func.func @transform_3(%arg0: i32) -> (i32, i32) {
    %c0_i32 = arith.constant 0 : i32
    %c0_i32_0 = arith.constant 0 : i32
    %c0_i32_1 = arith.constant 0 : i32
    return %c0_i32, %c0_i32_0 : i32, i32
  }
  func.func @transform_4(%arg0: i32) -> (i32, i32) {
    %c0_i32 = arith.constant 0 : i32
    %c0_i32_0 = arith.constant 0 : i32
    %c0_i32_1 = arith.constant 0 : i32
    return %c0_i32, %c0_i32_0 : i32, i32
  }
  func.func @transform_5(%arg0: i32) -> (i32, i32) {
    %c0_i32 = arith.constant 0 : i32
    %c0_i32_0 = arith.constant 0 : i32
    %c0_i32_1 = arith.constant 0 : i32
    return %c0_i32, %c0_i32_0 : i32, i32
  }
  func.func @transform_6(%arg0: i32) -> (i32, i32) {
    %c0_i32 = arith.constant 0 : i32
    %c0_i32_0 = arith.constant 0 : i32
    %c0_i32_1 = arith.constant 0 : i32
    return %c0_i32, %c0_i32_0 : i32, i32
  }
  func.func @transform_7(%arg0: i32) -> (i32, i32) {
    %c0_i32 = arith.constant 0 : i32
    %c0_i32_0 = arith.constant 0 : i32
    %c0_i32_1 = arith.constant 0 : i32
    return %c0_i32, %c0_i32_0 : i32, i32
  }
  func.func @transform_8(%arg0: i32) -> (i32, i32) {
    %c0_i32 = arith.constant 0 : i32
    %c0_i32_0 = arith.constant 0 : i32
    %c0_i32_1 = arith.constant 0 : i32
    return %c0_i32, %c0_i32_0 : i32, i32
  }
  func.func @transform_9(%arg0: i32) -> (i32, i32) {
    %c0_i32 = arith.constant 0 : i32
    %c0_i32_0 = arith.constant 0 : i32
    %c0_i32_1 = arith.constant 0 : i32
    return %c0_i32, %c0_i32_0 : i32, i32
  }
  func.func @transform_10(%arg0: i32) -> (i32, i32) {
    %c0_i32 = arith.constant 0 : i32
    %c0_i32_0 = arith.constant 0 : i32
    %c0_i32_1 = arith.constant 0 : i32
    return %c0_i32, %c0_i32_0 : i32, i32
  }
  func.func @transform_11(%arg0: i32) -> (i32, i32) {
    %c0_i32 = arith.constant 0 : i32
    %c0_i32_0 = arith.constant 0 : i32
    %c0_i32_1 = arith.constant 0 : i32
    return %c0_i32, %c0_i32_0 : i32, i32
  }
  func.func @transform_12(%arg0: i32) -> (i32, i32) {
    %c0_i32 = arith.constant 0 : i32
    %c0_i32_0 = arith.constant 0 : i32
    %c0_i32_1 = arith.constant 0 : i32
    return %c0_i32, %c0_i32_0 : i32, i32
  }
  func.func @transform_13(%arg0: i32) -> (i32, i32) {
    %c0_i32 = arith.constant 0 : i32
    %c0_i32_0 = arith.constant 0 : i32
    %c0_i32_1 = arith.constant 0 : i32
    return %c0_i32, %c0_i32_0 : i32, i32
  }
  func.func @transform_14(%arg0: i32) -> (i32, i32) {
    %c0_i32 = arith.constant 0 : i32
    %c0_i32_0 = arith.constant 0 : i32
    %c0_i32_1 = arith.constant 0 : i32
    return %c0_i32, %c0_i32_0 : i32, i32
  }
  func.func @transform_15(%arg0: i32) -> (i32, i32) {
    %c0_i32 = arith.constant 0 : i32
    %c0_i32_0 = arith.constant 0 : i32
    %c0_i32_1 = arith.constant 0 : i32
    return %c0_i32, %c0_i32_0 : i32, i32
  }
  func.func @transform_16(%arg0: i32) -> (i32, i32, i32) {
    %c0_i32 = arith.constant 0 : i32
    %c0_i32_0 = arith.constant 0 : i32
    %c0_i32_1 = arith.constant 0 : i32
    return %arg0, %c0_i32, %c0_i32_0 : i32, i32, i32
  }
}

</mosaic_0001>

<llo_original>
// kernel: attention_autoencoder_upsampling_block.2
$region0: #{attention_autoencoder_upsampling_block.2}
  #allocation0 [shape = 'u32[]', space=smem, size = 0x4, offset = 0x4, fixed_abs, tag = 'smem constant byte address 0x4 - core index']
  #allocation1 [shape = 'u32[72,128]{1,0:T(1,128)}', space=vmem, size = 0x9000, scoped, tag = 'internal scratch']
  %s0 = inlined_call_operand.vmem [shape: bf16[2,32,289], index: 0, kind: input, shape index: {}]
  %s1 = inlined_call_operand.vmem [shape: bf16[16,32], index: 1, kind: input, shape index: {}]
  %s2 = inlined_call_operand.vmem [shape: f32[16,1], index: 2, kind: input, shape index: {}]
  %s3 = inlined_call_operand.vmem [shape: bf16[2,16,289], index: 3, kind: output, shape index: {}]
  %s4 = sld [smem:[#allocation0]]
  $region45: #{attention_autoencoder_upsampling_block.2} parent=0
    _
  %s6 = ssub.s32 1, %s4
  %s7 = scalar_select 0, %s6, %s4
  loop: start=0, step=1, limit=4
  $region2: #{attention_autoencoder_upsampling_block.2} parent=0 // loop_pre_header
    _
  $region3: #{attention_autoencoder_upsampling_block.2} parent=0 // loop_header
    %s9 = sphi 0, %s13
    %p10 = scmp.ge.s32.totalorder %s9, 4
    %s19 = sphi 0, %s21
    %s22 = sphi 0, %s19
    %s23 = sphi 0, %s22
    %s39 = sphi 0, %s23
    %s43 = sphi 0, %s43
    %s45 = sphi 0, %s43
    %s46 = sphi 0, %s45
    %s60 = sphi 0, %s46
    %s64 = sphi 0, %s64
    %s66 = sphi 0, %s64
    %s67 = sphi 0, %s66
    %s81 = sphi 0, %s67
    %s87 = sphi 0, %s89
    %s90 = sphi 0, %s87
    %s91 = sphi 0, %s90
    %s107 = sphi 0, %s91
  $region4: #{attention_autoencoder_upsampling_block.2} parent=0 // loop_header_branch
    %12 = sbr.rel (%p10) target = $region8
  $region5: #{attention_autoencoder_upsampling_block.2} parent=0 // loop_body
    %s14 = ssub.s32 %s9, 1
    %s15 = ssub.s32 %s9, 2
    %s16 = sadd.s32 %s9, 1
    %s17 = ssub.s32 %s9, %s16
    %p18 = scmp.eq.s32.totalorder %s17, 0
    %s20 = sadd.s32 %s19, 1
    %s21 = scalar_select %p18, %s19, %s20
    %p24 = pneg %p18
    %p25 = scmp.eq.s32.totalorder %s9, 1
    %p26 = por %p24, %p25
    %p27 = scmp.ne.s32.totalorder %s19, %s22
    %p28 = scmp.eq.s32.totalorder %s9, 0
    %p29 = por %p27, %p28
    %p30 = scmp.ne.s32.totalorder %s19, %s22
    %p31 = scmp.eq.s32.totalorder %s14, 1
    %p32 = por %p30, %p31
    %p33 = scmp.ne.s32.totalorder %s22, %s23
    %p34 = scmp.eq.s32.totalorder %s14, 0
    %p35 = por %p33, %p34
    %p36 = scmp.ne.s32.totalorder %s22, %s23
    %p37 = scmp.eq.s32.totalorder %s15, 1
    %p38 = por %p36, %p37
    %p40 = scmp.ne.s32.totalorder %s23, %s39
    %p41 = scmp.eq.s32.totalorder %s15, 0
    %p42 = por %p40, %p41
    %s44 = sadd.s32 %s43, 1
    %p47 = scmp.eq.s32.totalorder %s9, 1
    %p48 = scmp.ne.s32.totalorder %s43, %s45
    %p49 = scmp.eq.s32.totalorder %s9, 0
    %p50 = por %p48, %p49
    %p51 = scmp.ne.s32.totalorder %s43, %s45
    %p52 = scmp.eq.s32.totalorder %s14, 1
    %p53 = por %p51, %p52
    %p54 = scmp.ne.s32.totalorder %s45, %s46
    %p55 = scmp.eq.s32.totalorder %s14, 0
    %p56 = por %p54, %p55
    %p57 = scmp.ne.s32.totalorder %s45, %s46
    %p58 = scmp.eq.s32.totalorder %s15, 1
    %p59 = por %p57, %p58
    %p61 = scmp.ne.s32.totalorder %s46, %s60
    %p62 = scmp.eq.s32.totalorder %s15, 0
    %p63 = por %p61, %p62
    %s65 = sadd.s32 %s64, 1
    %p68 = scmp.eq.s32.totalorder %s9, 1
    %p69 = scmp.ne.s32.totalorder %s64, %s66
    %p70 = scmp.eq.s32.totalorder %s9, 0
    %p71 = por %p69, %p70
    %p72 = scmp.ne.s32.totalorder %s64, %s66
    %p73 = scmp.eq.s32.totalorder %s14, 1
    %p74 = por %p72, %p73
    %p75 = scmp.ne.s32.totalorder %s66, %s67
    %p76 = scmp.eq.s32.totalorder %s14, 0
    %p77 = por %p75, %p76
    %p78 = scmp.ne.s32.totalorder %s66, %s67
    %p79 = scmp.eq.s32.totalorder %s15, 1
    %p80 = por %p78, %p79
    %p82 = scmp.ne.s32.totalorder %s67, %s81
    %p83 = scmp.eq.s32.totalorder %s15, 0
    %p84 = por %p82, %p83
    %s85 = ssub.s32 %s9, %s16
    %p86 = scmp.eq.s32.totalorder %s85, 0
    %s88 = sadd.s32 %s87, 1
    %s89 = scalar_select %p86, %s87, %s88
    %p92 = pneg %p86
    %p93 = scmp.eq.s32.totalorder %s9, 1
    %p94 = por %p92, %p93
    %p95 = scmp.ne.s32.totalorder %s87, %s90
    %p96 = scmp.eq.s32.totalorder %s9, 0
    %p97 = por %p95, %p96
    %p98 = scmp.ne.s32.totalorder %s87, %s90
    %p99 = scmp.eq.s32.totalorder %s14, 1
    %p100 = por %p98, %p99
    %p101 = scmp.ne.s32.totalorder %s90, %s91
    %p102 = scmp.eq.s32.totalorder %s14, 0
    %p103 = por %p101, %p102
    %p104 = scmp.ne.s32.totalorder %s90, %s91
    %p105 = scmp.eq.s32.totalorder %s15, 1
    %p106 = por %p104, %p105
    %p108 = scmp.ne.s32.totalorder %s91, %s107
    %p109 = scmp.eq.s32.totalorder %s15, 0
    %p110 = por %p108, %p109
    %p111 = scmp.le.s32.totalorder 1, %s9
    %p112 = scmp.lt.s32.totalorder %s9, 3
    %p113 = pnand %p111, %p112
    %p114 = pneg %p113
    // Predicated region
    $region9: #{attention_autoencoder_upsampling_block.2} parent=5 // pred_check
      _
    $region10: #{attention_autoencoder_upsampling_block.2} parent=5 // pred_check_branch
      %116 = sbr.rel (%p113) target = $region12
    $region11: #{attention_autoencoder_upsampling_block.2} parent=5 // pred_region
      %s117 = ssub.s32 %s9, 1
      // Predicated region
      $region13: #{attention_autoencoder_upsampling_block.2} parent=11 // pred_check
        %p118 = pneg %p56
      $region14: #{attention_autoencoder_upsampling_block.2} parent=11 // pred_check_branch
        %120 = sbr.rel (%p118) target = $region16
      $region15: #{attention_autoencoder_upsampling_block.2} parent=11 // pred_region
        _
      $region16: #{attention_autoencoder_upsampling_block.2} parent=11 // pred_fallthru
        _
      // Predicated region
      $region17: #{attention_autoencoder_upsampling_block.2} parent=11 // pred_check
        %p121 = pneg %p77
      $region18: #{attention_autoencoder_upsampling_block.2} parent=11 // pred_check_branch
        %123 = sbr.rel (%p121) target = $region20
      $region19: #{attention_autoencoder_upsampling_block.2} parent=11 // pred_region
        _
      $region20: #{attention_autoencoder_upsampling_block.2} parent=11 // pred_fallthru
        _
    $region12: #{attention_autoencoder_upsampling_block.2} parent=5 // pred_fallthru
      _
    %p124 = scmp.lt.s32.totalorder %s9, 2
    // Predicated region
    $region21: #{attention_autoencoder_upsampling_block.2} parent=5 // pred_check
      %p125 = pneg %p124
    $region22: #{attention_autoencoder_upsampling_block.2} parent=5 // pred_check_branch
      %127 = sbr.rel (%p125) target = $region24
    $region23: #{attention_autoencoder_upsampling_block.2} parent=5 // pred_region
      // Predicated region
      $region25: #{attention_autoencoder_upsampling_block.2} parent=23 // pred_check
        %p128 = pneg %p29
      $region26: #{attention_autoencoder_upsampling_block.2} parent=23 // pred_check_branch
        %130 = sbr.rel (%p128) target = $region28
      $region27: #{attention_autoencoder_upsampling_block.2} parent=23 // pred_region
        %p131 = scmp.lt.s32.totalorder %s9, 1
        %s132 = scalar_select %p131, %s9, 1
        %s133 = smul.addr %s132, 12
        %s134 = smul.addr %s133, 4
        %s135 = scalar_lea.vmem %s0, %s134
      $region28: #{attention_autoencoder_upsampling_block.2} parent=23 // pred_fallthru
        _
    $region24: #{attention_autoencoder_upsampling_block.2} parent=5 // pred_fallthru
      _
    %p136 = scmp.le.s32.totalorder 1, %s9
    %p137 = scmp.lt.s32.totalorder %s9, 3
    %p138 = pnand %p136, %p137
    %p139 = pneg %p138
    // Predicated region
    $region29: #{attention_autoencoder_upsampling_block.2} parent=5 // pred_check
      _
    $region30: #{attention_autoencoder_upsampling_block.2} parent=5 // pred_check_branch
      %141 = sbr.rel (%p138) target = $region32
    $region31: #{attention_autoencoder_upsampling_block.2} parent=5 // pred_region
      %s142 = ssub.s32 %s9, 1
      %p143 = scmp.lt.s32.totalorder %s14, 1
      %s144 = scalar_select %p143, %s14, 1
      %s145 = smul.addr %s144, 12
      %s146 = smul.addr %s145, 4
      %s147 = scalar_lea.vmem %s0, %s146
      %p148 = pneg %p35
      %p149 = pneg %p32
      %p150 = pneg %p56
      %p151 = pneg %p53
      %p152 = pneg %p77
      %p153 = pneg %p74
      %p154 = pneg %p103
      %p155 = pneg %p100
      %p156 = scmp.lt.s32.totalorder %s14, 1
      %s157 = scalar_select %p156, %s14, 1
      %s158 = smul.addr %s157, 6
      %s159 = smul.addr %s158, 4
      %s160 = scalar_lea.vmem %s3, %s159
      %p161 = scmp.lt.s32.totalorder %s14, 1
      %s162 = scalar_select %p161, %s14, 1
      %s163 = smul.addr %s162, 12
      %s164 = smul.addr %s163, 4
      %s165 = scalar_lea.vmem %s0, %s164
      %p166 = scmp.lt.s32.totalorder %s14, 1
      %s167 = scalar_select %p166, %s14, 1
      %s168 = smul.addr %s167, 6
      %s169 = smul.addr %s168, 4
      %s170 = scalar_lea.vmem %s3, %s169
      %v172 = vld [vmem:[%s1] sm:$0xf]
      %v173 = vld [vmem:[%s1 + $0x4] sm:$0xf]
      %v174 = vld [vmem:[%s165] sm:$0xff]
      %v175 = vld [vmem:[%s165 + $0x8] sm:$0xf]
      %v176 = vld [vmem:[%s165 + $0xc] sm:$0xff]
      %v177 = vld [vmem:[%s165 + $0x14] sm:$0xf]
      %v178 = vld [vmem:[%s165 + $0x18] sm:$0xff]
      %v179 = vld [vmem:[%s165 + $0x20] sm:$0xf]
      %v180 = vld [vmem:[%s165 + $0x24] sm:$0xff]
      %v181 = vld [vmem:[%s165 + $0x2c] sm:$0xf]
      %v182 = vld [vmem:[%s2] sm:$0xff]
      %v183 = vld [vmem:[%s2 + $0x8] sm:$0xff]
      %185 = vset.pattern.permute.xlu0 0
      %186 = vperm.xlu0 %185, %v182
      %v187 = vpop.permute.xlu0 %186
      %190 = vset.pattern.permute.xlu0 0
      %191 = vperm.xlu0 %190, %v183
      %v192 = vpop.permute.xlu0 %191
      %v196 = vunpack.c.l.b16 %v172
      %v197 = vunpack.c.l.b16 %v173
      %v198 = vpack.c.b16 %v197, %v196
      %v207 = vunpack.c.l.b16 %v174
      %v208 = vunpack.c.h.b16 %v174
      %v209 = vunpack.c.l.b16 %v175
      %v210 = vunpack.c.l.b16 %v176
      %v211 = vunpack.c.h.b16 %v176
      %v212 = vunpack.c.l.b16 %v177
      %v213 = vunpack.c.l.b16 %v178
      %v214 = vunpack.c.h.b16 %v178
      %v215 = vunpack.c.l.b16 %v179
      %v216 = vunpack.c.l.b16 %v180
      %v217 = vunpack.c.h.b16 %v180
      %v218 = vunpack.c.l.b16 %v181
      %v219 = vpack.c.b16 %v210, %v207
      %v220 = vpack.c.b16 %v211, %v208
      %v221 = vpack.c.b16 %v212, %v209
      %v222 = vpack.c.b16 %v216, %v213
      %v223 = vpack.c.b16 %v217, %v214
      %v224 = vpack.c.b16 %v218, %v215
      %vm231 = vcmask 261120
      %v233 = vsel %vm231, %v198, 0
      %235 = vmatpush.bf16.msra.mxu0 0
      %236 = vmatpush.bf16.msra.mxu0 0
      %237 = vmatpush.bf16.msra.mxu0 0
      %238 = vmatpush.bf16.msra.mxu0 0
      %239 = vmatpush.bf16.msra.mxu0 0
      %240 = vmatpush.bf16.msra.mxu0 0
      %241 = vmatpush.bf16.msra.mxu0 %v222
      %242 = vmatpush.bf16.msra.mxu0 %v219
      %243 = vmatmul.bf16.gmra.mxu0 %v233
      %v244 = vpop.f32.mrf.mxu0
      %v245 = vadd.f32 %v187, %v244
      %v246 = vpop.f32.mrf.mxu0
      %v247 = vadd.f32 %v192, %v246
      %248 = vdwg.mxu0
      %249 = vmatpush.bf16.msra.mxu0 0
      %250 = vmatpush.bf16.msra.mxu0 0
      %251 = vmatpush.bf16.msra.mxu0 0
      %252 = vmatpush.bf16.msra.mxu0 0
      %253 = vmatpush.bf16.msra.mxu0 0
      %254 = vmatpush.bf16.msra.mxu0 0
      %255 = vmatpush.bf16.msra.mxu0 %v223
      %256 = vmatpush.bf16.msra.mxu0 %v220
      %257 = vmatmul.bf16.gmra.mxu0 %v233
      %v258 = vpop.f32.mrf.mxu0
      %v259 = vadd.f32 %v187, %v258
      %v260 = vpop.f32.mrf.mxu0
      %v261 = vadd.f32 %v192, %v260
      %262 = vdwg.mxu0
      %263 = vmatpush.bf16.msra.mxu0 0
      %264 = vmatpush.bf16.msra.mxu0 0
      %265 = vmatpush.bf16.msra.mxu0 0
      %266 = vmatpush.bf16.msra.mxu0 0
      %267 = vmatpush.bf16.msra.mxu0 0
      %268 = vmatpush.bf16.msra.mxu0 0
      %269 = vmatpush.bf16.msra.mxu0 %v224
      %270 = vmatpush.bf16.msra.mxu0 %v221
      %271 = vmatmul.bf16.gmra.mxu0 %v233
      %v272 = vpop.f32.mrf.mxu0
      %v273 = vadd.f32 %v187, %v272
      %v274 = vpop.f32.mrf.mxu0
      %v275 = vadd.f32 %v192, %v274
      %276 = vdwg.mxu0
      %v277 = vpack.c.bf16 %v259, %v245
      %v278 = vpack.c.bf16 %v273, %v273
      %v279 = vpack.c.bf16 %v261, %v247
      %v280 = vpack.c.bf16 %v275, %v275
      %281 = vst [vmem:[%s170] sm:$0xff] %v277
      %vm282 = vcmask 265216
      %283 = vst.msk [vmem:[%s170 + $0x8] sm:$0xf] %vm282, %v278
      %284 = vst [vmem:[%s170 + $0xc] sm:$0xff] %v279
      %285 = vst.msk [vmem:[%s170 + $0x14] sm:$0xf] %vm282, %v280
      %p286 = scmp.lt.s32.totalorder %s14, 1
      %s287 = scalar_select %p286, %s14, 1
      %s288 = smul.addr %s287, 6
      %s289 = smul.addr %s288, 4
      %s290 = scalar_lea.vmem %s3, %s289
      // Predicated region
      $region33: #{attention_autoencoder_upsampling_block.2} parent=31 // pred_check
        %p291 = pneg %p100
      $region34: #{attention_autoencoder_upsampling_block.2} parent=31 // pred_check_branch
        %293 = sbr.rel (%p291) target = $region36
      $region35: #{attention_autoencoder_upsampling_block.2} parent=31 // pred_region
        _
      $region36: #{attention_autoencoder_upsampling_block.2} parent=31 // pred_fallthru
        _
    $region32: #{attention_autoencoder_upsampling_block.2} parent=5 // pred_fallthru
      _
    %p294 = scmp.le.s32.totalorder 2, %s9
    // Predicated region
    $region37: #{attention_autoencoder_upsampling_block.2} parent=5 // pred_check
      %p295 = pneg %p294
    $region38: #{attention_autoencoder_upsampling_block.2} parent=5 // pred_check_branch
      %297 = sbr.rel (%p295) target = $region40
    $region39: #{attention_autoencoder_upsampling_block.2} parent=5 // pred_region
      %s298 = ssub.s32 %s9, 2
      // Predicated region
      $region41: #{attention_autoencoder_upsampling_block.2} parent=39 // pred_check
        %p299 = pneg %p106
      $region42: #{attention_autoencoder_upsampling_block.2} parent=39 // pred_check_branch
        %301 = sbr.rel (%p299) target = $region44
      $region43: #{attention_autoencoder_upsampling_block.2} parent=39 // pred_region
        %p302 = scmp.lt.s32.totalorder %s15, 1
        %s303 = scalar_select %p302, %s15, 1
        %s304 = smul.addr %s303, 6
        %s305 = smul.addr %s304, 4
        %s306 = scalar_lea.vmem %s3, %s305
      $region44: #{attention_autoencoder_upsampling_block.2} parent=39 // pred_fallthru
        _
    $region40: #{attention_autoencoder_upsampling_block.2} parent=5 // pred_fallthru
      _
  $region6: #{attention_autoencoder_upsampling_block.2} parent=0 // loop_footer
    %s13 = sadd.s32 1, %s9
  $region7: #{attention_autoencoder_upsampling_block.2} parent=0 // loop_footer_branch
    %8 = sbr.rel target = $region3
  $region8: #{attention_autoencoder_upsampling_block.2} parent=0 // loop_exit
    _

// kernel: attention_autoencoder_upsampling_block.3
$region0: #{attention_autoencoder_upsampling_block.3}
  #allocation0 [shape = 'u32[]', space=smem, size = 0x4, offset = 0x4, fixed_abs, tag = 'smem constant byte address 0x4 - core index']
  #allocation1 [shape = 'u32[72,128]{1,0:T(1,128)}', space=vmem, size = 0x9000, scoped, tag = 'internal scratch']
  #allocation2 [shape = 'f32[1,1]{1,0:T(1,128)S(1)}', space=vmem, size = 0x200, scoped, tag = 'scoped memory for attention_autoencoder_upsampling_block.3']
  %s0 = inlined_call_operand.vmem [shape: bf16[2,4,1024], index: 0, kind: input, shape index: {}]
  %s1 = inlined_call_operand.vmem [shape: bf16[2,4,1024], index: 1, kind: input, shape index: {}]
  %s2 = inlined_call_operand.vmem [shape: bf16[4,4], index: 2, kind: input, shape index: {}]
  %s3 = inlined_call_operand.vmem [shape: bf16[4,4], index: 3, kind: input, shape index: {}]
  %s4 = inlined_call_operand.vmem [shape: f32[4,1], index: 4, kind: input, shape index: {}]
  %s5 = inlined_call_operand.vmem [shape: f32[4,1], index: 5, kind: input, shape index: {}]
  %s6 = inlined_call_operand.<no memory space> [shape: f32[1,1], index: 6, kind: input, shape index: {}]
  %s7 = inlined_call_operand.vmem [shape: bf16[8,4], index: 7, kind: input, shape index: {}]
  %s8 = inlined_call_operand.vmem [shape: bf16[8,4], index: 8, kind: input, shape index: {}]
  %s9 = inlined_call_operand.vmem [shape: f32[8,1], index: 9, kind: input, shape index: {}]
  %s10 = inlined_call_operand.vmem [shape: bf16[8,8], index: 10, kind: input, shape index: {}]
  %s11 = inlined_call_operand.vmem [shape: f32[8,1], index: 11, kind: input, shape index: {}]
  %s12 = inlined_call_operand.vmem [shape: bf16[8,72], index: 12, kind: input, shape index: {}]
  %s13 = inlined_call_operand.vmem [shape: f32[8,1], index: 13, kind: input, shape index: {}]
  %s14 = inlined_call_operand.vmem [shape: bf16[8,8], index: 14, kind: input, shape index: {}]
  %s15 = inlined_call_operand.vmem [shape: f32[8,1], index: 15, kind: input, shape index: {}]
  %s16 = inlined_call_operand.vmem [shape: f32[2,8,1024], index: 16, kind: output, shape index: {}]
  %s17 = sld [smem:[#allocation0]]
  $region97: #{attention_autoencoder_upsampling_block.3} parent=0
    _
  %s19 = ssub.s32 1, %s17
  %s20 = scalar_select 0, %s19, %s17
  %v21 = vstv %s6
  %22 = vst [vmem:[#allocation2] sm:$0x1] %v21
  loop: start=0, step=1, limit=4
  $region2: #{attention_autoencoder_upsampling_block.3} parent=0 // loop_pre_header
    _
  $region3: #{attention_autoencoder_upsampling_block.3} parent=0 // loop_header
    %s24 = sphi 0, %s28
    %p25 = scmp.ge.s32.totalorder %s24, 4
    %s34 = sphi 0, %s36
    %s37 = sphi 0, %s34
    %s38 = sphi 0, %s37
    %s54 = sphi 0, %s38
    %s60 = sphi 0, %s62
    %s63 = sphi 0, %s60
    %s64 = sphi 0, %s63
    %s80 = sphi 0, %s64
    %s84 = sphi 0, %s84
    %s86 = sphi 0, %s84
    %s87 = sphi 0, %s86
    %s101 = sphi 0, %s87
    %s105 = sphi 0, %s105
    %s107 = sphi 0, %s105
    %s108 = sphi 0, %s107
    %s122 = sphi 0, %s108
    %s126 = sphi 0, %s126
    %s128 = sphi 0, %s126
    %s129 = sphi 0, %s128
    %s143 = sphi 0, %s129
    %s147 = sphi 0, %s147
    %s149 = sphi 0, %s147
    %s150 = sphi 0, %s149
    %s164 = sphi 0, %s150
    %s168 = sphi 0, %s168
    %s170 = sphi 0, %s168
    %s171 = sphi 0, %s170
    %s185 = sphi 0, %s171
    %s189 = sphi 0, %s189
    %s191 = sphi 0, %s189
    %s192 = sphi 0, %s191
    %s206 = sphi 0, %s192
    %s210 = sphi 0, %s210
    %s212 = sphi 0, %s210
    %s213 = sphi 0, %s212
    %s227 = sphi 0, %s213
    %s231 = sphi 0, %s231
    %s233 = sphi 0, %s231
    %s234 = sphi 0, %s233
    %s248 = sphi 0, %s234
    %s252 = sphi 0, %s252
    %s254 = sphi 0, %s252
    %s255 = sphi 0, %s254
    %s269 = sphi 0, %s255
    %s273 = sphi 0, %s273
    %s275 = sphi 0, %s273
    %s276 = sphi 0, %s275
    %s290 = sphi 0, %s276
    %s294 = sphi 0, %s294
    %s296 = sphi 0, %s294
    %s297 = sphi 0, %s296
    %s311 = sphi 0, %s297
    %s315 = sphi 0, %s315
    %s317 = sphi 0, %s315
    %s318 = sphi 0, %s317
    %s332 = sphi 0, %s318
    %s336 = sphi 0, %s336
    %s338 = sphi 0, %s336
    %s339 = sphi 0, %s338
    %s353 = sphi 0, %s339
    %s357 = sphi 0, %s357
    %s359 = sphi 0, %s357
    %s360 = sphi 0, %s359
    %s374 = sphi 0, %s360
    %s380 = sphi 0, %s382
    %s383 = sphi 0, %s380
    %s384 = sphi 0, %s383
    %s400 = sphi 0, %s384
  $region4: #{attention_autoencoder_upsampling_block.3} parent=0 // loop_header_branch
    %27 = sbr.rel (%p25) target = $region8
  $region5: #{attention_autoencoder_upsampling_block.3} parent=0 // loop_body
    %s29 = ssub.s32 %s24, 1
    %s30 = ssub.s32 %s24, 2
    %s31 = sadd.s32 %s24, 1
    %s32 = ssub.s32 %s24, %s31
    %p33 = scmp.eq.s32.totalorder %s32, 0
    %s35 = sadd.s32 %s34, 1
    %s36 = scalar_select %p33, %s34, %s35
    %p39 = pneg %p33
    %p40 = scmp.eq.s32.totalorder %s24, 1
    %p41 = por %p39, %p40
    %p42 = scmp.ne.s32.totalorder %s34, %s37
    %p43 = scmp.eq.s32.totalorder %s24, 0
    %p44 = por %p42, %p43
    %p45 = scmp.ne.s32.totalorder %s34, %s37
    %p46 = scmp.eq.s32.totalorder %s29, 1
    %p47 = por %p45, %p46
    %p48 = scmp.ne.s32.totalorder %s37, %s38
    %p49 = scmp.eq.s32.totalorder %s29, 0
    %p50 = por %p48, %p49
    %p51 = scmp.ne.s32.totalorder %s37, %s38
    %p52 = scmp.eq.s32.totalorder %s30, 1
    %p53 = por %p51, %p52
    %p55 = scmp.ne.s32.totalorder %s38, %s54
    %p56 = scmp.eq.s32.totalorder %s30, 0
    %p57 = por %p55, %p56
    %s58 = ssub.s32 %s24, %s31
    %p59 = scmp.eq.s32.totalorder %s58, 0
    %s61 = sadd.s32 %s60, 1
    %s62 = scalar_select %p59, %s60, %s61
    %p65 = pneg %p59
    %p66 = scmp.eq.s32.totalorder %s24, 1
    %p67 = por %p65, %p66
    %p68 = scmp.ne.s32.totalorder %s60, %s63
    %p69 = scmp.eq.s32.totalorder %s24, 0
    %p70 = por %p68, %p69
    %p71 = scmp.ne.s32.totalorder %s60, %s63
    %p72 = scmp.eq.s32.totalorder %s29, 1
    %p73 = por %p71, %p72
    %p74 = scmp.ne.s32.totalorder %s63, %s64
    %p75 = scmp.eq.s32.totalorder %s29, 0
    %p76 = por %p74, %p75
    %p77 = scmp.ne.s32.totalorder %s63, %s64
    %p78 = scmp.eq.s32.totalorder %s30, 1
    %p79 = por %p77, %p78
    %p81 = scmp.ne.s32.totalorder %s64, %s80
    %p82 = scmp.eq.s32.totalorder %s30, 0
    %p83 = por %p81, %p82
    %s85 = sadd.s32 %s84, 1
    %p88 = scmp.eq.s32.totalorder %s24, 1
    %p89 = scmp.ne.s32.totalorder %s84, %s86
    %p90 = scmp.eq.s32.totalorder %s24, 0
    %p91 = por %p89, %p90
    %p92 = scmp.ne.s32.totalorder %s84, %s86
    %p93 = scmp.eq.s32.totalorder %s29, 1
    %p94 = por %p92, %p93
    %p95 = scmp.ne.s32.totalorder %s86, %s87
    %p96 = scmp.eq.s32.totalorder %s29, 0
    %p97 = por %p95, %p96
    %p98 = scmp.ne.s32.totalorder %s86, %s87
    %p99 = scmp.eq.s32.totalorder %s30, 1
    %p100 = por %p98, %p99
    %p102 = scmp.ne.s32.totalorder %s87, %s101
    %p103 = scmp.eq.s32.totalorder %s30, 0
    %p104 = por %p102, %p103
    %s106 = sadd.s32 %s105, 1
    %p109 = scmp.eq.s32.totalorder %s24, 1
    %p110 = scmp.ne.s32.totalorder %s105, %s107
    %p111 = scmp.eq.s32.totalorder %s24, 0
    %p112 = por %p110, %p111
    %p113 = scmp.ne.s32.totalorder %s105, %s107
    %p114 = scmp.eq.s32.totalorder %s29, 1
    %p115 = por %p113, %p114
    %p116 = scmp.ne.s32.totalorder %s107, %s108
    %p117 = scmp.eq.s32.totalorder %s29, 0
    %p118 = por %p116, %p117
    %p119 = scmp.ne.s32.totalorder %s107, %s108
    %p120 = scmp.eq.s32.totalorder %s30, 1
    %p121 = por %p119, %p120
    %p123 = scmp.ne.s32.totalorder %s108, %s122
    %p124 = scmp.eq.s32.totalorder %s30, 0
    %p125 = por %p123, %p124
    %s127 = sadd.s32 %s126, 1
    %p130 = scmp.eq.s32.totalorder %s24, 1
    %p131 = scmp.ne.s32.totalorder %s126, %s128
    %p132 = scmp.eq.s32.totalorder %s24, 0
    %p133 = por %p131, %p132
    %p134 = scmp.ne.s32.totalorder %s126, %s128
    %p135 = scmp.eq.s32.totalorder %s29, 1
    %p136 = por %p134, %p135
    %p137 = scmp.ne.s32.totalorder %s128, %s129
    %p138 = scmp.eq.s32.totalorder %s29, 0
    %p139 = por %p137, %p138
    %p140 = scmp.ne.s32.totalorder %s128, %s129
    %p141 = scmp.eq.s32.totalorder %s30, 1
    %p142 = por %p140, %p141
    %p144 = scmp.ne.s32.totalorder %s129, %s143
    %p145 = scmp.eq.s32.totalorder %s30, 0
    %p146 = por %p144, %p145
    %s148 = sadd.s32 %s147, 1
    %p151 = scmp.eq.s32.totalorder %s24, 1
    %p152 = scmp.ne.s32.totalorder %s147, %s149
    %p153 = scmp.eq.s32.totalorder %s24, 0
    %p154 = por %p152, %p153
    %p155 = scmp.ne.s32.totalorder %s147, %s149
    %p156 = scmp.eq.s32.totalorder %s29, 1
    %p157 = por %p155, %p156
    %p158 = scmp.ne.s32.totalorder %s149, %s150
    %p159 = scmp.eq.s32.totalorder %s29, 0
    %p160 = por %p158, %p159
    %p161 = scmp.ne.s32.totalorder %s149, %s150
    %p162 = scmp.eq.s32.totalorder %s30, 1
    %p163 = por %p161, %p162
    %p165 = scmp.ne.s32.totalorder %s150, %s164
    %p166 = scmp.eq.s32.totalorder %s30, 0
    %p167 = por %p165, %p166
    %s169 = sadd.s32 %s168, 1
    %p172 = scmp.eq.s32.totalorder %s24, 1
    %p173 = scmp.ne.s32.totalorder %s168, %s170
    %p174 = scmp.eq.s32.totalorder %s24, 0
    %p175 = por %p173, %p174
    %p176 = scmp.ne.s32.totalorder %s168, %s170
    %p177 = scmp.eq.s32.totalorder %s29, 1
    %p178 = por %p176, %p177
    %p179 = scmp.ne.s32.totalorder %s170, %s171
    %p180 = scmp.eq.s32.totalorder %s29, 0
    %p181 = por %p179, %p180
    %p182 = scmp.ne.s32.totalorder %s170, %s171
    %p183 = scmp.eq.s32.totalorder %s30, 1
    %p184 = por %p182, %p183
    %p186 = scmp.ne.s32.totalorder %s171, %s185
    %p187 = scmp.eq.s32.totalorder %s30, 0
    %p188 = por %p186, %p187
    %s190 = sadd.s32 %s189, 1
    %p193 = scmp.eq.s32.totalorder %s24, 1
    %p194 = scmp.ne.s32.totalorder %s189, %s191
    %p195 = scmp.eq.s32.totalorder %s24, 0
    %p196 = por %p194, %p195
    %p197 = scmp.ne.s32.totalorder %s189, %s191
    %p198 = scmp.eq.s32.totalorder %s29, 1
    %p199 = por %p197, %p198
    %p200 = scmp.ne.s32.totalorder %s191, %s192
    %p201 = scmp.eq.s32.totalorder %s29, 0
    %p202 = por %p200, %p201
    %p203 = scmp.ne.s32.totalorder %s191, %s192
    %p204 = scmp.eq.s32.totalorder %s30, 1
    %p205 = por %p203, %p204
    %p207 = scmp.ne.s32.totalorder %s192, %s206
    %p208 = scmp.eq.s32.totalorder %s30, 0
    %p209 = por %p207, %p208
    %s211 = sadd.s32 %s210, 1
    %p214 = scmp.eq.s32.totalorder %s24, 1
    %p215 = scmp.ne.s32.totalorder %s210, %s212
    %p216 = scmp.eq.s32.totalorder %s24, 0
    %p217 = por %p215, %p216
    %p218 = scmp.ne.s32.totalorder %s210, %s212
    %p219 = scmp.eq.s32.totalorder %s29, 1
    %p220 = por %p218, %p219
    %p221 = scmp.ne.s32.totalorder %s212, %s213
    %p222 = scmp.eq.s32.totalorder %s29, 0
    %p223 = por %p221, %p222
    %p224 = scmp.ne.s32.totalorder %s212, %s213
    %p225 = scmp.eq.s32.totalorder %s30, 1
    %p226 = por %p224, %p225
    %p228 = scmp.ne.s32.totalorder %s213, %s227
    %p229 = scmp.eq.s32.totalorder %s30, 0
    %p230 = por %p228, %p229
    %s232 = sadd.s32 %s231, 1
    %p235 = scmp.eq.s32.totalorder %s24, 1
    %p236 = scmp.ne.s32.totalorder %s231, %s233
    %p237 = scmp.eq.s32.totalorder %s24, 0
    %p238 = por %p236, %p237
    %p239 = scmp.ne.s32.totalorder %s231, %s233
    %p240 = scmp.eq.s32.totalorder %s29, 1
    %p241 = por %p239, %p240
    %p242 = scmp.ne.s32.totalorder %s233, %s234
    %p243 = scmp.eq.s32.totalorder %s29, 0
    %p244 = por %p242, %p243
    %p245 = scmp.ne.s32.totalorder %s233, %s234
    %p246 = scmp.eq.s32.totalorder %s30, 1
    %p247 = por %p245, %p246
    %p249 = scmp.ne.s32.totalorder %s234, %s248
    %p250 = scmp.eq.s32.totalorder %s30, 0
    %p251 = por %p249, %p250
    %s253 = sadd.s32 %s252, 1
    %p256 = scmp.eq.s32.totalorder %s24, 1
    %p257 = scmp.ne.s32.totalorder %s252, %s254
    %p258 = scmp.eq.s32.totalorder %s24, 0
    %p259 = por %p257, %p258
    %p260 = scmp.ne.s32.totalorder %s252, %s254
    %p261 = scmp.eq.s32.totalorder %s29, 1
    %p262 = por %p260, %p261
    %p263 = scmp.ne.s32.totalorder %s254, %s255
    %p264 = scmp.eq.s32.totalorder %s29, 0
    %p265 = por %p263, %p264
    %p266 = scmp.ne.s32.totalorder %s254, %s255
    %p267 = scmp.eq.s32.totalorder %s30, 1
    %p268 = por %p266, %p267
    %p270 = scmp.ne.s32.totalorder %s255, %s269
    %p271 = scmp.eq.s32.totalorder %s30, 0
    %p272 = por %p270, %p271
    %s274 = sadd.s32 %s273, 1
    %p277 = scmp.eq.s32.totalorder %s24, 1
    %p278 = scmp.ne.s32.totalorder %s273, %s275
    %p279 = scmp.eq.s32.totalorder %s24, 0
    %p280 = por %p278, %p279
    %p281 = scmp.ne.s32.totalorder %s273, %s275
    %p282 = scmp.eq.s32.totalorder %s29, 1
    %p283 = por %p281, %p282
    %p284 = scmp.ne.s32.totalorder %s275, %s276
    %p285 = scmp.eq.s32.totalorder %s29, 0
    %p286 = por %p284, %p285
    %p287 = scmp.ne.s32.totalorder %s275, %s276
    %p288 = scmp.eq.s32.totalorder %s30, 1
    %p289 = por %p287, %p288
    %p291 = scmp.ne.s32.totalorder %s276, %s290
    %p292 = scmp.eq.s32.totalorder %s30, 0
    %p293 = por %p291, %p292
    %s295 = sadd.s32 %s294, 1
    %p298 = scmp.eq.s32.totalorder %s24, 1
    %p299 = scmp.ne.s32.totalorder %s294, %s296
    %p300 = scmp.eq.s32.totalorder %s24, 0
    %p301 = por %p299, %p300
    %p302 = scmp.ne.s32.totalorder %s294, %s296
    %p303 = scmp.eq.s32.totalorder %s29, 1
    %p304 = por %p302, %p303
    %p305 = scmp.ne.s32.totalorder %s296, %s297
    %p306 = scmp.eq.s32.totalorder %s29, 0
    %p307 = por %p305, %p306
    %p308 = scmp.ne.s32.totalorder %s296, %s297
    %p309 = scmp.eq.s32.totalorder %s30, 1
    %p310 = por %p308, %p309
    %p312 = scmp.ne.s32.totalorder %s297, %s311
    %p313 = scmp.eq.s32.totalorder %s30, 0
    %p314 = por %p312, %p313
    %s316 = sadd.s32 %s315, 1
    %p319 = scmp.eq.s32.totalorder %s24, 1
    %p320 = scmp.ne.s32.totalorder %s315, %s317
    %p321 = scmp.eq.s32.totalorder %s24, 0
    %p322 = por %p320, %p321
    %p323 = scmp.ne.s32.totalorder %s315, %s317
    %p324 = scmp.eq.s32.totalorder %s29, 1
    %p325 = por %p323, %p324
    %p326 = scmp.ne.s32.totalorder %s317, %s318
    %p327 = scmp.eq.s32.totalorder %s29, 0
    %p328 = por %p326, %p327
    %p329 = scmp.ne.s32.totalorder %s317, %s318
    %p330 = scmp.eq.s32.totalorder %s30, 1
    %p331 = por %p329, %p330
    %p333 = scmp.ne.s32.totalorder %s318, %s332
    %p334 = scmp.eq.s32.totalorder %s30, 0
    %p335 = por %p333, %p334
    %s337 = sadd.s32 %s336, 1
    %p340 = scmp.eq.s32.totalorder %s24, 1
    %p341 = scmp.ne.s32.totalorder %s336, %s338
    %p342 = scmp.eq.s32.totalorder %s24, 0
    %p343 = por %p341, %p342
    %p344 = scmp.ne.s32.totalorder %s336, %s338
    %p345 = scmp.eq.s32.totalorder %s29, 1
    %p346 = por %p344, %p345
    %p347 = scmp.ne.s32.totalorder %s338, %s339
    %p348 = scmp.eq.s32.totalorder %s29, 0
    %p349 = por %p347, %p348
    %p350 = scmp.ne.s32.totalorder %s338, %s339
    %p351 = scmp.eq.s32.totalorder %s30, 1
    %p352 = por %p350, %p351
    %p354 = scmp.ne.s32.totalorder %s339, %s353
    %p355 = scmp.eq.s32.totalorder %s30, 0
    %p356 = por %p354, %p355
    %s358 = sadd.s32 %s357, 1
    %p361 = scmp.eq.s32.totalorder %s24, 1
    %p362 = scmp.ne.s32.totalorder %s357, %s359
    %p363 = scmp.eq.s32.totalorder %s24, 0
    %p364 = por %p362, %p363
    %p365 = scmp.ne.s32.totalorder %s357, %s359
    %p366 = scmp.eq.s32.totalorder %s29, 1
    %p367 = por %p365, %p366
    %p368 = scmp.ne.s32.totalorder %s359, %s360
    %p369 = scmp.eq.s32.totalorder %s29, 0
    %p370 = por %p368, %p369
    %p371 = scmp.ne.s32.totalorder %s359, %s360
    %p372 = scmp.eq.s32.totalorder %s30, 1
    %p373 = por %p371, %p372
    %p375 = scmp.ne.s32.totalorder %s360, %s374
    %p376 = scmp.eq.s32.totalorder %s30, 0
    %p377 = por %p375, %p376
    %s378 = ssub.s32 %s24, %s31
    %p379 = scmp.eq.s32.totalorder %s378, 0
    %s381 = sadd.s32 %s380, 1
    %s382 = scalar_select %p379, %s380, %s381
    %p385 = pneg %p379
    %p386 = scmp.eq.s32.totalorder %s24, 1
    %p387 = por %p385, %p386
    %p388 = scmp.ne.s32.totalorder %s380, %s383
    %p389 = scmp.eq.s32.totalorder %s24, 0
    %p390 = por %p388, %p389
    %p391 = scmp.ne.s32.totalorder %s380, %s383
    %p392 = scmp.eq.s32.totalorder %s29, 1
    %p393 = por %p391, %p392
    %p394 = scmp.ne.s32.totalorder %s383, %s384
    %p395 = scmp.eq.s32.totalorder %s29, 0
    %p396 = por %p394, %p395
    %p397 = scmp.ne.s32.totalorder %s383, %s384
    %p398 = scmp.eq.s32.totalorder %s30, 1
    %p399 = por %p397, %p398
    %p401 = scmp.ne.s32.totalorder %s384, %s400
    %p402 = scmp.eq.s32.totalorder %s30, 0
    %p403 = por %p401, %p402
    %p404 = scmp.le.s32.totalorder 1, %s24
    %p405 = scmp.lt.s32.totalorder %s24, 3
    %p406 = pnand %p404, %p405
    %p407 = pneg %p406
    // Predicated region
    $region9: #{attention_autoencoder_upsampling_block.3} parent=5 // pred_check
      _
    $region10: #{attention_autoencoder_upsampling_block.3} parent=5 // pred_check_branch
      %409 = sbr.rel (%p406) target = $region12
    $region11: #{attention_autoencoder_upsampling_block.3} parent=5 // pred_region
      %s410 = ssub.s32 %s24, 1
      // Predicated region
      $region13: #{attention_autoencoder_upsampling_block.3} parent=11 // pred_check
        %p411 = pneg %p97
      $region14: #{attention_autoencoder_upsampling_block.3} parent=11 // pred_check_branch
        %413 = sbr.rel (%p411) target = $region16
      $region15: #{attention_autoencoder_upsampling_block.3} parent=11 // pred_region
        _
      $region16: #{attention_autoencoder_upsampling_block.3} parent=11 // pred_fallthru
        _
      // Predicated region
      $region17: #{attention_autoencoder_upsampling_block.3} parent=11 // pred_check
        %p414 = pneg %p118
      $region18: #{attention_autoencoder_upsampling_block.3} parent=11 // pred_check_branch
        %416 = sbr.rel (%p414) target = $region20
      $region19: #{attention_autoencoder_upsampling_block.3} parent=11 // pred_region
        _
      $region20: #{attention_autoencoder_upsampling_block.3} parent=11 // pred_fallthru
        _
      // Predicated region
      $region21: #{attention_autoencoder_upsampling_block.3} parent=11 // pred_check
        %p417 = pneg %p139
      $region22: #{attention_autoencoder_upsampling_block.3} parent=11 // pred_check_branch
        %419 = sbr.rel (%p417) target = $region24
      $region23: #{attention_autoencoder_upsampling_block.3} parent=11 // pred_region
        _
      $region24: #{attention_autoencoder_upsampling_block.3} parent=11 // pred_fallthru
        _
      // Predicated region
      $region25: #{attention_autoencoder_upsampling_block.3} parent=11 // pred_check
        %p420 = pneg %p160
      $region26: #{attention_autoencoder_upsampling_block.3} parent=11 // pred_check_branch
        %422 = sbr.rel (%p420) target = $region28
      $region27: #{attention_autoencoder_upsampling_block.3} parent=11 // pred_region
        _
      $region28: #{attention_autoencoder_upsampling_block.3} parent=11 // pred_fallthru
        _
      // Predicated region
      $region29: #{attention_autoencoder_upsampling_block.3} parent=11 // pred_check
        %p423 = pneg %p181
      $region30: #{attention_autoencoder_upsampling_block.3} parent=11 // pred_check_branch
        %425 = sbr.rel (%p423) target = $region32
      $region31: #{attention_autoencoder_upsampling_block.3} parent=11 // pred_region
        _
      $region32: #{attention_autoencoder_upsampling_block.3} parent=11 // pred_fallthru
        _
      // Predicated region
      $region33: #{attention_autoencoder_upsampling_block.3} parent=11 // pred_check
        %p426 = pneg %p202
      $region34: #{attention_autoencoder_upsampling_block.3} parent=11 // pred_check_branch
        %428 = sbr.rel (%p426) target = $region36
      $region35: #{attention_autoencoder_upsampling_block.3} parent=11 // pred_region
        _
      $region36: #{attention_autoencoder_upsampling_block.3} parent=11 // pred_fallthru
        _
      // Predicated region
      $region37: #{attention_autoencoder_upsampling_block.3} parent=11 // pred_check
        %p429 = pneg %p223
      $region38: #{attention_autoencoder_upsampling_block.3} parent=11 // pred_check_branch
        %431 = sbr.rel (%p429) target = $region40
      $region39: #{attention_autoencoder_upsampling_block.3} parent=11 // pred_region
        _
      $region40: #{attention_autoencoder_upsampling_block.3} parent=11 // pred_fallthru
        _
      // Predicated region
      $region41: #{attention_autoencoder_upsampling_block.3} parent=11 // pred_check
        %p432 = pneg %p244
      $region42: #{attention_autoencoder_upsampling_block.3} parent=11 // pred_check_branch
        %434 = sbr.rel (%p432) target = $region44
      $region43: #{attention_autoencoder_upsampling_block.3} parent=11 // pred_region
        _
      $region44: #{attention_autoencoder_upsampling_block.3} parent=11 // pred_fallthru
        _
      // Predicated region
      $region45: #{attention_autoencoder_upsampling_block.3} parent=11 // pred_check
        %p435 = pneg %p265
      $region46: #{attention_autoencoder_upsampling_block.3} parent=11 // pred_check_branch
        %437 = sbr.rel (%p435) target = $region48
      $region47: #{attention_autoencoder_upsampling_block.3} parent=11 // pred_region
        _
      $region48: #{attention_autoencoder_upsampling_block.3} parent=11 // pred_fallthru
        _
      // Predicated region
      $region49: #{attention_autoencoder_upsampling_block.3} parent=11 // pred_check
        %p438 = pneg %p286
      $region50: #{attention_autoencoder_upsampling_block.3} parent=11 // pred_check_branch
        %440 = sbr.rel (%p438) target = $region52
      $region51: #{attention_autoencoder_upsampling_block.3} parent=11 // pred_region
        _
      $region52: #{attention_autoencoder_upsampling_block.3} parent=11 // pred_fallthru
        _
      // Predicated region
      $region53: #{attention_autoencoder_upsampling_block.3} parent=11 // pred_check
        %p441 = pneg %p307
      $region54: #{attention_autoencoder_upsampling_block.3} parent=11 // pred_check_branch
        %443 = sbr.rel (%p441) target = $region56
      $region55: #{attention_autoencoder_upsampling_block.3} parent=11 // pred_region
        _
      $region56: #{attention_autoencoder_upsampling_block.3} parent=11 // pred_fallthru
        _
      // Predicated region
      $region57: #{attention_autoencoder_upsampling_block.3} parent=11 // pred_check
        %p444 = pneg %p328
      $region58: #{attention_autoencoder_upsampling_block.3} parent=11 // pred_check_branch
        %446 = sbr.rel (%p444) target = $region60
      $region59: #{attention_autoencoder_upsampling_block.3} parent=11 // pred_region
        _
      $region60: #{attention_autoencoder_upsampling_block.3} parent=11 // pred_fallthru
        _
      // Predicated region
      $region61: #{attention_autoencoder_upsampling_block.3} parent=11 // pred_check
        %p447 = pneg %p349
      $region62: #{attention_autoencoder_upsampling_block.3} parent=11 // pred_check_branch
        %449 = sbr.rel (%p447) target = $region64
      $region63: #{attention_autoencoder_upsampling_block.3} parent=11 // pred_region
        _
      $region64: #{attention_autoencoder_upsampling_block.3} parent=11 // pred_fallthru
        _
      // Predicated region
      $region65: #{attention_autoencoder_upsampling_block.3} parent=11 // pred_check
        %p450 = pneg %p370
      $region66: #{attention_autoencoder_upsampling_block.3} parent=11 // pred_check_branch
        %452 = sbr.rel (%p450) target = $region68
      $region67: #{attention_autoencoder_upsampling_block.3} parent=11 // pred_region
        _
      $region68: #{attention_autoencoder_upsampling_block.3} parent=11 // pred_fallthru
        _
    $region12: #{attention_autoencoder_upsampling_block.3} parent=5 // pred_fallthru
      _
    %p453 = scmp.lt.s32.totalorder %s24, 2
    // Predicated region
    $region69: #{attention_autoencoder_upsampling_block.3} parent=5 // pred_check
      %p454 = pneg %p453
    $region70: #{attention_autoencoder_upsampling_block.3} parent=5 // pred_check_branch
      %456 = sbr.rel (%p454) target = $region72
    $region71: #{attention_autoencoder_upsampling_block.3} parent=5 // pred_region
      // Predicated region
      $region73: #{attention_autoencoder_upsampling_block.3} parent=71 // pred_check
        %p457 = pneg %p44
      $region74: #{attention_autoencoder_upsampling_block.3} parent=71 // pred_check_branch
        %459 = sbr.rel (%p457) target = $region76
      $region75: #{attention_autoencoder_upsampling_block.3} parent=71 // pred_region
        %p460 = scmp.lt.s32.totalorder %s24, 1
        %s461 = scalar_select %p460, %s24, 1
        %s462 = smul.addr %s461, 8
        %s463 = smul.addr %s462, 2
        %s464 = scalar_lea.vmem %s0, %s463
      $region76: #{attention_autoencoder_upsampling_block.3} parent=71 // pred_fallthru
        _
      // Predicated region
      $region77: #{attention_autoencoder_upsampling_block.3} parent=71 // pred_check
        %p465 = pneg %p70
      $region78: #{attention_autoencoder_upsampling_block.3} parent=71 // pred_check_branch
        %467 = sbr.rel (%p465) target = $region80
      $region79: #{attention_autoencoder_upsampling_block.3} parent=71 // pred_region
        %p468 = scmp.lt.s32.totalorder %s24, 1
        %s469 = scalar_select %p468, %s24, 1
        %s470 = smul.addr %s469, 8
        %s471 = smul.addr %s470, 2
        %s472 = scalar_lea.vmem %s1, %s471
      $region80: #{attention_autoencoder_upsampling_block.3} parent=71 // pred_fallthru
        _
    $region72: #{attention_autoencoder_upsampling_block.3} parent=5 // pred_fallthru
      _
    %p473 = scmp.le.s32.totalorder 1, %s24
    %p474 = scmp.lt.s32.totalorder %s24, 3
    %p475 = pnand %p473, %p474
    %p476 = pneg %p475
    // Predicated region
    $region81: #{attention_autoencoder_upsampling_block.3} parent=5 // pred_check
      _
    $region82: #{attention_autoencoder_upsampling_block.3} parent=5 // pred_check_branch
      %478 = sbr.rel (%p475) target = $region84
    $region83: #{attention_autoencoder_upsampling_block.3} parent=5 // pred_region
      %s479 = ssub.s32 %s24, 1
      %p480 = scmp.lt.s32.totalorder %s29, 1
      %s481 = scalar_select %p480, %s29, 1
      %s482 = smul.addr %s481, 8
      %s483 = smul.addr %s482, 2
      %s484 = scalar_lea.vmem %s0, %s483
      %p485 = pneg %p50
      %p486 = pneg %p47
      %p487 = scmp.lt.s32.totalorder %s29, 1
      %s488 = scalar_select %p487, %s29, 1
      %s489 = smul.addr %s488, 8
      %s490 = smul.addr %s489, 2
      %s491 = scalar_lea.vmem %s1, %s490
      %p492 = pneg %p76
      %p493 = pneg %p73
      %p494 = pneg %p97
      %p495 = pneg %p94
      %p496 = pneg %p118
      %p497 = pneg %p115
      %p498 = pneg %p139
      %p499 = pneg %p136
      %p500 = pneg %p160
      %p501 = pneg %p157
      %p502 = pneg %p181
      %p503 = pneg %p178
      %p504 = pneg %p202
      %p505 = pneg %p199
      %p506 = pneg %p223
      %p507 = pneg %p220
      %p508 = pneg %p244
      %p509 = pneg %p241
      %p510 = pneg %p265
      %p511 = pneg %p262
      %p512 = pneg %p286
      %p513 = pneg %p283
      %p514 = pneg %p307
      %p515 = pneg %p304
      %p516 = pneg %p328
      %p517 = pneg %p325
      %p518 = pneg %p349
      %p519 = pneg %p346
      %p520 = pneg %p370
      %p521 = pneg %p367
      %p522 = pneg %p396
      %p523 = pneg %p393
      %p524 = scmp.lt.s32.totalorder %s29, 1
      %s525 = scalar_select %p524, %s29, 1
      %s526 = smul.addr %s525, 8
      %s527 = smul.addr %s526, 8
      %s528 = scalar_lea.vmem %s16, %s527
      %p529 = scmp.lt.s32.totalorder %s29, 1
      %s530 = scalar_select %p529, %s29, 1
      %s531 = smul.addr %s530, 8
      %s532 = smul.addr %s531, 2
      %s533 = scalar_lea.vmem %s0, %s532
      %p534 = scmp.lt.s32.totalorder %s29, 1
      %s535 = scalar_select %p534, %s29, 1
      %s536 = smul.addr %s535, 8
      %s537 = smul.addr %s536, 2
      %s538 = scalar_lea.vmem %s1, %s537
      %p539 = scmp.lt.s32.totalorder %s29, 1
      %s540 = scalar_select %p539, %s29, 1
      %s541 = smul.addr %s540, 8
      %s542 = smul.addr %s541, 8
      %s543 = scalar_lea.vmem %s16, %s542
      %v547 = vld [vmem:[%s533] sm:$0xff]
      %v548 = vld [vmem:[%s533 + $0x8] sm:$0xff]
      %v549 = vld [vmem:[%s538] sm:$0xff]
      %v550 = vld [vmem:[%s538 + $0x8] sm:$0xff]
      %v551 = vld [vmem:[%s2] sm:$0x3]
      %v552 = vld [vmem:[%s3] sm:$0x3]
      %554 = vst [vmem:[#allocation1] ss:$4 sm:$0xff] %v549
      %s556 = scalar_lea.vmem [#allocation1], 32
      %557 = vst [vmem:[%s556] ss:$4 sm:$0xff] %v550
      %v558 = vld.sshfl [vmem:[#allocation1] sm:$0xff pattern:$0x73625140]
      %v559 = vld.sshfl [vmem:[#allocation1 + $0x8] sm:$0xff pattern:$0x73625140]
      %v560 = vld.sshfl [vmem:[#allocation1 + $0x10] sm:$0xff pattern:$0x73625140]
      %v561 = vld.sshfl [vmem:[#allocation1 + $0x18] sm:$0xff pattern:$0x73625140]
      %v562 = vld.sshfl [vmem:[#allocation1 + $0x20] sm:$0xff pattern:$0x73625140]
      %v563 = vld.sshfl [vmem:[#allocation1 + $0x28] sm:$0xff pattern:$0x73625140]
      %v564 = vld.sshfl [vmem:[#allocation1 + $0x30] sm:$0xff pattern:$0x73625140]
      %v565 = vld.sshfl [vmem:[#allocation1 + $0x38] sm:$0xff pattern:$0x73625140]
      %vm566 = vcmask 31744
      %v568 = vsel %vm566, %v552, 0
      %vm570 = vcmask 1041408
      %v571 = vsel %vm570, %v558, 0
      %v573 = vsel %vm570, %v559, 0
      %v575 = vsel %vm570, %v560, 0
      %v577 = vsel %vm570, %v561, 0
      %v579 = vsel %vm570, %v562, 0
      %v581 = vsel %vm570, %v563, 0
      %v583 = vsel %vm570, %v564, 0
      %v585 = vsel %vm570, %v565, 0
      %587 = vmatpush.bf16.msra.mxu0 0
      %588 = vmatpush.bf16.msra.mxu0 0
      %589 = vmatpush.bf16.msra.mxu0 0
      %590 = vmatpush.bf16.msra.mxu0 0
      %591 = vmatpush.bf16.msra.mxu0 0
      %592 = vmatpush.bf16.msra.mxu0 0
      %593 = vmatpush.bf16.msra.mxu0 0
      %594 = vmatpush.bf16.msra.mxu0 %v571
      %595 = vmatmul.bf16.gmra.mxu0 %v568
      %v596 = vpop.f32.mrf.mxu0
      %v597 = vadd.f32 0.0, %v596
      %v598 = vpop.f32.mrf.mxu0
      %599 = vdwg.mxu0
      %600 = vmatpush.bf16.msra.mxu0 0
      %601 = vmatpush.bf16.msra.mxu0 0
      %602 = vmatpush.bf16.msra.mxu0 0
      %603 = vmatpush.bf16.msra.mxu0 0
      %604 = vmatpush.bf16.msra.mxu0 0
      %605 = vmatpush.bf16.msra.mxu0 0
      %606 = vmatpush.bf16.msra.mxu0 0
      %607 = vmatpush.bf16.msra.mxu0 %v573
      %608 = vmatmul.bf16.gmra.mxu0 %v568
      %v609 = vpop.f32.mrf.mxu0
      %v610 = vadd.f32 0.0, %v609
      %v611 = vpop.f32.mrf.mxu0
      %612 = vdwg.mxu0
      %613 = vmatpush.bf16.msra.mxu0 0
      %614 = vmatpush.bf16.msra.mxu0 0
      %615 = vmatpush.bf16.msra.mxu0 0
      %616 = vmatpush.bf16.msra.mxu0 0
      %617 = vmatpush.bf16.msra.mxu0 0
      %618 = vmatpush.bf16.msra.mxu0 0
      %619 = vmatpush.bf16.msra.mxu0 0
      %620 = vmatpush.bf16.msra.mxu0 %v575
      %621 = vmatmul.bf16.gmra.mxu0 %v568
      %v622 = vpop.f32.mrf.mxu0
      %v623 = vadd.f32 0.0, %v622
      %v624 = vpop.f32.mrf.mxu0
      %625 = vdwg.mxu0
      %626 = vmatpush.bf16.msra.mxu0 0
      %627 = vmatpush.bf16.msra.mxu0 0
      %628 = vmatpush.bf16.msra.mxu0 0
      %629 = vmatpush.bf16.msra.mxu0 0
      %630 = vmatpush.bf16.msra.mxu0 0
      %631 = vmatpush.bf16.msra.mxu0 0
      %632 = vmatpush.bf16.msra.mxu0 0
      %633 = vmatpush.bf16.msra.mxu0 %v577
      %634 = vmatmul.bf16.gmra.mxu0 %v568
      %v635 = vpop.f32.mrf.mxu0
      %v636 = vadd.f32 0.0, %v635
      %v637 = vpop.f32.mrf.mxu0
      %638 = vdwg.mxu0
      %639 = vmatpush.bf16.msra.mxu0 0
      %640 = vmatpush.bf16.msra.mxu0 0
      %641 = vmatpush.bf16.msra.mxu0 0
      %642 = vmatpush.bf16.msra.mxu0 0
      %643 = vmatpush.bf16.msra.mxu0 0
      %644 = vmatpush.bf16.msra.mxu0 0
      %645 = vmatpush.bf16.msra.mxu0 0
      %646 = vmatpush.bf16.msra.mxu0 %v579
      %647 = vmatmul.bf16.gmra.mxu0 %v568
      %v648 = vpop.f32.mrf.mxu0
      %v649 = vadd.f32 0.0, %v648
      %v650 = vpop.f32.mrf.mxu0
      %651 = vdwg.mxu0
      %652 = vmatpush.bf16.msra.mxu0 0
      %653 = vmatpush.bf16.msra.mxu0 0
      %654 = vmatpush.bf16.msra.mxu0 0
      %655 = vmatpush.bf16.msra.mxu0 0
      %656 = vmatpush.bf16.msra.mxu0 0
      %657 = vmatpush.bf16.msra.mxu0 0
      %658 = vmatpush.bf16.msra.mxu0 0
      %659 = vmatpush.bf16.msra.mxu0 %v581
      %660 = vmatmul.bf16.gmra.mxu0 %v568
      %v661 = vpop.f32.mrf.mxu0
      %v662 = vadd.f32 0.0, %v661
      %v663 = vpop.f32.mrf.mxu0
      %664 = vdwg.mxu0
      %665 = vmatpush.bf16.msra.mxu0 0
      %666 = vmatpush.bf16.msra.mxu0 0
      %667 = vmatpush.bf16.msra.mxu0 0
      %668 = vmatpush.bf16.msra.mxu0 0
      %669 = vmatpush.bf16.msra.mxu0 0
      %670 = vmatpush.bf16.msra.mxu0 0
      %671 = vmatpush.bf16.msra.mxu0 0
      %672 = vmatpush.bf16.msra.mxu0 %v583
      %673 = vmatmul.bf16.gmra.mxu0 %v568
      %v674 = vpop.f32.mrf.mxu0
      %v675 = vadd.f32 0.0, %v674
      %v676 = vpop.f32.mrf.mxu0
      %677 = vdwg.mxu0
      %678 = vmatpush.bf16.msra.mxu0 0
      %679 = vmatpush.bf16.msra.mxu0 0
      %680 = vmatpush.bf16.msra.mxu0 0
      %681 = vmatpush.bf16.msra.mxu0 0
      %682 = vmatpush.bf16.msra.mxu0 0
      %683 = vmatpush.bf16.msra.mxu0 0
      %684 = vmatpush.bf16.msra.mxu0 0
      %685 = vmatpush.bf16.msra.mxu0 %v585
      %686 = vmatmul.bf16.gmra.mxu0 %v568
      %v687 = vpop.f32.mrf.mxu0
      %v688 = vadd.f32 0.0, %v687
      %v689 = vpop.f32.mrf.mxu0
      %690 = vdwg.mxu0
      %692 = vst [vmem:[#allocation1] ss:$4 sm:$0xff] %v547
      %s694 = scalar_lea.vmem [#allocation1], 32
      %695 = vst [vmem:[%s694] ss:$4 sm:$0xff] %v548
      %v696 = vld.sshfl [vmem:[#allocation1] sm:$0xff pattern:$0x73625140]
      %v697 = vld.sshfl [vmem:[#allocation1 + $0x8] sm:$0xff pattern:$0x73625140]
      %v698 = vld.sshfl [vmem:[#allocation1 + $0x10] sm:$0xff pattern:$0x73625140]
      %v699 = vld.sshfl [vmem:[#allocation1 + $0x18] sm:$0xff pattern:$0x73625140]
      %v700 = vld.sshfl [vmem:[#allocation1 + $0x20] sm:$0xff pattern:$0x73625140]
      %v701 = vld.sshfl [vmem:[#allocation1 + $0x28] sm:$0xff pattern:$0x73625140]
      %v702 = vld.sshfl [vmem:[#allocation1 + $0x30] sm:$0xff pattern:$0x73625140]
      %v703 = vld.sshfl [vmem:[#allocation1 + $0x38] sm:$0xff pattern:$0x73625140]
      %v705 = vsel %vm566, %v551, 0
      %v707 = vsel %vm570, %v696, 0
      %v709 = vsel %vm570, %v697, 0
      %v711 = vsel %vm570, %v698, 0
      %v713 = vsel %vm570, %v699, 0
      %v715 = vsel %vm570, %v700, 0
      %v717 = vsel %vm570, %v701, 0
      %v719 = vsel %vm570, %v702, 0
      %v721 = vsel %vm570, %v703, 0
      %723 = vmatpush.bf16.msra.mxu0 0
      %724 = vmatpush.bf16.msra.mxu0 0
      %725 = vmatpush.bf16.msra.mxu0 0
      %726 = vmatpush.bf16.msra.mxu0 0
      %727 = vmatpush.bf16.msra.mxu0 0
      %728 = vmatpush.bf16.msra.mxu0 0
      %729 = vmatpush.bf16.msra.mxu0 0
      %730 = vmatpush.bf16.msra.mxu0 %v707
      %731 = vmatmul.bf16.gmra.mxu0 %v705
      %v732 = vpop.f32.mrf.mxu0
      %v733 = vadd.f32 %v597, %v732
      %v734 = vpop.f32.mrf.mxu0
      %735 = vdwg.mxu0
      %736 = vmatpush.bf16.msra.mxu0 0
      %737 = vmatpush.bf16.msra.mxu0 0
      %738 = vmatpush.bf16.msra.mxu0 0
      %739 = vmatpush.bf16.msra.mxu0 0
      %740 = vmatpush.bf16.msra.mxu0 0
      %741 = vmatpush.bf16.msra.mxu0 0
      %742 = vmatpush.bf16.msra.mxu0 0
      %743 = vmatpush.bf16.msra.mxu0 %v709
      %744 = vmatmul.bf16.gmra.mxu0 %v705
      %v745 = vpop.f32.mrf.mxu0
      %v746 = vadd.f32 %v610, %v745
      %v747 = vpop.f32.mrf.mxu0
      %748 = vdwg.mxu0
      %749 = vmatpush.bf16.msra.mxu0 0
      %750 = vmatpush.bf16.msra.mxu0 0
      %751 = vmatpush.bf16.msra.mxu0 0
      %752 = vmatpush.bf16.msra.mxu0 0
      %753 = vmatpush.bf16.msra.mxu0 0
      %754 = vmatpush.bf16.msra.mxu0 0
      %755 = vmatpush.bf16.msra.mxu0 0
      %756 = vmatpush.bf16.msra.mxu0 %v711
      %757 = vmatmul.bf16.gmra.mxu0 %v705
      %v758 = vpop.f32.mrf.mxu0
      %v759 = vadd.f32 %v623, %v758
      %v760 = vpop.f32.mrf.mxu0
      %761 = vdwg.mxu0
      %762 = vmatpush.bf16.msra.mxu0 0
      %763 = vmatpush.bf16.msra.mxu0 0
      %764 = vmatpush.bf16.msra.mxu0 0
      %765 = vmatpush.bf16.msra.mxu0 0
      %766 = vmatpush.bf16.msra.mxu0 0
      %767 = vmatpush.bf16.msra.mxu0 0
      %768 = vmatpush.bf16.msra.mxu0 0
      %769 = vmatpush.bf16.msra.mxu0 %v713
      %770 = vmatmul.bf16.gmra.mxu0 %v705
      %v771 = vpop.f32.mrf.mxu0
      %v772 = vadd.f32 %v636, %v771
      %v773 = vpop.f32.mrf.mxu0
      %774 = vdwg.mxu0
      %775 = vmatpush.bf16.msra.mxu0 0
      %776 = vmatpush.bf16.msra.mxu0 0
      %777 = vmatpush.bf16.msra.mxu0 0
      %778 = vmatpush.bf16.msra.mxu0 0
      %779 = vmatpush.bf16.msra.mxu0 0
      %780 = vmatpush.bf16.msra.mxu0 0
      %781 = vmatpush.bf16.msra.mxu0 0
      %782 = vmatpush.bf16.msra.mxu0 %v715
      %783 = vmatmul.bf16.gmra.mxu0 %v705
      %v784 = vpop.f32.mrf.mxu0
      %v785 = vadd.f32 %v649, %v784
      %v786 = vpop.f32.mrf.mxu0
      %787 = vdwg.mxu0
      %788 = vmatpush.bf16.msra.mxu0 0
      %789 = vmatpush.bf16.msra.mxu0 0
      %790 = vmatpush.bf16.msra.mxu0 0
      %791 = vmatpush.bf16.msra.mxu0 0
      %792 = vmatpush.bf16.msra.mxu0 0
      %793 = vmatpush.bf16.msra.mxu0 0
      %794 = vmatpush.bf16.msra.mxu0 0
      %795 = vmatpush.bf16.msra.mxu0 %v717
      %796 = vmatmul.bf16.gmra.mxu0 %v705
      %v797 = vpop.f32.mrf.mxu0
      %v798 = vadd.f32 %v662, %v797
      %v799 = vpop.f32.mrf.mxu0
      %800 = vdwg.mxu0
      %801 = vmatpush.bf16.msra.mxu0 0
      %802 = vmatpush.bf16.msra.mxu0 0
      %803 = vmatpush.bf16.msra.mxu0 0
      %804 = vmatpush.bf16.msra.mxu0 0
      %805 = vmatpush.bf16.msra.mxu0 0
      %806 = vmatpush.bf16.msra.mxu0 0
      %807 = vmatpush.bf16.msra.mxu0 0
      %808 = vmatpush.bf16.msra.mxu0 %v719
      %809 = vmatmul.bf16.gmra.mxu0 %v705
      %v810 = vpop.f32.mrf.mxu0
      %v811 = vadd.f32 %v675, %v810
      %v812 = vpop.f32.mrf.mxu0
      %813 = vdwg.mxu0
      %814 = vmatpush.bf16.msra.mxu0 0
      %815 = vmatpush.bf16.msra.mxu0 0
      %816 = vmatpush.bf16.msra.mxu0 0
      %817 = vmatpush.bf16.msra.mxu0 0
      %818 = vmatpush.bf16.msra.mxu0 0
      %819 = vmatpush.bf16.msra.mxu0 0
      %820 = vmatpush.bf16.msra.mxu0 0
      %821 = vmatpush.bf16.msra.mxu0 %v721
      %822 = vmatmul.bf16.gmra.mxu0 %v705
      %v823 = vpop.f32.mrf.mxu0
      %v824 = vadd.f32 %v688, %v823
      %v825 = vpop.f32.mrf.mxu0
      %826 = vdwg.mxu0
      %v827 = vld [vmem:[%s4] sm:$0xf]
      %829 = vset.pattern.permute.xlu0 0
      %830 = vperm.xlu0 %829, %v827
      %v831 = vpop.permute.xlu0 %830
      %v833 = vadd.f32 %v733, %v831
      %v834 = vadd.f32 %v746, %v831
      %v835 = vadd.f32 %v759, %v831
      %v836 = vadd.f32 %v772, %v831
      %v837 = vadd.f32 %v785, %v831
      %v838 = vadd.f32 %v798, %v831
      %v839 = vadd.f32 %v811, %v831
      %v840 = vadd.f32 %v824, %v831
      %v841 = vmax.f32 %v833, 0.0
      %v842 = vmax.f32 %v834, 0.0
      %v843 = vmax.f32 %v835, 0.0
      %v844 = vmax.f32 %v836, 0.0
      %v845 = vmax.f32 %v837, 0.0
      %v846 = vmax.f32 %v838, 0.0
      %v847 = vmax.f32 %v839, 0.0
      %v848 = vmax.f32 %v840, 0.0
      %v849 = vld [vmem:[%s5] sm:$0xf]
      %851 = vset.pattern.permute.xlu0 0
      %852 = vperm.xlu0 %851, %v849
      %v853 = vpop.permute.xlu0 %852
      %v855 = vmul.f32 %v841, %v853
      %v856 = vmul.f32 %v842, %v853
      %v857 = vmul.f32 %v843, %v853
      %v858 = vmul.f32 %v844, %v853
      %v859 = vmul.f32 %v845, %v853
      %v860 = vmul.f32 %v846, %v853
      %v861 = vmul.f32 %v847, %v853
      %v862 = vmul.f32 %v848, %v853
      %vm863 = vcmask 1043456
      %v864 = vsel %vm863, %v855, 0.0
      %v865 = vrot.slane %v864, 4
      %v866 = vadd.f32 %v864, %v865
      %v867 = vrot.slane %v866, 2
      %v868 = vadd.f32 %v866, %v867
      %v869 = vrot.slane %v868, 1
      %v870 = vadd.f32 %v868, %v869
      %v871 = vsel %vm863, %v856, 0.0
      %v872 = vrot.slane %v871, 4
      %v873 = vadd.f32 %v871, %v872
      %v874 = vrot.slane %v873, 2
      %v875 = vadd.f32 %v873, %v874
      %v876 = vrot.slane %v875, 1
      %v877 = vadd.f32 %v875, %v876
      %v878 = vsel %vm863, %v857, 0.0
      %v879 = vrot.slane %v878, 4
      %v880 = vadd.f32 %v878, %v879
      %v881 = vrot.slane %v880, 2
      %v882 = vadd.f32 %v880, %v881
      %v883 = vrot.slane %v882, 1
      %v884 = vadd.f32 %v882, %v883
      %v885 = vsel %vm863, %v858, 0.0
      %v886 = vrot.slane %v885, 4
      %v887 = vadd.f32 %v885, %v886
      %v888 = vrot.slane %v887, 2
      %v889 = vadd.f32 %v887, %v888
      %v890 = vrot.slane %v889, 1
      %v891 = vadd.f32 %v889, %v890
      %v892 = vsel %vm863, %v859, 0.0
      %v893 = vrot.slane %v892, 4
      %v894 = vadd.f32 %v892, %v893
      %v895 = vrot.slane %v894, 2
      %v896 = vadd.f32 %v894, %v895
      %v897 = vrot.slane %v896, 1
      %v898 = vadd.f32 %v896, %v897
      %v899 = vsel %vm863, %v860, 0.0
      %v900 = vrot.slane %v899, 4
      %v901 = vadd.f32 %v899, %v900
      %v902 = vrot.slane %v901, 2
      %v903 = vadd.f32 %v901, %v902
      %v904 = vrot.slane %v903, 1
      %v905 = vadd.f32 %v903, %v904
      %v906 = vsel %vm863, %v861, 0.0
      %v907 = vrot.slane %v906, 4
      %v908 = vadd.f32 %v906, %v907
      %v909 = vrot.slane %v908, 2
      %v910 = vadd.f32 %v908, %v909
      %v911 = vrot.slane %v910, 1
      %v912 = vadd.f32 %v910, %v911
      %v913 = vsel %vm863, %v862, 0.0
      %v914 = vrot.slane %v913, 4
      %v915 = vadd.f32 %v913, %v914
      %v916 = vrot.slane %v915, 2
      %v917 = vadd.f32 %v915, %v916
      %v918 = vrot.slane %v917, 1
      %v919 = vadd.f32 %v917, %v918
      %v920 = vld [vmem:[#allocation2] sm:$0x1]
      %922 = vset.pattern.permute.xlu0 0
      %923 = vperm.xlu0 %922, %v920
      %v924 = vpop.permute.xlu0 %923
      %v926 = vperm.slane %v924, 0
      %v927 = vadd.f32 %v870, %v926
      %v928 = vadd.f32 %v877, %v926
      %v929 = vadd.f32 %v884, %v926
      %v930 = vadd.f32 %v891, %v926
      %v931 = vadd.f32 %v898, %v926
      %v932 = vadd.f32 %v905, %v926
      %v933 = vadd.f32 %v912, %v926
      %v934 = vadd.f32 %v919, %v926
      %v935 = vxor.u32 %v927, 2147483648
      %v936 = vxor.u32 %v928, 2147483648
      %v937 = vxor.u32 %v929, 2147483648
      %v938 = vxor.u32 %v930, 2147483648
      %v939 = vxor.u32 %v931, 2147483648
      %v940 = vxor.u32 %v932, 2147483648
      %v941 = vxor.u32 %v933, 2147483648
      %v942 = vxor.u32 %v934, 2147483648
      %v943 = vmul.f32 %v935, 1.442695
      %v944 = vpow.pop %v943
      %v945 = vmul.f32 %v936, 1.442695
      %v946 = vpow.pop %v945
      %v947 = vmul.f32 %v937, 1.442695
      %v948 = vpow.pop %v947
      %v949 = vmul.f32 %v938, 1.442695
      %v950 = vpow.pop %v949
      %v951 = vmul.f32 %v939, 1.442695
      %v952 = vpow.pop %v951
      %v953 = vmul.f32 %v940, 1.442695
      %v954 = vpow.pop %v953
      %v955 = vmul.f32 %v941, 1.442695
      %v956 = vpow.pop %v955
      %v957 = vmul.f32 %v942, 1.442695
      %v958 = vpow.pop %v957
      %v959 = vadd.f32 %v944, 1.0
      %v960 = vadd.f32 %v946, 1.0
      %v961 = vadd.f32 %v948, 1.0
      %v962 = vadd.f32 %v950, 1.0
      %v963 = vadd.f32 %v952, 1.0
      %v964 = vadd.f32 %v954, 1.0
      %v965 = vadd.f32 %v956, 1.0
      %v966 = vadd.f32 %v958, 1.0
      %v967 = vrcp.pop %v959
      %v968 = vmul.f32 %v959, %v967
      %v969 = vsub.f32 1.0, %v968
      %v970 = vmul.f32 %v967, %v969
      %v971 = vadd.f32 %v967, %v970
      %vm972 = vweird.f32 %v959
      %vm973 = vweird.f32 %v967
      %vm974 = vmor %vm972, %vm973
      %v975 = vsel %vm974, %v967, %v971
      %v976 = vand.u32 2147483647, %v959
      %vm977 = vcmp.eq.f32.partialorder %v976, 8.507059e+37
      %v978 = vand.u32 %v959, 2147483648
      %v979 = vor.u32 1.1754944e-38, %v978
      %v980 = vsel %vm977, %v979, %v975
      %v981 = vmul.f32 1.0, %v980
      %v982 = vrcp.pop %v960
      %v983 = vmul.f32 %v960, %v982
      %v984 = vsub.f32 1.0, %v983
      %v985 = vmul.f32 %v982, %v984
      %v986 = vadd.f32 %v982, %v985
      %vm987 = vweird.f32 %v960
      %vm988 = vweird.f32 %v982
      %vm989 = vmor %vm987, %vm988
      %v990 = vsel %vm989, %v982, %v986
      %v991 = vand.u32 2147483647, %v960
      %vm992 = vcmp.eq.f32.partialorder %v991, 8.507059e+37
      %v993 = vand.u32 %v960, 2147483648
      %v994 = vor.u32 1.1754944e-38, %v993
      %v995 = vsel %vm992, %v994, %v990
      %v996 = vmul.f32 1.0, %v995
      %v997 = vrcp.pop %v961
      %v998 = vmul.f32 %v961, %v997
      %v999 = vsub.f32 1.0, %v998
      %v1000 = vmul.f32 %v997, %v999
      %v1001 = vadd.f32 %v997, %v1000
      %vm1002 = vweird.f32 %v961
      %vm1003 = vweird.f32 %v997
      %vm1004 = vmor %vm1002, %vm1003
      %v1005 = vsel %vm1004, %v997, %v1001
      %v1006 = vand.u32 2147483647, %v961
      %vm1007 = vcmp.eq.f32.partialorder %v1006, 8.507059e+37
      %v1008 = vand.u32 %v961, 2147483648
      %v1009 = vor.u32 1.1754944e-38, %v1008
      %v1010 = vsel %vm1007, %v1009, %v1005
      %v1011 = vmul.f32 1.0, %v1010
      %v1012 = vrcp.pop %v962
      %v1013 = vmul.f32 %v962, %v1012
      %v1014 = vsub.f32 1.0, %v1013
      %v1015 = vmul.f32 %v1012, %v1014
      %v1016 = vadd.f32 %v1012, %v1015
      %vm1017 = vweird.f32 %v962
      %vm1018 = vweird.f32 %v1012
      %vm1019 = vmor %vm1017, %vm1018
      %v1020 = vsel %vm1019, %v1012, %v1016
      %v1021 = vand.u32 2147483647, %v962
      %vm1022 = vcmp.eq.f32.partialorder %v1021, 8.507059e+37
      %v1023 = vand.u32 %v962, 2147483648
      %v1024 = vor.u32 1.1754944e-38, %v1023
      %v1025 = vsel %vm1022, %v1024, %v1020
      %v1026 = vmul.f32 1.0, %v1025
      %v1027 = vrcp.pop %v963
      %v1028 = vmul.f32 %v963, %v1027
      %v1029 = vsub.f32 1.0, %v1028
      %v1030 = vmul.f32 %v1027, %v1029
      %v1031 = vadd.f32 %v1027, %v1030
      %vm1032 = vweird.f32 %v963
      %vm1033 = vweird.f32 %v1027
      %vm1034 = vmor %vm1032, %vm1033
      %v1035 = vsel %vm1034, %v1027, %v1031
      %v1036 = vand.u32 2147483647, %v963
      %vm1037 = vcmp.eq.f32.partialorder %v1036, 8.507059e+37
      %v1038 = vand.u32 %v963, 2147483648
      %v1039 = vor.u32 1.1754944e-38, %v1038
      %v1040 = vsel %vm1037, %v1039, %v1035
      %v1041 = vmul.f32 1.0, %v1040
      %v1042 = vrcp.pop %v964
      %v1043 = vmul.f32 %v964, %v1042
      %v1044 = vsub.f32 1.0, %v1043
      %v1045 = vmul.f32 %v1042, %v1044
      %v1046 = vadd.f32 %v1042, %v1045
      %vm1047 = vweird.f32 %v964
      %vm1048 = vweird.f32 %v1042
      %vm1049 = vmor %vm1047, %vm1048
      %v1050 = vsel %vm1049, %v1042, %v1046
      %v1051 = vand.u32 2147483647, %v964
      %vm1052 = vcmp.eq.f32.partialorder %v1051, 8.507059e+37
      %v1053 = vand.u32 %v964, 2147483648
      %v1054 = vor.u32 1.1754944e-38, %v1053
      %v1055 = vsel %vm1052, %v1054, %v1050
      %v1056 = vmul.f32 1.0, %v1055
      %v1057 = vrcp.pop %v965
      %v1058 = vmul.f32 %v965, %v1057
      %v1059 = vsub.f32 1.0, %v1058
      %v1060 = vmul.f32 %v1057, %v1059
      %v1061 = vadd.f32 %v1057, %v1060
      %vm1062 = vweird.f32 %v965
      %vm1063 = vweird.f32 %v1057
      %vm1064 = vmor %vm1062, %vm1063
      %v1065 = vsel %vm1064, %v1057, %v1061
      %v1066 = vand.u32 2147483647, %v965
      %vm1067 = vcmp.eq.f32.partialorder %v1066, 8.507059e+37
      %v1068 = vand.u32 %v965, 2147483648
      %v1069 = vor.u32 1.1754944e-38, %v1068
      %v1070 = vsel %vm1067, %v1069, %v1065
      %v1071 = vmul.f32 1.0, %v1070
      %v1072 = vrcp.pop %v966
      %v1073 = vmul.f32 %v966, %v1072
      %v1074 = vsub.f32 1.0, %v1073
      %v1075 = vmul.f32 %v1072, %v1074
      %v1076 = vadd.f32 %v1072, %v1075
      %vm1077 = vweird.f32 %v966
      %vm1078 = vweird.f32 %v1072
      %vm1079 = vmor %vm1077, %vm1078
      %v1080 = vsel %vm1079, %v1072, %v1076
      %v1081 = vand.u32 2147483647, %v966
      %vm1082 = vcmp.eq.f32.partialorder %v1081, 8.507059e+37
      %v1083 = vand.u32 %v966, 2147483648
      %v1084 = vor.u32 1.1754944e-38, %v1083
      %v1085 = vsel %vm1082, %v1084, %v1080
      %v1086 = vmul.f32 1.0, %v1085
      %v1087 = vunpack.c.l.bf16 %v547
      %v1088 = vunpack.c.h.bf16 %v547
      %v1089 = vunpack.c.l.bf16 %v548
      %v1090 = vunpack.c.h.bf16 %v548
      %v1099 = vrot.slane %v996, 4
      %v1100 = vrot.slane %v1026, 4
      %v1101 = vrot.slane %v1056, 4
      %v1102 = vrot.slane %v1086, 4
      %v1103 = vsel %vm863, %v981, %v1099
      %v1104 = vsel %vm863, %v1011, %v1100
      %v1105 = vsel %vm863, %v1041, %v1101
      %v1106 = vsel %vm863, %v1071, %v1102
      %v1111 = vmul.f32 %v1087, %v1103
      %v1112 = vmul.f32 %v1088, %v1104
      %v1113 = vmul.f32 %v1089, %v1105
      %v1114 = vmul.f32 %v1090, %v1106
      %1119 = vst [vmem:[#allocation1] ss:$2 sm:$0xff] %v1111
      %s1120 = scalar_lea.vmem [#allocation1], 16
      %1121 = vst [vmem:[%s1120] ss:$2 sm:$0xff] %v1112
      %s1122 = scalar_lea.vmem [#allocation1], 32
      %1123 = vst [vmem:[%s1122] ss:$2 sm:$0xff] %v1113
      %s1124 = scalar_lea.vmem [#allocation1], 48
      %1125 = vst [vmem:[%s1124] ss:$2 sm:$0xff] %v1114
      %v1126 = vld.sshfl [vmem:[#allocation1] sm:$0xff pattern:$0x75316420]
      %v1127 = vld.sshfl [vmem:[#allocation1 + $0x8] sm:$0xff pattern:$0x75316420]
      %v1128 = vld.sshfl [vmem:[#allocation1 + $0x10] sm:$0xff pattern:$0x75316420]
      %v1129 = vld.sshfl [vmem:[#allocation1 + $0x18] sm:$0xff pattern:$0x75316420]
      %v1130 = vld.sshfl [vmem:[#allocation1 + $0x20] sm:$0xff pattern:$0x75316420]
      %v1131 = vld.sshfl [vmem:[#allocation1 + $0x28] sm:$0xff pattern:$0x75316420]
      %v1132 = vld.sshfl [vmem:[#allocation1 + $0x30] sm:$0xff pattern:$0x75316420]
      %v1133 = vld.sshfl [vmem:[#allocation1 + $0x38] sm:$0xff pattern:$0x75316420]
      %v1142 = vpack.c.bf16 %v1126, %v1126
      %v1143 = vpack.c.bf16 %v1127, %v1127
      %v1144 = vpack.c.bf16 %v1128, %v1128
      %v1145 = vpack.c.bf16 %v1129, %v1129
      %v1146 = vpack.c.bf16 %v1130, %v1130
      %v1147 = vpack.c.bf16 %v1131, %v1131
      %v1148 = vpack.c.bf16 %v1132, %v1132
      %v1149 = vpack.c.bf16 %v1133, %v1133
      %v1150 = vld [vmem:[%s7] sm:$0xf]
      %v1151 = vld [vmem:[%s8] sm:$0xf]
      %1152 = vst [vmem:[#allocation1] ss:$4 sm:$0xff] %v549
      %s1153 = scalar_lea.vmem [#allocation1], 32
      %1154 = vst [vmem:[%s1153] ss:$4 sm:$0xff] %v550
      %v1155 = vld.sshfl [vmem:[#allocation1] sm:$0xff pattern:$0x73625140]
      %v1156 = vld.sshfl [vmem:[#allocation1 + $0x8] sm:$0xff pattern:$0x73625140]
      %v1157 = vld.sshfl [vmem:[#allocation1 + $0x10] sm:$0xff pattern:$0x73625140]
      %v1158 = vld.sshfl [vmem:[#allocation1 + $0x18] sm:$0xff pattern:$0x73625140]
      %v1159 = vld.sshfl [vmem:[#allocation1 + $0x20] sm:$0xff pattern:$0x73625140]
      %v1160 = vld.sshfl [vmem:[#allocation1 + $0x28] sm:$0xff pattern:$0x73625140]
      %v1161 = vld.sshfl [vmem:[#allocation1 + $0x30] sm:$0xff pattern:$0x73625140]
      %v1162 = vld.sshfl [vmem:[#allocation1 + $0x38] sm:$0xff pattern:$0x73625140]
      %v1164 = vsel %vm566, %v1151, 0
      %v1166 = vsel %vm570, %v1155, 0
      %v1168 = vsel %vm570, %v1156, 0
      %v1170 = vsel %vm570, %v1157, 0
      %v1172 = vsel %vm570, %v1158, 0
      %v1174 = vsel %vm570, %v1159, 0
      %v1176 = vsel %vm570, %v1160, 0
      %v1178 = vsel %vm570, %v1161, 0
      %v1180 = vsel %vm570, %v1162, 0
      %1182 = vmatpush.bf16.msra.mxu0 0
      %1183 = vmatpush.bf16.msra.mxu0 0
      %1184 = vmatpush.bf16.msra.mxu0 0
      %1185 = vmatpush.bf16.msra.mxu0 0
      %1186 = vmatpush.bf16.msra.mxu0 0
      %1187 = vmatpush.bf16.msra.mxu0 0
      %1188 = vmatpush.bf16.msra.mxu0 0
      %1189 = vmatpush.bf16.msra.mxu0 %v1166
      %1190 = vmatmul.bf16.gmra.mxu0 %v1164
      %v1191 = vpop.f32.mrf.mxu0
      %v1192 = vadd.f32 0.0, %v1191
      %v1193 = vpop.f32.mrf.mxu0
      %1194 = vdwg.mxu0
      %1195 = vmatpush.bf16.msra.mxu0 0
      %1196 = vmatpush.bf16.msra.mxu0 0
      %1197 = vmatpush.bf16.msra.mxu0 0
      %1198 = vmatpush.bf16.msra.mxu0 0
      %1199 = vmatpush.bf16.msra.mxu0 0
      %1200 = vmatpush.bf16.msra.mxu0 0
      %1201 = vmatpush.bf16.msra.mxu0 0
      %1202 = vmatpush.bf16.msra.mxu0 %v1168
      %1203 = vmatmul.bf16.gmra.mxu0 %v1164
      %v1204 = vpop.f32.mrf.mxu0
      %v1205 = vadd.f32 0.0, %v1204
      %v1206 = vpop.f32.mrf.mxu0
      %1207 = vdwg.mxu0
      %1208 = vmatpush.bf16.msra.mxu0 0
      %1209 = vmatpush.bf16.msra.mxu0 0
      %1210 = vmatpush.bf16.msra.mxu0 0
      %1211 = vmatpush.bf16.msra.mxu0 0
      %1212 = vmatpush.bf16.msra.mxu0 0
      %1213 = vmatpush.bf16.msra.mxu0 0
      %1214 = vmatpush.bf16.msra.mxu0 0
      %1215 = vmatpush.bf16.msra.mxu0 %v1170
      %1216 = vmatmul.bf16.gmra.mxu0 %v1164
      %v1217 = vpop.f32.mrf.mxu0
      %v1218 = vadd.f32 0.0, %v1217
      %v1219 = vpop.f32.mrf.mxu0
      %1220 = vdwg.mxu0
      %1221 = vmatpush.bf16.msra.mxu0 0
      %1222 = vmatpush.bf16.msra.mxu0 0
      %1223 = vmatpush.bf16.msra.mxu0 0
      %1224 = vmatpush.bf16.msra.mxu0 0
      %1225 = vmatpush.bf16.msra.mxu0 0
      %1226 = vmatpush.bf16.msra.mxu0 0
      %1227 = vmatpush.bf16.msra.mxu0 0
      %1228 = vmatpush.bf16.msra.mxu0 %v1172
      %1229 = vmatmul.bf16.gmra.mxu0 %v1164
      %v1230 = vpop.f32.mrf.mxu0
      %v1231 = vadd.f32 0.0, %v1230
      %v1232 = vpop.f32.mrf.mxu0
      %1233 = vdwg.mxu0
      %1234 = vmatpush.bf16.msra.mxu0 0
      %1235 = vmatpush.bf16.msra.mxu0 0
      %1236 = vmatpush.bf16.msra.mxu0 0
      %1237 = vmatpush.bf16.msra.mxu0 0
      %1238 = vmatpush.bf16.msra.mxu0 0
      %1239 = vmatpush.bf16.msra.mxu0 0
      %1240 = vmatpush.bf16.msra.mxu0 0
      %1241 = vmatpush.bf16.msra.mxu0 %v1174
      %1242 = vmatmul.bf16.gmra.mxu0 %v1164
      %v1243 = vpop.f32.mrf.mxu0
      %v1244 = vadd.f32 0.0, %v1243
      %v1245 = vpop.f32.mrf.mxu0
      %1246 = vdwg.mxu0
      %1247 = vmatpush.bf16.msra.mxu0 0
      %1248 = vmatpush.bf16.msra.mxu0 0
      %1249 = vmatpush.bf16.msra.mxu0 0
      %1250 = vmatpush.bf16.msra.mxu0 0
      %1251 = vmatpush.bf16.msra.mxu0 0
      %1252 = vmatpush.bf16.msra.mxu0 0
      %1253 = vmatpush.bf16.msra.mxu0 0
      %1254 = vmatpush.bf16.msra.mxu0 %v1176
      %1255 = vmatmul.bf16.gmra.mxu0 %v1164
      %v1256 = vpop.f32.mrf.mxu0
      %v1257 = vadd.f32 0.0, %v1256
      %v1258 = vpop.f32.mrf.mxu0
      %1259 = vdwg.mxu0
      %1260 = vmatpush.bf16.msra.mxu0 0
      %1261 = vmatpush.bf16.msra.mxu0 0
      %1262 = vmatpush.bf16.msra.mxu0 0
      %1263 = vmatpush.bf16.msra.mxu0 0
      %1264 = vmatpush.bf16.msra.mxu0 0
      %1265 = vmatpush.bf16.msra.mxu0 0
      %1266 = vmatpush.bf16.msra.mxu0 0
      %1267 = vmatpush.bf16.msra.mxu0 %v1178
      %1268 = vmatmul.bf16.gmra.mxu0 %v1164
      %v1269 = vpop.f32.mrf.mxu0
      %v1270 = vadd.f32 0.0, %v1269
      %v1271 = vpop.f32.mrf.mxu0
      %1272 = vdwg.mxu0
      %1273 = vmatpush.bf16.msra.mxu0 0
      %1274 = vmatpush.bf16.msra.mxu0 0
      %1275 = vmatpush.bf16.msra.mxu0 0
      %1276 = vmatpush.bf16.msra.mxu0 0
      %1277 = vmatpush.bf16.msra.mxu0 0
      %1278 = vmatpush.bf16.msra.mxu0 0
      %1279 = vmatpush.bf16.msra.mxu0 0
      %1280 = vmatpush.bf16.msra.mxu0 %v1180
      %1281 = vmatmul.bf16.gmra.mxu0 %v1164
      %v1282 = vpop.f32.mrf.mxu0
      %v1283 = vadd.f32 0.0, %v1282
      %v1284 = vpop.f32.mrf.mxu0
      %1285 = vdwg.mxu0
      %v1287 = vsel %vm566, %v1150, 0
      %v1290 = vsel %vm570, %v1142, 0
      %v1293 = vsel %vm570, %v1143, 0
      %v1296 = vsel %vm570, %v1144, 0
      %v1299 = vsel %vm570, %v1145, 0
      %v1302 = vsel %vm570, %v1146, 0
      %v1305 = vsel %vm570, %v1147, 0
      %v1308 = vsel %vm570, %v1148, 0
      %v1311 = vsel %vm570, %v1149, 0
      %1313 = vmatpush.bf16.msra.mxu0 0
      %1314 = vmatpush.bf16.msra.mxu0 0
      %1315 = vmatpush.bf16.msra.mxu0 0
      %1316 = vmatpush.bf16.msra.mxu0 0
      %1317 = vmatpush.bf16.msra.mxu0 0
      %1318 = vmatpush.bf16.msra.mxu0 0
      %1319 = vmatpush.bf16.msra.mxu0 0
      %1320 = vmatpush.bf16.msra.mxu0 %v1290
      %1321 = vmatmul.bf16.gmra.mxu0 %v1287
      %v1322 = vpop.f32.mrf.mxu0
      %v1323 = vadd.f32 %v1192, %v1322
      %v1324 = vpop.f32.mrf.mxu0
      %1325 = vdwg.mxu0
      %1326 = vmatpush.bf16.msra.mxu0 0
      %1327 = vmatpush.bf16.msra.mxu0 0
      %1328 = vmatpush.bf16.msra.mxu0 0
      %1329 = vmatpush.bf16.msra.mxu0 0
      %1330 = vmatpush.bf16.msra.mxu0 0
      %1331 = vmatpush.bf16.msra.mxu0 0
      %1332 = vmatpush.bf16.msra.mxu0 0
      %1333 = vmatpush.bf16.msra.mxu0 %v1293
      %1334 = vmatmul.bf16.gmra.mxu0 %v1287
      %v1335 = vpop.f32.mrf.mxu0
      %v1336 = vadd.f32 %v1205, %v1335
      %v1337 = vpop.f32.mrf.mxu0
      %1338 = vdwg.mxu0
      %1339 = vmatpush.bf16.msra.mxu0 0
      %1340 = vmatpush.bf16.msra.mxu0 0
      %1341 = vmatpush.bf16.msra.mxu0 0
      %1342 = vmatpush.bf16.msra.mxu0 0
      %1343 = vmatpush.bf16.msra.mxu0 0
      %1344 = vmatpush.bf16.msra.mxu0 0
      %1345 = vmatpush.bf16.msra.mxu0 0
      %1346 = vmatpush.bf16.msra.mxu0 %v1296
      %1347 = vmatmul.bf16.gmra.mxu0 %v1287
      %v1348 = vpop.f32.mrf.mxu0
      %v1349 = vadd.f32 %v1218, %v1348
      %v1350 = vpop.f32.mrf.mxu0
      %1351 = vdwg.mxu0
      %1352 = vmatpush.bf16.msra.mxu0 0
      %1353 = vmatpush.bf16.msra.mxu0 0
      %1354 = vmatpush.bf16.msra.mxu0 0
      %1355 = vmatpush.bf16.msra.mxu0 0
      %1356 = vmatpush.bf16.msra.mxu0 0
      %1357 = vmatpush.bf16.msra.mxu0 0
      %1358 = vmatpush.bf16.msra.mxu0 0
      %1359 = vmatpush.bf16.msra.mxu0 %v1299
      %1360 = vmatmul.bf16.gmra.mxu0 %v1287
      %v1361 = vpop.f32.mrf.mxu0
      %v1362 = vadd.f32 %v1231, %v1361
      %v1363 = vpop.f32.mrf.mxu0
      %1364 = vdwg.mxu0
      %1365 = vmatpush.bf16.msra.mxu0 0
      %1366 = vmatpush.bf16.msra.mxu0 0
      %1367 = vmatpush.bf16.msra.mxu0 0
      %1368 = vmatpush.bf16.msra.mxu0 0
      %1369 = vmatpush.bf16.msra.mxu0 0
      %1370 = vmatpush.bf16.msra.mxu0 0
      %1371 = vmatpush.bf16.msra.mxu0 0
      %1372 = vmatpush.bf16.msra.mxu0 %v1302
      %1373 = vmatmul.bf16.gmra.mxu0 %v1287
      %v1374 = vpop.f32.mrf.mxu0
      %v1375 = vadd.f32 %v1244, %v1374
      %v1376 = vpop.f32.mrf.mxu0
      %1377 = vdwg.mxu0
      %1378 = vmatpush.bf16.msra.mxu0 0
      %1379 = vmatpush.bf16.msra.mxu0 0
      %1380 = vmatpush.bf16.msra.mxu0 0
      %1381 = vmatpush.bf16.msra.mxu0 0
      %1382 = vmatpush.bf16.msra.mxu0 0
      %1383 = vmatpush.bf16.msra.mxu0 0
      %1384 = vmatpush.bf16.msra.mxu0 0
      %1385 = vmatpush.bf16.msra.mxu0 %v1305
      %1386 = vmatmul.bf16.gmra.mxu0 %v1287
      %v1387 = vpop.f32.mrf.mxu0
      %v1388 = vadd.f32 %v1257, %v1387
      %v1389 = vpop.f32.mrf.mxu0
      %1390 = vdwg.mxu0
      %1391 = vmatpush.bf16.msra.mxu0 0
      %1392 = vmatpush.bf16.msra.mxu0 0
      %1393 = vmatpush.bf16.msra.mxu0 0
      %1394 = vmatpush.bf16.msra.mxu0 0
      %1395 = vmatpush.bf16.msra.mxu0 0
      %1396 = vmatpush.bf16.msra.mxu0 0
      %1397 = vmatpush.bf16.msra.mxu0 0
      %1398 = vmatpush.bf16.msra.mxu0 %v1308
      %1399 = vmatmul.bf16.gmra.mxu0 %v1287
      %v1400 = vpop.f32.mrf.mxu0
      %v1401 = vadd.f32 %v1270, %v1400
      %v1402 = vpop.f32.mrf.mxu0
      %1403 = vdwg.mxu0
      %1404 = vmatpush.bf16.msra.mxu0 0
      %1405 = vmatpush.bf16.msra.mxu0 0
      %1406 = vmatpush.bf16.msra.mxu0 0
      %1407 = vmatpush.bf16.msra.mxu0 0
      %1408 = vmatpush.bf16.msra.mxu0 0
      %1409 = vmatpush.bf16.msra.mxu0 0
      %1410 = vmatpush.bf16.msra.mxu0 0
      %1411 = vmatpush.bf16.msra.mxu0 %v1311
      %1412 = vmatmul.bf16.gmra.mxu0 %v1287
      %v1413 = vpop.f32.mrf.mxu0
      %v1414 = vadd.f32 %v1283, %v1413
      %v1415 = vpop.f32.mrf.mxu0
      %1416 = vdwg.mxu0
      %v1417 = vld [vmem:[%s9] sm:$0xff]
      %1419 = vset.pattern.permute.xlu0 0
      %1420 = vperm.xlu0 %1419, %v1417
      %v1421 = vpop.permute.xlu0 %1420
      %v1423 = vadd.f32 %v1323, %v1421
      %v1424 = vadd.f32 %v1336, %v1421
      %v1425 = vadd.f32 %v1349, %v1421
      %v1426 = vadd.f32 %v1362, %v1421
      %v1427 = vadd.f32 %v1375, %v1421
      %v1428 = vadd.f32 %v1388, %v1421
      %v1429 = vadd.f32 %v1401, %v1421
      %v1430 = vadd.f32 %v1414, %v1421
      %v1431 = vld [vmem:[%s10] sm:$0xf]
      %v1432 = vpack.c.bf16 %v1423, %v1423
      %v1433 = vpack.c.bf16 %v1424, %v1424
      %v1434 = vpack.c.bf16 %v1425, %v1425
      %v1435 = vpack.c.bf16 %v1426, %v1426
      %v1436 = vpack.c.bf16 %v1427, %v1427
      %v1437 = vpack.c.bf16 %v1428, %v1428
      %v1438 = vpack.c.bf16 %v1429, %v1429
      %v1439 = vpack.c.bf16 %v1430, %v1430
      %v1440 = vld [vmem:[%s11] sm:$0xff]
      %1442 = vset.pattern.permute.xlu0 0
      %1443 = vperm.xlu0 %1442, %v1440
      %v1444 = vpop.permute.xlu0 %1443
      %vm1446 = vcmask 64512
      %v1448 = vsel %vm1446, %v1431, 0
      %v1451 = vsel %vm863, %v1432, 0
      %v1454 = vsel %vm863, %v1433, 0
      %v1457 = vsel %vm863, %v1434, 0
      %v1460 = vsel %vm863, %v1435, 0
      %v1463 = vsel %vm863, %v1436, 0
      %v1466 = vsel %vm863, %v1437, 0
      %v1469 = vsel %vm863, %v1438, 0
      %v1472 = vsel %vm863, %v1439, 0
      %1474 = vmatpush.bf16.msra.mxu0 0
      %1475 = vmatpush.bf16.msra.mxu0 0
      %1476 = vmatpush.bf16.msra.mxu0 0
      %1477 = vmatpush.bf16.msra.mxu0 0
      %1478 = vmatpush.bf16.msra.mxu0 0
      %1479 = vmatpush.bf16.msra.mxu0 0
      %1480 = vmatpush.bf16.msra.mxu0 0
      %1481 = vmatpush.bf16.msra.mxu0 %v1451
      %1482 = vmatmul.bf16.gmra.mxu0 %v1448
      %v1483 = vpop.f32.mrf.mxu0
      %v1484 = vadd.f32 %v1444, %v1483
      %v1485 = vpop.f32.mrf.mxu0
      %1486 = vdwg.mxu0
      %1487 = vmatpush.bf16.msra.mxu0 0
      %1488 = vmatpush.bf16.msra.mxu0 0
      %1489 = vmatpush.bf16.msra.mxu0 0
      %1490 = vmatpush.bf16.msra.mxu0 0
      %1491 = vmatpush.bf16.msra.mxu0 0
      %1492 = vmatpush.bf16.msra.mxu0 0
      %1493 = vmatpush.bf16.msra.mxu0 0
      %1494 = vmatpush.bf16.msra.mxu0 %v1454
      %1495 = vmatmul.bf16.gmra.mxu0 %v1448
      %v1496 = vpop.f32.mrf.mxu0
      %v1497 = vadd.f32 %v1444, %v1496
      %v1498 = vpop.f32.mrf.mxu0
      %1499 = vdwg.mxu0
      %1500 = vmatpush.bf16.msra.mxu0 0
      %1501 = vmatpush.bf16.msra.mxu0 0
      %1502 = vmatpush.bf16.msra.mxu0 0
      %1503 = vmatpush.bf16.msra.mxu0 0
      %1504 = vmatpush.bf16.msra.mxu0 0
      %1505 = vmatpush.bf16.msra.mxu0 0
      %1506 = vmatpush.bf16.msra.mxu0 0
      %1507 = vmatpush.bf16.msra.mxu0 %v1457
      %1508 = vmatmul.bf16.gmra.mxu0 %v1448
      %v1509 = vpop.f32.mrf.mxu0
      %v1510 = vadd.f32 %v1444, %v1509
      %v1511 = vpop.f32.mrf.mxu0
      %1512 = vdwg.mxu0
      %1513 = vmatpush.bf16.msra.mxu0 0
      %1514 = vmatpush.bf16.msra.mxu0 0
      %1515 = vmatpush.bf16.msra.mxu0 0
      %1516 = vmatpush.bf16.msra.mxu0 0
      %1517 = vmatpush.bf16.msra.mxu0 0
      %1518 = vmatpush.bf16.msra.mxu0 0
      %1519 = vmatpush.bf16.msra.mxu0 0
      %1520 = vmatpush.bf16.msra.mxu0 %v1460
      %1521 = vmatmul.bf16.gmra.mxu0 %v1448
      %v1522 = vpop.f32.mrf.mxu0
      %v1523 = vadd.f32 %v1444, %v1522
      %v1524 = vpop.f32.mrf.mxu0
      %1525 = vdwg.mxu0
      %1526 = vmatpush.bf16.msra.mxu0 0
      %1527 = vmatpush.bf16.msra.mxu0 0
      %1528 = vmatpush.bf16.msra.mxu0 0
      %1529 = vmatpush.bf16.msra.mxu0 0
      %1530 = vmatpush.bf16.msra.mxu0 0
      %1531 = vmatpush.bf16.msra.mxu0 0
      %1532 = vmatpush.bf16.msra.mxu0 0
      %1533 = vmatpush.bf16.msra.mxu0 %v1463
      %1534 = vmatmul.bf16.gmra.mxu0 %v1448
      %v1535 = vpop.f32.mrf.mxu0
      %v1536 = vadd.f32 %v1444, %v1535
      %v1537 = vpop.f32.mrf.mxu0
      %1538 = vdwg.mxu0
      %1539 = vmatpush.bf16.msra.mxu0 0
      %1540 = vmatpush.bf16.msra.mxu0 0
      %1541 = vmatpush.bf16.msra.mxu0 0
      %1542 = vmatpush.bf16.msra.mxu0 0
      %1543 = vmatpush.bf16.msra.mxu0 0
      %1544 = vmatpush.bf16.msra.mxu0 0
      %1545 = vmatpush.bf16.msra.mxu0 0
      %1546 = vmatpush.bf16.msra.mxu0 %v1466
      %1547 = vmatmul.bf16.gmra.mxu0 %v1448
      %v1548 = vpop.f32.mrf.mxu0
      %v1549 = vadd.f32 %v1444, %v1548
      %v1550 = vpop.f32.mrf.mxu0
      %1551 = vdwg.mxu0
      %1552 = vmatpush.bf16.msra.mxu0 0
      %1553 = vmatpush.bf16.msra.mxu0 0
      %1554 = vmatpush.bf16.msra.mxu0 0
      %1555 = vmatpush.bf16.msra.mxu0 0
      %1556 = vmatpush.bf16.msra.mxu0 0
      %1557 = vmatpush.bf16.msra.mxu0 0
      %1558 = vmatpush.bf16.msra.mxu0 0
      %1559 = vmatpush.bf16.msra.mxu0 %v1469
      %1560 = vmatmul.bf16.gmra.mxu0 %v1448
      %v1561 = vpop.f32.mrf.mxu0
      %v1562 = vadd.f32 %v1444, %v1561
      %v1563 = vpop.f32.mrf.mxu0
      %1564 = vdwg.mxu0
      %1565 = vmatpush.bf16.msra.mxu0 0
      %1566 = vmatpush.bf16.msra.mxu0 0
      %1567 = vmatpush.bf16.msra.mxu0 0
      %1568 = vmatpush.bf16.msra.mxu0 0
      %1569 = vmatpush.bf16.msra.mxu0 0
      %1570 = vmatpush.bf16.msra.mxu0 0
      %1571 = vmatpush.bf16.msra.mxu0 0
      %1572 = vmatpush.bf16.msra.mxu0 %v1472
      %1573 = vmatmul.bf16.gmra.mxu0 %v1448
      %v1574 = vpop.f32.mrf.mxu0
      %v1575 = vadd.f32 %v1444, %v1574
      %v1576 = vpop.f32.mrf.mxu0
      %1577 = vdwg.mxu0
      %v1578 = vadd.f32 %v1484, %v1497
      %v1579 = vadd.f32 %v1578, %v1510
      %v1580 = vadd.f32 %v1579, %v1523
      %v1581 = vadd.f32 %v1580, %v1536
      %v1582 = vadd.f32 %v1581, %v1549
      %v1583 = vadd.f32 %v1582, %v1562
      %v1584 = vadd.f32 %v1583, %v1575
      %1585 = vadd.xlane.f32.xlu0 %v1584
      %v1586 = vpop.xlane.xlu0 %1585
      %v1587 = vrcp.pop 1024.0
      %v1588 = vmul.f32 1024.0, %v1587
      %v1589 = vsub.f32 1.0, %v1588
      %v1590 = vmul.f32 %v1587, %v1589
      %v1591 = vadd.f32 %v1587, %v1590
      %vm1592 = vweird.f32 %v1587
      %v1593 = vsel %vm1592, %v1587, %v1591
      %v1594 = vmul.f32 %v1586, %v1593
      %v1595 = vsub.f32 %v1484, %v1594
      %v1596 = vsub.f32 %v1497, %v1594
      %v1597 = vsub.f32 %v1510, %v1594
      %v1598 = vsub.f32 %v1523, %v1594
      %v1599 = vsub.f32 %v1536, %v1594
      %v1600 = vsub.f32 %v1549, %v1594
      %v1601 = vsub.f32 %v1562, %v1594
      %v1602 = vsub.f32 %v1575, %v1594
      %v1603 = vmul.f32 %v1595, %v1595
      %v1604 = vmul.f32 %v1596, %v1596
      %v1605 = vmul.f32 %v1597, %v1597
      %v1606 = vmul.f32 %v1598, %v1598
      %v1607 = vmul.f32 %v1599, %v1599
      %v1608 = vmul.f32 %v1600, %v1600
      %v1609 = vmul.f32 %v1601, %v1601
      %v1610 = vmul.f32 %v1602, %v1602
      %v1611 = vadd.f32 %v1603, %v1604
      %v1612 = vadd.f32 %v1611, %v1605
      %v1613 = vadd.f32 %v1612, %v1606
      %v1614 = vadd.f32 %v1613, %v1607
      %v1615 = vadd.f32 %v1614, %v1608
      %v1616 = vadd.f32 %v1615, %v1609
      %v1617 = vadd.f32 %v1616, %v1610
      %1618 = vadd.xlane.f32.xlu0 %v1617
      %v1619 = vpop.xlane.xlu0 %1618
      %v1620 = vmul.f32 %v1619, %v1593
      %v1621 = vadd.f32 %v1620, 1e-05
      %v1622 = vrsqrt.pop %v1621
      %v1623 = vmul.f32 %v1622, %v1621
      %v1624 = vmul.f32 %v1623, %v1622
      %v1625 = vmul.f32 0.5, %v1624
      %v1626 = vsub.f32 1.5, %v1625
      %v1627 = vmul.f32 %v1622, %v1626
      %vm1628 = vweird.f32 %v1621
      %vm1629 = vweird.f32 %v1622
      %vm1630 = vmor %vm1628, %vm1629
      %v1631 = vsel %vm1630, %v1622, %v1627
      %v1632 = vmul.f32 %v1595, %v1631
      %v1633 = vmul.f32 %v1596, %v1631
      %v1634 = vmul.f32 %v1597, %v1631
      %v1635 = vmul.f32 %v1598, %v1631
      %v1636 = vmul.f32 %v1599, %v1631
      %v1637 = vmul.f32 %v1600, %v1631
      %v1638 = vmul.f32 %v1601, %v1631
      %v1639 = vmul.f32 %v1602, %v1631
      %v1640 = vmax.f32 %v1632, 0.0
      %v1641 = vmax.f32 %v1633, 0.0
      %v1642 = vmax.f32 %v1634, 0.0
      %v1643 = vmax.f32 %v1635, 0.0
      %v1644 = vmax.f32 %v1636, 0.0
      %v1645 = vmax.f32 %v1637, 0.0
      %v1646 = vmax.f32 %v1638, 0.0
      %v1647 = vmax.f32 %v1639, 0.0
      %v1648 = vpack.c.bf16 %v1641, %v1640
      %v1649 = vpack.c.bf16 %v1643, %v1642
      %v1650 = vpack.c.bf16 %v1645, %v1644
      %v1651 = vpack.c.bf16 %v1647, %v1646
      %v1656 = vunpack.c.l.b16 %v1648
      %v1657 = vunpack.c.h.b16 %v1648
      %v1658 = vunpack.c.l.b16 %v1649
      %v1659 = vunpack.c.h.b16 %v1649
      %v1660 = vunpack.c.l.b16 %v1650
      %v1661 = vunpack.c.h.b16 %v1650
      %v1662 = vunpack.c.l.b16 %v1651
      %v1663 = vunpack.c.h.b16 %v1651
      %v1664 = vpack.c.b16 %v1656, %v1656
      %v1665 = vpack.c.b16 %v1657, %v1657
      %v1666 = vpack.c.b16 %v1658, %v1658
      %v1667 = vpack.c.b16 %v1659, %v1659
      %v1668 = vpack.c.b16 %v1660, %v1660
      %v1669 = vpack.c.b16 %v1661, %v1661
      %v1670 = vpack.c.b16 %v1662, %v1662
      %v1671 = vpack.c.b16 %v1663, %v1663
      %1672 = vrot.lane.b32.xlu0 %v1664, 33
      %v1673 = vpop.permute.xlu0 %1672
      %1674 = vrot.lane.b32.xlu0 %v1665, 33
      %v1675 = vpop.permute.xlu0 %1674
      %1676 = vrot.lane.b32.xlu0 %v1666, 33
      %v1677 = vpop.permute.xlu0 %1676
      %1678 = vrot.lane.b32.xlu0 %v1667, 33
      %v1679 = vpop.permute.xlu0 %1678
      %1680 = vrot.lane.b32.xlu0 %v1668, 33
      %v1681 = vpop.permute.xlu0 %1680
      %1682 = vrot.lane.b32.xlu0 %v1669, 33
      %v1683 = vpop.permute.xlu0 %1682
      %1684 = vrot.lane.b32.xlu0 %v1670, 33
      %v1685 = vpop.permute.xlu0 %1684
      %1686 = vrot.lane.b32.xlu0 %v1671, 33
      %v1687 = vpop.permute.xlu0 %1686
      %vm1688 = vcmask 269312
      %v1689 = vsel %vm1688, %v1673, %v1675
      %v1690 = vsel %vm1688, %v1675, %v1677
      %v1691 = vsel %vm1688, %v1677, %v1679
      %v1692 = vsel %vm1688, %v1679, %v1681
      %v1693 = vsel %vm1688, %v1681, %v1683
      %v1694 = vsel %vm1688, %v1683, %v1685
      %v1695 = vsel %vm1688, %v1685, %v1687
      %vm1703 = vcmask 269312
      %v1706 = vsel %vm1703, 0, %v1673
      %v1709 = vsel %vm1703, %v1687, 0
      %v1711 = vlaneseq
      %v1712 = vand.u32 %v1711, 127
      %v1713 = vadd.s32 %v1712, 128
      %v1714 = vadd.s32 %v1712, 256
      %v1715 = vadd.s32 %v1712, 384
      %v1716 = vadd.s32 %v1712, 512
      %v1717 = vadd.s32 %v1712, 640
      %v1718 = vadd.s32 %v1712, 768
      %v1719 = vadd.s32 %v1712, 896
      %vm1720 = vcmp.lt.s32.totalorder %v1712, 0
      %v1721 = vsub.s32 0, %v1712
      %v1722 = vsel %vm1720, %v1721, %v1712
      %v1723 = vshrl.u32 %v1722, 5
      %v1724 = vand.u32 %v1722, 31
      %v1725 = vsub.s32 0, %v1724
      %v1726 = vsel %vm1720, %v1725, %v1724
      %vm1727 = vcmp.lt.s32.totalorder %v1713, 0
      %v1728 = vsub.s32 0, %v1713
      %v1729 = vsel %vm1727, %v1728, %v1713
      %v1730 = vshrl.u32 %v1729, 5
      %v1731 = vand.u32 %v1729, 31
      %v1732 = vsub.s32 0, %v1731
      %v1733 = vsel %vm1727, %v1732, %v1731
      %vm1734 = vcmp.lt.s32.totalorder %v1714, 0
      %v1735 = vsub.s32 0, %v1714
      %v1736 = vsel %vm1734, %v1735, %v1714
      %v1737 = vshrl.u32 %v1736, 5
      %v1738 = vand.u32 %v1736, 31
      %v1739 = vsub.s32 0, %v1738
      %v1740 = vsel %vm1734, %v1739, %v1738
      %vm1741 = vcmp.lt.s32.totalorder %v1715, 0
      %v1742 = vsub.s32 0, %v1715
      %v1743 = vsel %vm1741, %v1742, %v1715
      %v1744 = vshrl.u32 %v1743, 5
      %v1745 = vand.u32 %v1743, 31
      %v1746 = vsub.s32 0, %v1745
      %v1747 = vsel %vm1741, %v1746, %v1745
      %vm1748 = vcmp.lt.s32.totalorder %v1716, 0
      %v1749 = vsub.s32 0, %v1716
      %v1750 = vsel %vm1748, %v1749, %v1716
      %v1751 = vshrl.u32 %v1750, 5
      %v1752 = vand.u32 %v1750, 31
      %v1753 = vsub.s32 0, %v1752
      %v1754 = vsel %vm1748, %v1753, %v1752
      %vm1755 = vcmp.lt.s32.totalorder %v1717, 0
      %v1756 = vsub.s32 0, %v1717
      %v1757 = vsel %vm1755, %v1756, %v1717
      %v1758 = vshrl.u32 %v1757, 5
      %v1759 = vand.u32 %v1757, 31
      %v1760 = vsub.s32 0, %v1759
      %v1761 = vsel %vm1755, %v1760, %v1759
      %vm1762 = vcmp.lt.s32.totalorder %v1718, 0
      %v1763 = vsub.s32 0, %v1718
      %v1764 = vsel %vm1762, %v1763, %v1718
      %v1765 = vshrl.u32 %v1764, 5
      %v1766 = vand.u32 %v1764, 31
      %v1767 = vsub.s32 0, %v1766
      %v1768 = vsel %vm1762, %v1767, %v1766
      %vm1769 = vcmp.lt.s32.totalorder %v1719, 0
      %v1770 = vsub.s32 0, %v1719
      %v1771 = vsel %vm1769, %v1770, %v1719
      %v1772 = vshrl.u32 %v1771, 5
      %v1773 = vand.u32 %v1771, 31
      %v1774 = vsub.s32 0, %v1773
      %v1775 = vsel %vm1769, %v1774, %v1773
      %vm1776 = vcmp.ne.s32.totalorder %v1726, 0
      %vm1777 = vcmp.ne.s32.totalorder %v1733, 0
      %vm1778 = vcmp.ne.s32.totalorder %v1740, 0
      %vm1779 = vcmp.ne.s32.totalorder %v1747, 0
      %vm1780 = vcmp.ne.s32.totalorder %v1754, 0
      %vm1781 = vcmp.ne.s32.totalorder %v1761, 0
      %vm1782 = vcmp.ne.s32.totalorder %v1768, 0
      %vm1783 = vcmp.ne.s32.totalorder %v1775, 0
      %vm1784 = vcmp.lt.s32.totalorder %v1726, 0
      %vm1785 = vcmp.lt.s32.totalorder %v1733, 0
      %vm1786 = vcmp.lt.s32.totalorder %v1740, 0
      %vm1787 = vcmp.lt.s32.totalorder %v1747, 0
      %vm1788 = vcmp.lt.s32.totalorder %v1754, 0
      %vm1789 = vcmp.lt.s32.totalorder %v1761, 0
      %vm1790 = vcmp.lt.s32.totalorder %v1768, 0
      %vm1791 = vcmp.lt.s32.totalorder %v1775, 0
      %vm1792 = vmand %vm1784, %vm1776
      %vm1793 = vmand %vm1785, %vm1777
      %vm1794 = vmand %vm1786, %vm1778
      %vm1795 = vmand %vm1787, %vm1779
      %vm1796 = vmand %vm1788, %vm1780
      %vm1797 = vmand %vm1789, %vm1781
      %vm1798 = vmand %vm1790, %vm1782
      %vm1799 = vmand %vm1791, %vm1783
      %v1800 = vadd.s32 %v1726, 32
      %v1801 = vadd.s32 %v1733, 32
      %v1802 = vadd.s32 %v1740, 32
      %v1803 = vadd.s32 %v1747, 32
      %v1804 = vadd.s32 %v1754, 32
      %v1805 = vadd.s32 %v1761, 32
      %v1806 = vadd.s32 %v1768, 32
      %v1807 = vadd.s32 %v1775, 32
      %v1808 = vsel %vm1792, %v1800, %v1726
      %v1809 = vsel %vm1793, %v1801, %v1733
      %v1810 = vsel %vm1794, %v1802, %v1740
      %v1811 = vsel %vm1795, %v1803, %v1747
      %v1812 = vsel %vm1796, %v1804, %v1754
      %v1813 = vsel %vm1797, %v1805, %v1761
      %v1814 = vsel %vm1798, %v1806, %v1768
      %v1815 = vsel %vm1799, %v1807, %v1775
      %vm1816 = vcmp.ge.s32.totalorder %v1808, 1
      %vm1817 = vcmp.ge.s32.totalorder %v1809, 1
      %vm1818 = vcmp.ge.s32.totalorder %v1810, 1
      %vm1819 = vcmp.ge.s32.totalorder %v1811, 1
      %vm1820 = vcmp.ge.s32.totalorder %v1812, 1
      %vm1821 = vcmp.ge.s32.totalorder %v1813, 1
      %vm1822 = vcmp.ge.s32.totalorder %v1814, 1
      %vm1823 = vcmp.ge.s32.totalorder %v1815, 1
      %v1824 = vsel %vm1816, 1, 0
      %v1825 = vsel %vm1817, 1, 0
      %v1826 = vsel %vm1818, 1, 0
      %v1827 = vsel %vm1819, 1, 0
      %v1828 = vsel %vm1820, 1, 0
      %v1829 = vsel %vm1821, 1, 0
      %v1830 = vsel %vm1822, 1, 0
      %v1831 = vsel %vm1823, 1, 0
      %vm1832 = vcmp.eq.s32.totalorder %v1824, 1
      %vm1833 = vcmp.eq.s32.totalorder %v1825, 1
      %vm1834 = vcmp.eq.s32.totalorder %v1826, 1
      %vm1835 = vcmp.eq.s32.totalorder %v1827, 1
      %vm1836 = vcmp.eq.s32.totalorder %v1828, 1
      %vm1837 = vcmp.eq.s32.totalorder %v1829, 1
      %vm1838 = vcmp.eq.s32.totalorder %v1830, 1
      %vm1839 = vcmp.eq.s32.totalorder %v1831, 1
      %vm1840 = vmpackc.low %vm1833, %vm1832
      %vm1841 = vmpackc.low %vm1835, %vm1834
      %vm1842 = vmpackc.low %vm1837, %vm1836
      %vm1843 = vmpackc.low %vm1839, %vm1838
      %v1844 = vsel %vm1840, 65537, 0
      %v1845 = vsel %vm1841, 65537, 0
      %v1846 = vsel %vm1842, 65537, 0
      %v1847 = vsel %vm1843, 65537, 0
      %v1848 = vperm.slane %v1844, 0
      %v1849 = vperm.slane %v1844, 4
      %v1850 = vperm.slane %v1845, 0
      %v1851 = vperm.slane %v1845, 4
      %v1852 = vperm.slane %v1846, 0
      %v1853 = vperm.slane %v1846, 4
      %v1854 = vperm.slane %v1847, 0
      %v1855 = vperm.slane %v1847, 4
      %v1856 = vunpack.c.l.b16 %v1848
      %v1857 = vunpack.c.h.b16 %v1848
      %v1858 = vunpack.c.l.b16 0
      %v1859 = vunpack.c.h.b16 0
      %vm1860 = vcmp.ne.s32.totalorder %v1856, %v1858
      %vm1861 = vcmp.ne.s32.totalorder %v1857, %v1859
      %vm1862 = vmpackc.low %vm1861, %vm1860
      %v1863 = vunpack.c.l.b16 %v1849
      %v1864 = vunpack.c.h.b16 %v1849
      %v1865 = vunpack.c.l.b16 0
      %v1866 = vunpack.c.h.b16 0
      %vm1867 = vcmp.ne.s32.totalorder %v1863, %v1865
      %vm1868 = vcmp.ne.s32.totalorder %v1864, %v1866
      %vm1869 = vmpackc.low %vm1868, %vm1867
      %v1870 = vunpack.c.l.b16 %v1850
      %v1871 = vunpack.c.h.b16 %v1850
      %v1872 = vunpack.c.l.b16 0
      %v1873 = vunpack.c.h.b16 0
      %vm1874 = vcmp.ne.s32.totalorder %v1870, %v1872
      %vm1875 = vcmp.ne.s32.totalorder %v1871, %v1873
      %vm1876 = vmpackc.low %vm1875, %vm1874
      %v1877 = vunpack.c.l.b16 %v1851
      %v1878 = vunpack.c.h.b16 %v1851
      %v1879 = vunpack.c.l.b16 0
      %v1880 = vunpack.c.h.b16 0
      %vm1881 = vcmp.ne.s32.totalorder %v1877, %v1879
      %vm1882 = vcmp.ne.s32.totalorder %v1878, %v1880
      %vm1883 = vmpackc.low %vm1882, %vm1881
      %v1884 = vunpack.c.l.b16 %v1852
      %v1885 = vunpack.c.h.b16 %v1852
      %v1886 = vunpack.c.l.b16 0
      %v1887 = vunpack.c.h.b16 0
      %vm1888 = vcmp.ne.s32.totalorder %v1884, %v1886
      %vm1889 = vcmp.ne.s32.totalorder %v1885, %v1887
      %vm1890 = vmpackc.low %vm1889, %vm1888
      %v1891 = vunpack.c.l.b16 %v1853
      %v1892 = vunpack.c.h.b16 %v1853
      %v1893 = vunpack.c.l.b16 0
      %v1894 = vunpack.c.h.b16 0
      %vm1895 = vcmp.ne.s32.totalorder %v1891, %v1893
      %vm1896 = vcmp.ne.s32.totalorder %v1892, %v1894
      %vm1897 = vmpackc.low %vm1896, %vm1895
      %v1898 = vunpack.c.l.b16 %v1854
      %v1899 = vunpack.c.h.b16 %v1854
      %v1900 = vunpack.c.l.b16 0
      %v1901 = vunpack.c.h.b16 0
      %vm1902 = vcmp.ne.s32.totalorder %v1898, %v1900
      %vm1903 = vcmp.ne.s32.totalorder %v1899, %v1901
      %vm1904 = vmpackc.low %vm1903, %vm1902
      %v1905 = vunpack.c.l.b16 %v1855
      %v1906 = vunpack.c.h.b16 %v1855
      %v1907 = vunpack.c.l.b16 0
      %v1908 = vunpack.c.h.b16 0
      %vm1909 = vcmp.ne.s32.totalorder %v1905, %v1907
      %vm1910 = vcmp.ne.s32.totalorder %v1906, %v1908
      %vm1911 = vmpackc.low %vm1910, %vm1909
      %v1912 = vsel %vm1862, %v1706, 0
      %v1913 = vsel %vm1869, %v1689, 0
      %v1914 = vsel %vm1876, %v1690, 0
      %v1915 = vsel %vm1883, %v1691, 0
      %v1916 = vsel %vm1890, %v1692, 0
      %v1917 = vsel %vm1897, %v1693, 0
      %v1918 = vsel %vm1904, %v1694, 0
      %v1919 = vsel %vm1911, %v1695, 0
      %vm1920 = vcmp.le.s32.totalorder %v1808, 30
      %vm1921 = vcmp.le.s32.totalorder %v1809, 30
      %vm1922 = vcmp.le.s32.totalorder %v1810, 30
      %vm1923 = vcmp.le.s32.totalorder %v1811, 30
      %vm1924 = vcmp.le.s32.totalorder %v1812, 30
      %vm1925 = vcmp.le.s32.totalorder %v1813, 30
      %vm1926 = vcmp.le.s32.totalorder %v1814, 30
      %vm1927 = vcmp.le.s32.totalorder %v1815, 30
      %v1928 = vsel %vm1920, 1, 0
      %v1929 = vsel %vm1921, 1, 0
      %v1930 = vsel %vm1922, 1, 0
      %v1931 = vsel %vm1923, 1, 0
      %v1932 = vsel %vm1924, 1, 0
      %v1933 = vsel %vm1925, 1, 0
      %v1934 = vsel %vm1926, 1, 0
      %v1935 = vsel %vm1927, 1, 0
      %vm1936 = vcmp.eq.s32.totalorder %v1928, 1
      %vm1937 = vcmp.eq.s32.totalorder %v1929, 1
      %vm1938 = vcmp.eq.s32.totalorder %v1930, 1
      %vm1939 = vcmp.eq.s32.totalorder %v1931, 1
      %vm1940 = vcmp.eq.s32.totalorder %v1932, 1
      %vm1941 = vcmp.eq.s32.totalorder %v1933, 1
      %vm1942 = vcmp.eq.s32.totalorder %v1934, 1
      %vm1943 = vcmp.eq.s32.totalorder %v1935, 1
      %vm1944 = vmpackc.low %vm1937, %vm1936
      %vm1945 = vmpackc.low %vm1939, %vm1938
      %vm1946 = vmpackc.low %vm1941, %vm1940
      %vm1947 = vmpackc.low %vm1943, %vm1942
      %v1948 = vsel %vm1944, 65537, 0
      %v1949 = vsel %vm1945, 65537, 0
      %v1950 = vsel %vm1946, 65537, 0
      %v1951 = vsel %vm1947, 65537, 0
      %v1952 = vperm.slane %v1948, 0
      %v1953 = vperm.slane %v1948, 4
      %v1954 = vperm.slane %v1949, 0
      %v1955 = vperm.slane %v1949, 4
      %v1956 = vperm.slane %v1950, 0
      %v1957 = vperm.slane %v1950, 4
      %v1958 = vperm.slane %v1951, 0
      %v1959 = vperm.slane %v1951, 4
      %1960 = vrot.lane.b32.xlu0 %v1952, 2
      %v1961 = vpop.permute.xlu0 %1960
      %1962 = vrot.lane.b32.xlu0 %v1953, 2
      %v1963 = vpop.permute.xlu0 %1962
      %1964 = vrot.lane.b32.xlu0 %v1954, 2
      %v1965 = vpop.permute.xlu0 %1964
      %1966 = vrot.lane.b32.xlu0 %v1955, 2
      %v1967 = vpop.permute.xlu0 %1966
      %1968 = vrot.lane.b32.xlu0 %v1956, 2
      %v1969 = vpop.permute.xlu0 %1968
      %1970 = vrot.lane.b32.xlu0 %v1957, 2
      %v1971 = vpop.permute.xlu0 %1970
      %1972 = vrot.lane.b32.xlu0 %v1958, 2
      %v1973 = vpop.permute.xlu0 %1972
      %1974 = vrot.lane.b32.xlu0 %v1959, 2
      %v1975 = vpop.permute.xlu0 %1974
      %vm1976 = vcmask 15360
      %v1977 = vsel %vm1976, %v1961, %v1963
      %v1978 = vsel %vm1976, %v1963, %v1965
      %v1979 = vsel %vm1976, %v1965, %v1967
      %v1980 = vsel %vm1976, %v1967, %v1969
      %v1981 = vsel %vm1976, %v1969, %v1971
      %v1982 = vsel %vm1976, %v1971, %v1973
      %v1983 = vsel %vm1976, %v1973, %v1975
      %v1984 = vunpack.c.l.b16 %v1961
      %v1985 = vunpack.c.h.b16 %v1961
      %v1986 = vunpack.c.l.b16 0
      %v1987 = vunpack.c.h.b16 0
      %vm1988 = vcmp.ne.s32.totalorder %v1984, %v1986
      %vm1989 = vcmp.ne.s32.totalorder %v1985, %v1987
      %vm1990 = vmpackc.low %vm1989, %vm1988
      %v1991 = vunpack.c.l.b16 %v1977
      %v1992 = vunpack.c.h.b16 %v1977
      %v1993 = vunpack.c.l.b16 0
      %v1994 = vunpack.c.h.b16 0
      %vm1995 = vcmp.ne.s32.totalorder %v1991, %v1993
      %vm1996 = vcmp.ne.s32.totalorder %v1992, %v1994
      %vm1997 = vmpackc.low %vm1996, %vm1995
      %v1998 = vunpack.c.l.b16 %v1978
      %v1999 = vunpack.c.h.b16 %v1978
      %v2000 = vunpack.c.l.b16 0
      %v2001 = vunpack.c.h.b16 0
      %vm2002 = vcmp.ne.s32.totalorder %v1998, %v2000
      %vm2003 = vcmp.ne.s32.totalorder %v1999, %v2001
      %vm2004 = vmpackc.low %vm2003, %vm2002
      %v2005 = vunpack.c.l.b16 %v1979
      %v2006 = vunpack.c.h.b16 %v1979
      %v2007 = vunpack.c.l.b16 0
      %v2008 = vunpack.c.h.b16 0
      %vm2009 = vcmp.ne.s32.totalorder %v2005, %v2007
      %vm2010 = vcmp.ne.s32.totalorder %v2006, %v2008
      %vm2011 = vmpackc.low %vm2010, %vm2009
      %v2012 = vunpack.c.l.b16 %v1980
      %v2013 = vunpack.c.h.b16 %v1980
      %v2014 = vunpack.c.l.b16 0
      %v2015 = vunpack.c.h.b16 0
      %vm2016 = vcmp.ne.s32.totalorder %v2012, %v2014
      %vm2017 = vcmp.ne.s32.totalorder %v2013, %v2015
      %vm2018 = vmpackc.low %vm2017, %vm2016
      %v2019 = vunpack.c.l.b16 %v1981
      %v2020 = vunpack.c.h.b16 %v1981
      %v2021 = vunpack.c.l.b16 0
      %v2022 = vunpack.c.h.b16 0
      %vm2023 = vcmp.ne.s32.totalorder %v2019, %v2021
      %vm2024 = vcmp.ne.s32.totalorder %v2020, %v2022
      %vm2025 = vmpackc.low %vm2024, %vm2023
      %v2026 = vunpack.c.l.b16 %v1982
      %v2027 = vunpack.c.h.b16 %v1982
      %v2028 = vunpack.c.l.b16 0
      %v2029 = vunpack.c.h.b16 0
      %vm2030 = vcmp.ne.s32.totalorder %v2026, %v2028
      %vm2031 = vcmp.ne.s32.totalorder %v2027, %v2029
      %vm2032 = vmpackc.low %vm2031, %vm2030
      %v2033 = vunpack.c.l.b16 %v1983
      %v2034 = vunpack.c.h.b16 %v1983
      %v2035 = vunpack.c.l.b16 0
      %v2036 = vunpack.c.h.b16 0
      %vm2037 = vcmp.ne.s32.totalorder %v2033, %v2035
      %vm2038 = vcmp.ne.s32.totalorder %v2034, %v2036
      %vm2039 = vmpackc.low %vm2038, %vm2037
      %v2040 = vunpack.c.l.b16 %v1975
      %v2041 = vunpack.c.h.b16 %v1975
      %v2042 = vunpack.c.l.b16 0
      %v2043 = vunpack.c.h.b16 0
      %vm2044 = vcmp.ne.s32.totalorder %v2040, %v2042
      %vm2045 = vcmp.ne.s32.totalorder %v2041, %v2043
      %vm2046 = vmpackc.low %vm2045, %vm2044
      %v2047 = vsel %vm1990, %v1706, 0
      %v2048 = vsel %vm1997, %v1689, 0
      %v2049 = vsel %vm2004, %v1690, 0
      %v2050 = vsel %vm2011, %v1691, 0
      %v2051 = vsel %vm2018, %v1692, 0
      %v2052 = vsel %vm2025, %v1693, 0
      %v2053 = vsel %vm2032, %v1694, 0
      %v2054 = vsel %vm2039, %v1695, 0
      %v2055 = vsel %vm2046, %v1709, 0
      %2056 = vrot.lane.b32.xlu0 %v1848, 32
      %v2057 = vpop.permute.xlu0 %2056
      %2058 = vrot.lane.b32.xlu0 %v1849, 32
      %v2059 = vpop.permute.xlu0 %2058
      %2060 = vrot.lane.b32.xlu0 %v1850, 32
      %v2061 = vpop.permute.xlu0 %2060
      %2062 = vrot.lane.b32.xlu0 %v1851, 32
      %v2063 = vpop.permute.xlu0 %2062
      %2064 = vrot.lane.b32.xlu0 %v1852, 32
      %v2065 = vpop.permute.xlu0 %2064
      %2066 = vrot.lane.b32.xlu0 %v1853, 32
      %v2067 = vpop.permute.xlu0 %2066
      %2068 = vrot.lane.b32.xlu0 %v1854, 32
      %v2069 = vpop.permute.xlu0 %2068
      %2070 = vrot.lane.b32.xlu0 %v1855, 32
      %v2071 = vpop.permute.xlu0 %2070
      %vm2072 = vcmask 261120
      %v2073 = vsel %vm2072, %v2057, %v2059
      %v2074 = vsel %vm2072, %v2059, %v2061
      %v2075 = vsel %vm2072, %v2061, %v2063
      %v2076 = vsel %vm2072, %v2063, %v2065
      %v2077 = vsel %vm2072, %v2065, %v2067
      %v2078 = vsel %vm2072, %v2067, %v2069
      %v2079 = vsel %vm2072, %v2069, %v2071
      %v2080 = vunpack.c.l.b16 %v2057
      %v2081 = vunpack.c.h.b16 %v2057
      %v2082 = vunpack.c.l.b16 0
      %v2083 = vunpack.c.h.b16 0
      %vm2084 = vcmp.ne.s32.totalorder %v2080, %v2082
      %vm2085 = vcmp.ne.s32.totalorder %v2081, %v2083
      %vm2086 = vmpackc.low %vm2085, %vm2084
      %v2087 = vunpack.c.l.b16 %v2073
      %v2088 = vunpack.c.h.b16 %v2073
      %v2089 = vunpack.c.l.b16 0
      %v2090 = vunpack.c.h.b16 0
      %vm2091 = vcmp.ne.s32.totalorder %v2087, %v2089
      %vm2092 = vcmp.ne.s32.totalorder %v2088, %v2090
      %vm2093 = vmpackc.low %vm2092, %vm2091
      %v2094 = vunpack.c.l.b16 %v2074
      %v2095 = vunpack.c.h.b16 %v2074
      %v2096 = vunpack.c.l.b16 0
      %v2097 = vunpack.c.h.b16 0
      %vm2098 = vcmp.ne.s32.totalorder %v2094, %v2096
      %vm2099 = vcmp.ne.s32.totalorder %v2095, %v2097
      %vm2100 = vmpackc.low %vm2099, %vm2098
      %v2101 = vunpack.c.l.b16 %v2075
      %v2102 = vunpack.c.h.b16 %v2075
      %v2103 = vunpack.c.l.b16 0
      %v2104 = vunpack.c.h.b16 0
      %vm2105 = vcmp.ne.s32.totalorder %v2101, %v2103
      %vm2106 = vcmp.ne.s32.totalorder %v2102, %v2104
      %vm2107 = vmpackc.low %vm2106, %vm2105
      %v2108 = vunpack.c.l.b16 %v2076
      %v2109 = vunpack.c.h.b16 %v2076
      %v2110 = vunpack.c.l.b16 0
      %v2111 = vunpack.c.h.b16 0
      %vm2112 = vcmp.ne.s32.totalorder %v2108, %v2110
      %vm2113 = vcmp.ne.s32.totalorder %v2109, %v2111
      %vm2114 = vmpackc.low %vm2113, %vm2112
      %v2115 = vunpack.c.l.b16 %v2077
      %v2116 = vunpack.c.h.b16 %v2077
      %v2117 = vunpack.c.l.b16 0
      %v2118 = vunpack.c.h.b16 0
      %vm2119 = vcmp.ne.s32.totalorder %v2115, %v2117
      %vm2120 = vcmp.ne.s32.totalorder %v2116, %v2118
      %vm2121 = vmpackc.low %vm2120, %vm2119
      %v2122 = vunpack.c.l.b16 %v2078
      %v2123 = vunpack.c.h.b16 %v2078
      %v2124 = vunpack.c.l.b16 0
      %v2125 = vunpack.c.h.b16 0
      %vm2126 = vcmp.ne.s32.totalorder %v2122, %v2124
      %vm2127 = vcmp.ne.s32.totalorder %v2123, %v2125
      %vm2128 = vmpackc.low %vm2127, %vm2126
      %v2129 = vunpack.c.l.b16 %v2079
      %v2130 = vunpack.c.h.b16 %v2079
      %v2131 = vunpack.c.l.b16 0
      %v2132 = vunpack.c.h.b16 0
      %vm2133 = vcmp.ne.s32.totalorder %v2129, %v2131
      %vm2134 = vcmp.ne.s32.totalorder %v2130, %v2132
      %vm2135 = vmpackc.low %vm2134, %vm2133
      %v2136 = vunpack.c.l.b16 %v2071
      %v2137 = vunpack.c.h.b16 %v2071
      %v2138 = vunpack.c.l.b16 0
      %v2139 = vunpack.c.h.b16 0
      %vm2140 = vcmp.ne.s32.totalorder %v2136, %v2138
      %vm2141 = vcmp.ne.s32.totalorder %v2137, %v2139
      %vm2142 = vmpackc.low %vm2141, %vm2140
      %v2143 = vsel %vm2086, %v1706, 0
      %v2144 = vsel %vm2093, %v1689, 0
      %v2145 = vsel %vm2100, %v1690, 0
      %v2146 = vsel %vm2107, %v1691, 0
      %v2147 = vsel %vm2114, %v1692, 0
      %v2148 = vsel %vm2121, %v1693, 0
      %v2149 = vsel %vm2128, %v1694, 0
      %v2150 = vsel %vm2135, %v1695, 0
      %v2151 = vsel %vm2142, %v1709, 0
      %2152 = vrot.lane.b32.xlu0 %v1952, 34
      %v2153 = vpop.permute.xlu0 %2152
      %2154 = vrot.lane.b32.xlu0 %v1953, 34
      %v2155 = vpop.permute.xlu0 %2154
      %2156 = vrot.lane.b32.xlu0 %v1954, 34
      %v2157 = vpop.permute.xlu0 %2156
      %2158 = vrot.lane.b32.xlu0 %v1955, 34
      %v2159 = vpop.permute.xlu0 %2158
      %2160 = vrot.lane.b32.xlu0 %v1956, 34
      %v2161 = vpop.permute.xlu0 %2160
      %2162 = vrot.lane.b32.xlu0 %v1957, 34
      %v2163 = vpop.permute.xlu0 %2162
      %2164 = vrot.lane.b32.xlu0 %v1958, 34
      %v2165 = vpop.permute.xlu0 %2164
      %2166 = vrot.lane.b32.xlu0 %v1959, 34
      %v2167 = vpop.permute.xlu0 %2166
      %vm2168 = vcmask 277504
      %v2169 = vsel %vm2168, %v2153, %v2155
      %v2170 = vsel %vm2168, %v2155, %v2157
      %v2171 = vsel %vm2168, %v2157, %v2159
      %v2172 = vsel %vm2168, %v2159, %v2161
      %v2173 = vsel %vm2168, %v2161, %v2163
      %v2174 = vsel %vm2168, %v2163, %v2165
      %v2175 = vsel %vm2168, %v2165, %v2167
      %v2176 = vunpack.c.l.b16 %v2153
      %v2177 = vunpack.c.h.b16 %v2153
      %v2178 = vunpack.c.l.b16 0
      %v2179 = vunpack.c.h.b16 0
      %vm2180 = vcmp.ne.s32.totalorder %v2176, %v2178
      %vm2181 = vcmp.ne.s32.totalorder %v2177, %v2179
      %vm2182 = vmpackc.low %vm2181, %vm2180
      %v2183 = vunpack.c.l.b16 %v2169
      %v2184 = vunpack.c.h.b16 %v2169
      %v2185 = vunpack.c.l.b16 0
      %v2186 = vunpack.c.h.b16 0
      %vm2187 = vcmp.ne.s32.totalorder %v2183, %v2185
      %vm2188 = vcmp.ne.s32.totalorder %v2184, %v2186
      %vm2189 = vmpackc.low %vm2188, %vm2187
      %v2190 = vunpack.c.l.b16 %v2170
      %v2191 = vunpack.c.h.b16 %v2170
      %v2192 = vunpack.c.l.b16 0
      %v2193 = vunpack.c.h.b16 0
      %vm2194 = vcmp.ne.s32.totalorder %v2190, %v2192
      %vm2195 = vcmp.ne.s32.totalorder %v2191, %v2193
      %vm2196 = vmpackc.low %vm2195, %vm2194
      %v2197 = vunpack.c.l.b16 %v2171
      %v2198 = vunpack.c.h.b16 %v2171
      %v2199 = vunpack.c.l.b16 0
      %v2200 = vunpack.c.h.b16 0
      %vm2201 = vcmp.ne.s32.totalorder %v2197, %v2199
      %vm2202 = vcmp.ne.s32.totalorder %v2198, %v2200
      %vm2203 = vmpackc.low %vm2202, %vm2201
      %v2204 = vunpack.c.l.b16 %v2172
      %v2205 = vunpack.c.h.b16 %v2172
      %v2206 = vunpack.c.l.b16 0
      %v2207 = vunpack.c.h.b16 0
      %vm2208 = vcmp.ne.s32.totalorder %v2204, %v2206
      %vm2209 = vcmp.ne.s32.totalorder %v2205, %v2207
      %vm2210 = vmpackc.low %vm2209, %vm2208
      %v2211 = vunpack.c.l.b16 %v2173
      %v2212 = vunpack.c.h.b16 %v2173
      %v2213 = vunpack.c.l.b16 0
      %v2214 = vunpack.c.h.b16 0
      %vm2215 = vcmp.ne.s32.totalorder %v2211, %v2213
      %vm2216 = vcmp.ne.s32.totalorder %v2212, %v2214
      %vm2217 = vmpackc.low %vm2216, %vm2215
      %v2218 = vunpack.c.l.b16 %v2174
      %v2219 = vunpack.c.h.b16 %v2174
      %v2220 = vunpack.c.l.b16 0
      %v2221 = vunpack.c.h.b16 0
      %vm2222 = vcmp.ne.s32.totalorder %v2218, %v2220
      %vm2223 = vcmp.ne.s32.totalorder %v2219, %v2221
      %vm2224 = vmpackc.low %vm2223, %vm2222
      %v2225 = vunpack.c.l.b16 %v2175
      %v2226 = vunpack.c.h.b16 %v2175
      %v2227 = vunpack.c.l.b16 0
      %v2228 = vunpack.c.h.b16 0
      %vm2229 = vcmp.ne.s32.totalorder %v2225, %v2227
      %vm2230 = vcmp.ne.s32.totalorder %v2226, %v2228
      %vm2231 = vmpackc.low %vm2230, %vm2229
      %v2232 = vunpack.c.l.b16 %v2167
      %v2233 = vunpack.c.h.b16 %v2167
      %v2234 = vunpack.c.l.b16 0
      %v2235 = vunpack.c.h.b16 0
      %vm2236 = vcmp.ne.s32.totalorder %v2232, %v2234
      %vm2237 = vcmp.ne.s32.totalorder %v2233, %v2235
      %vm2238 = vmpackc.low %vm2237, %vm2236
      %v2239 = vsel %vm2182, %v1706, 0
      %v2240 = vsel %vm2189, %v1689, 0
      %v2241 = vsel %vm2196, %v1690, 0
      %v2242 = vsel %vm2203, %v1691, 0
      %v2243 = vsel %vm2210, %v1692, 0
      %v2244 = vsel %vm2217, %v1693, 0
      %v2245 = vsel %vm2224, %v1694, 0
      %v2246 = vsel %vm2231, %v1695, 0
      %v2247 = vsel %vm2238, %v1709, 0
      %2248 = vrot.lane.b32.xlu0 %v1848, 64
      %v2249 = vpop.permute.xlu0 %2248
      %2250 = vrot.lane.b32.xlu0 %v1849, 64
      %v2251 = vpop.permute.xlu0 %2250
      %2252 = vrot.lane.b32.xlu0 %v1850, 64
      %v2253 = vpop.permute.xlu0 %2252
      %2254 = vrot.lane.b32.xlu0 %v1851, 64
      %v2255 = vpop.permute.xlu0 %2254
      %2256 = vrot.lane.b32.xlu0 %v1852, 64
      %v2257 = vpop.permute.xlu0 %2256
      %2258 = vrot.lane.b32.xlu0 %v1853, 64
      %v2259 = vpop.permute.xlu0 %2258
      %2260 = vrot.lane.b32.xlu0 %v1854, 64
      %v2261 = vpop.permute.xlu0 %2260
      %2262 = vrot.lane.b32.xlu0 %v1855, 64
      %v2263 = vpop.permute.xlu0 %2262
      %vm2264 = vcmask 523264
      %v2265 = vsel %vm2264, %v2249, %v2251
      %v2266 = vsel %vm2264, %v2251, %v2253
      %v2267 = vsel %vm2264, %v2253, %v2255
      %v2268 = vsel %vm2264, %v2255, %v2257
      %v2269 = vsel %vm2264, %v2257, %v2259
      %v2270 = vsel %vm2264, %v2259, %v2261
      %v2271 = vsel %vm2264, %v2261, %v2263
      %v2272 = vunpack.c.l.b16 %v2249
      %v2273 = vunpack.c.h.b16 %v2249
      %v2274 = vunpack.c.l.b16 0
      %v2275 = vunpack.c.h.b16 0
      %vm2276 = vcmp.ne.s32.totalorder %v2272, %v2274
      %vm2277 = vcmp.ne.s32.totalorder %v2273, %v2275
      %vm2278 = vmpackc.low %vm2277, %vm2276
      %v2279 = vunpack.c.l.b16 %v2265
      %v2280 = vunpack.c.h.b16 %v2265
      %v2281 = vunpack.c.l.b16 0
      %v2282 = vunpack.c.h.b16 0
      %vm2283 = vcmp.ne.s32.totalorder %v2279, %v2281
      %vm2284 = vcmp.ne.s32.totalorder %v2280, %v2282
      %vm2285 = vmpackc.low %vm2284, %vm2283
      %v2286 = vunpack.c.l.b16 %v2266
      %v2287 = vunpack.c.h.b16 %v2266
      %v2288 = vunpack.c.l.b16 0
      %v2289 = vunpack.c.h.b16 0
      %vm2290 = vcmp.ne.s32.totalorder %v2286, %v2288
      %vm2291 = vcmp.ne.s32.totalorder %v2287, %v2289
      %vm2292 = vmpackc.low %vm2291, %vm2290
      %v2293 = vunpack.c.l.b16 %v2267
      %v2294 = vunpack.c.h.b16 %v2267
      %v2295 = vunpack.c.l.b16 0
      %v2296 = vunpack.c.h.b16 0
      %vm2297 = vcmp.ne.s32.totalorder %v2293, %v2295
      %vm2298 = vcmp.ne.s32.totalorder %v2294, %v2296
      %vm2299 = vmpackc.low %vm2298, %vm2297
      %v2300 = vunpack.c.l.b16 %v2268
      %v2301 = vunpack.c.h.b16 %v2268
      %v2302 = vunpack.c.l.b16 0
      %v2303 = vunpack.c.h.b16 0
      %vm2304 = vcmp.ne.s32.totalorder %v2300, %v2302
      %vm2305 = vcmp.ne.s32.totalorder %v2301, %v2303
      %vm2306 = vmpackc.low %vm2305, %vm2304
      %v2307 = vunpack.c.l.b16 %v2269
      %v2308 = vunpack.c.h.b16 %v2269
      %v2309 = vunpack.c.l.b16 0
      %v2310 = vunpack.c.h.b16 0
      %vm2311 = vcmp.ne.s32.totalorder %v2307, %v2309
      %vm2312 = vcmp.ne.s32.totalorder %v2308, %v2310
      %vm2313 = vmpackc.low %vm2312, %vm2311
      %v2314 = vunpack.c.l.b16 %v2270
      %v2315 = vunpack.c.h.b16 %v2270
      %v2316 = vunpack.c.l.b16 0
      %v2317 = vunpack.c.h.b16 0
      %vm2318 = vcmp.ne.s32.totalorder %v2314, %v2316
      %vm2319 = vcmp.ne.s32.totalorder %v2315, %v2317
      %vm2320 = vmpackc.low %vm2319, %vm2318
      %v2321 = vunpack.c.l.b16 %v2271
      %v2322 = vunpack.c.h.b16 %v2271
      %v2323 = vunpack.c.l.b16 0
      %v2324 = vunpack.c.h.b16 0
      %vm2325 = vcmp.ne.s32.totalorder %v2321, %v2323
      %vm2326 = vcmp.ne.s32.totalorder %v2322, %v2324
      %vm2327 = vmpackc.low %vm2326, %vm2325
      %v2328 = vunpack.c.l.b16 %v2263
      %v2329 = vunpack.c.h.b16 %v2263
      %v2330 = vunpack.c.l.b16 0
      %v2331 = vunpack.c.h.b16 0
      %vm2332 = vcmp.ne.s32.totalorder %v2328, %v2330
      %vm2333 = vcmp.ne.s32.totalorder %v2329, %v2331
      %vm2334 = vmpackc.low %vm2333, %vm2332
      %v2335 = vsel %vm2278, %v1706, 0
      %v2336 = vsel %vm2285, %v1689, 0
      %v2337 = vsel %vm2292, %v1690, 0
      %v2338 = vsel %vm2299, %v1691, 0
      %v2339 = vsel %vm2306, %v1692, 0
      %v2340 = vsel %vm2313, %v1693, 0
      %v2341 = vsel %vm2320, %v1694, 0
      %v2342 = vsel %vm2327, %v1695, 0
      %v2343 = vsel %vm2334, %v1709, 0
      %2344 = vrot.lane.b32.xlu0 %v1952, 66
      %v2345 = vpop.permute.xlu0 %2344
      %2346 = vrot.lane.b32.xlu0 %v1953, 66
      %v2347 = vpop.permute.xlu0 %2346
      %2348 = vrot.lane.b32.xlu0 %v1954, 66
      %v2349 = vpop.permute.xlu0 %2348
      %2350 = vrot.lane.b32.xlu0 %v1955, 66
      %v2351 = vpop.permute.xlu0 %2350
      %2352 = vrot.lane.b32.xlu0 %v1956, 66
      %v2353 = vpop.permute.xlu0 %2352
      %2354 = vrot.lane.b32.xlu0 %v1957, 66
      %v2355 = vpop.permute.xlu0 %2354
      %2356 = vrot.lane.b32.xlu0 %v1958, 66
      %v2357 = vpop.permute.xlu0 %2356
      %2358 = vrot.lane.b32.xlu0 %v1959, 66
      %v2359 = vpop.permute.xlu0 %2358
      %vm2360 = vcmask 539648
      %v2361 = vsel %vm2360, %v2345, %v2347
      %v2362 = vsel %vm2360, %v2347, %v2349
      %v2363 = vsel %vm2360, %v2349, %v2351
      %v2364 = vsel %vm2360, %v2351, %v2353
      %v2365 = vsel %vm2360, %v2353, %v2355
      %v2366 = vsel %vm2360, %v2355, %v2357
      %v2367 = vsel %vm2360, %v2357, %v2359
      %v2368 = vunpack.c.l.b16 %v2345
      %v2369 = vunpack.c.h.b16 %v2345
      %v2370 = vunpack.c.l.b16 0
      %v2371 = vunpack.c.h.b16 0
      %vm2372 = vcmp.ne.s32.totalorder %v2368, %v2370
      %vm2373 = vcmp.ne.s32.totalorder %v2369, %v2371
      %vm2374 = vmpackc.low %vm2373, %vm2372
      %v2375 = vunpack.c.l.b16 %v2361
      %v2376 = vunpack.c.h.b16 %v2361
      %v2377 = vunpack.c.l.b16 0
      %v2378 = vunpack.c.h.b16 0
      %vm2379 = vcmp.ne.s32.totalorder %v2375, %v2377
      %vm2380 = vcmp.ne.s32.totalorder %v2376, %v2378
      %vm2381 = vmpackc.low %vm2380, %vm2379
      %v2382 = vunpack.c.l.b16 %v2362
      %v2383 = vunpack.c.h.b16 %v2362
      %v2384 = vunpack.c.l.b16 0
      %v2385 = vunpack.c.h.b16 0
      %vm2386 = vcmp.ne.s32.totalorder %v2382, %v2384
      %vm2387 = vcmp.ne.s32.totalorder %v2383, %v2385
      %vm2388 = vmpackc.low %vm2387, %vm2386
      %v2389 = vunpack.c.l.b16 %v2363
      %v2390 = vunpack.c.h.b16 %v2363
      %v2391 = vunpack.c.l.b16 0
      %v2392 = vunpack.c.h.b16 0
      %vm2393 = vcmp.ne.s32.totalorder %v2389, %v2391
      %vm2394 = vcmp.ne.s32.totalorder %v2390, %v2392
      %vm2395 = vmpackc.low %vm2394, %vm2393
      %v2396 = vunpack.c.l.b16 %v2364
      %v2397 = vunpack.c.h.b16 %v2364
      %v2398 = vunpack.c.l.b16 0
      %v2399 = vunpack.c.h.b16 0
      %vm2400 = vcmp.ne.s32.totalorder %v2396, %v2398
      %vm2401 = vcmp.ne.s32.totalorder %v2397, %v2399
      %vm2402 = vmpackc.low %vm2401, %vm2400
      %v2403 = vunpack.c.l.b16 %v2365
      %v2404 = vunpack.c.h.b16 %v2365
      %v2405 = vunpack.c.l.b16 0
      %v2406 = vunpack.c.h.b16 0
      %vm2407 = vcmp.ne.s32.totalorder %v2403, %v2405
      %vm2408 = vcmp.ne.s32.totalorder %v2404, %v2406
      %vm2409 = vmpackc.low %vm2408, %vm2407
      %v2410 = vunpack.c.l.b16 %v2366
      %v2411 = vunpack.c.h.b16 %v2366
      %v2412 = vunpack.c.l.b16 0
      %v2413 = vunpack.c.h.b16 0
      %vm2414 = vcmp.ne.s32.totalorder %v2410, %v2412
      %vm2415 = vcmp.ne.s32.totalorder %v2411, %v2413
      %vm2416 = vmpackc.low %vm2415, %vm2414
      %v2417 = vunpack.c.l.b16 %v2367
      %v2418 = vunpack.c.h.b16 %v2367
      %v2419 = vunpack.c.l.b16 0
      %v2420 = vunpack.c.h.b16 0
      %vm2421 = vcmp.ne.s32.totalorder %v2417, %v2419
      %vm2422 = vcmp.ne.s32.totalorder %v2418, %v2420
      %vm2423 = vmpackc.low %vm2422, %vm2421
      %v2424 = vunpack.c.l.b16 %v2359
      %v2425 = vunpack.c.h.b16 %v2359
      %v2426 = vunpack.c.l.b16 0
      %v2427 = vunpack.c.h.b16 0
      %vm2428 = vcmp.ne.s32.totalorder %v2424, %v2426
      %vm2429 = vcmp.ne.s32.totalorder %v2425, %v2427
      %vm2430 = vmpackc.low %vm2429, %vm2428
      %v2431 = vsel %vm2374, %v1706, 0
      %v2432 = vsel %vm2381, %v1689, 0
      %v2433 = vsel %vm2388, %v1690, 0
      %v2434 = vsel %vm2395, %v1691, 0
      %v2435 = vsel %vm2402, %v1692, 0
      %v2436 = vsel %vm2409, %v1693, 0
      %v2437 = vsel %vm2416, %v1694, 0
      %v2438 = vsel %vm2423, %v1695, 0
      %v2439 = vsel %vm2430, %v1709, 0
      %v2442 = vrot.slane %v1706, 4
      %v2443 = vrot.slane %v1689, 4
      %v2444 = vrot.slane %v1690, 4
      %v2445 = vrot.slane %v1691, 4
      %v2446 = vrot.slane %v1692, 4
      %v2447 = vrot.slane %v1693, 4
      %v2448 = vrot.slane %v1694, 4
      %v2449 = vrot.slane %v1695, 4
      %v2450 = vrot.slane %v1709, 4
      %2451 = vrot.lane.b32.xlu0 %v2442, 127
      %v2452 = vpop.permute.xlu0 %2451
      %2453 = vrot.lane.b32.xlu0 %v2443, 127
      %v2454 = vpop.permute.xlu0 %2453
      %2455 = vrot.lane.b32.xlu0 %v2444, 127
      %v2456 = vpop.permute.xlu0 %2455
      %2457 = vrot.lane.b32.xlu0 %v2445, 127
      %v2458 = vpop.permute.xlu0 %2457
      %2459 = vrot.lane.b32.xlu0 %v2446, 127
      %v2460 = vpop.permute.xlu0 %2459
      %2461 = vrot.lane.b32.xlu0 %v2447, 127
      %v2462 = vpop.permute.xlu0 %2461
      %2463 = vrot.lane.b32.xlu0 %v2448, 127
      %v2464 = vpop.permute.xlu0 %2463
      %2465 = vrot.lane.b32.xlu0 %v2449, 127
      %v2466 = vpop.permute.xlu0 %2465
      %2467 = vrot.lane.b32.xlu0 %v2450, 127
      %v2468 = vpop.permute.xlu0 %2467
      %vm2469 = vcmask 1039360
      %v2470 = vsel %vm2469, %v2452, %v2454
      %v2471 = vsel %vm2469, %v2454, %v2456
      %v2472 = vsel %vm2469, %v2456, %v2458
      %v2473 = vsel %vm2469, %v2458, %v2460
      %v2474 = vsel %vm2469, %v2460, %v2462
      %v2475 = vsel %vm2469, %v2462, %v2464
      %v2476 = vsel %vm2469, %v2464, %v2466
      %v2477 = vsel %vm2469, %v2466, %v2468
      %2487 = vrot.lane.b32.xlu0 %v2047, 126
      %v2488 = vpop.permute.xlu0 %2487
      %2489 = vrot.lane.b32.xlu0 %v2048, 126
      %v2490 = vpop.permute.xlu0 %2489
      %2491 = vrot.lane.b32.xlu0 %v2049, 126
      %v2492 = vpop.permute.xlu0 %2491
      %2493 = vrot.lane.b32.xlu0 %v2050, 126
      %v2494 = vpop.permute.xlu0 %2493
      %2495 = vrot.lane.b32.xlu0 %v2051, 126
      %v2496 = vpop.permute.xlu0 %2495
      %2497 = vrot.lane.b32.xlu0 %v2052, 126
      %v2498 = vpop.permute.xlu0 %2497
      %2499 = vrot.lane.b32.xlu0 %v2053, 126
      %v2500 = vpop.permute.xlu0 %2499
      %2501 = vrot.lane.b32.xlu0 %v2054, 126
      %v2502 = vpop.permute.xlu0 %2501
      %2503 = vrot.lane.b32.xlu0 %v2055, 126
      %v2504 = vpop.permute.xlu0 %2503
      %vm2505 = vcmask 1031168
      %v2506 = vsel %vm2505, %v2488, %v2490
      %v2507 = vsel %vm2505, %v2490, %v2492
      %v2508 = vsel %vm2505, %v2492, %v2494
      %v2509 = vsel %vm2505, %v2494, %v2496
      %v2510 = vsel %vm2505, %v2496, %v2498
      %v2511 = vsel %vm2505, %v2498, %v2500
      %v2512 = vsel %vm2505, %v2500, %v2502
      %v2513 = vsel %vm2505, %v2502, %v2504
      %v2523 = vrot.slane %v2143, 4
      %v2524 = vrot.slane %v2144, 4
      %v2525 = vrot.slane %v2145, 4
      %v2526 = vrot.slane %v2146, 4
      %v2527 = vrot.slane %v2147, 4
      %v2528 = vrot.slane %v2148, 4
      %v2529 = vrot.slane %v2149, 4
      %v2530 = vrot.slane %v2150, 4
      %v2531 = vrot.slane %v2151, 4
      %2532 = vrot.lane.b32.xlu0 %v2523, 96
      %v2533 = vpop.permute.xlu0 %2532
      %2534 = vrot.lane.b32.xlu0 %v2524, 96
      %v2535 = vpop.permute.xlu0 %2534
      %2536 = vrot.lane.b32.xlu0 %v2525, 96
      %v2537 = vpop.permute.xlu0 %2536
      %2538 = vrot.lane.b32.xlu0 %v2526, 96
      %v2539 = vpop.permute.xlu0 %2538
      %2540 = vrot.lane.b32.xlu0 %v2527, 96
      %v2541 = vpop.permute.xlu0 %2540
      %2542 = vrot.lane.b32.xlu0 %v2528, 96
      %v2543 = vpop.permute.xlu0 %2542
      %2544 = vrot.lane.b32.xlu0 %v2529, 96
      %v2545 = vpop.permute.xlu0 %2544
      %2546 = vrot.lane.b32.xlu0 %v2530, 96
      %v2547 = vpop.permute.xlu0 %2546
      %2548 = vrot.lane.b32.xlu0 %v2531, 96
      %v2549 = vpop.permute.xlu0 %2548
      %vm2550 = vcmask 785408
      %v2551 = vsel %vm2550, %v2533, %v2535
      %v2552 = vsel %vm2550, %v2535, %v2537
      %v2553 = vsel %vm2550, %v2537, %v2539
      %v2554 = vsel %vm2550, %v2539, %v2541
      %v2555 = vsel %vm2550, %v2541, %v2543
      %v2556 = vsel %vm2550, %v2543, %v2545
      %v2557 = vsel %vm2550, %v2545, %v2547
      %v2558 = vsel %vm2550, %v2547, %v2549
      %2559 = vrot.lane.b32.xlu0 %v1706, 95
      %v2560 = vpop.permute.xlu0 %2559
      %2561 = vrot.lane.b32.xlu0 %v1689, 95
      %v2562 = vpop.permute.xlu0 %2561
      %2563 = vrot.lane.b32.xlu0 %v1690, 95
      %v2564 = vpop.permute.xlu0 %2563
      %2565 = vrot.lane.b32.xlu0 %v1691, 95
      %v2566 = vpop.permute.xlu0 %2565
      %2567 = vrot.lane.b32.xlu0 %v1692, 95
      %v2568 = vpop.permute.xlu0 %2567
      %2569 = vrot.lane.b32.xlu0 %v1693, 95
      %v2570 = vpop.permute.xlu0 %2569
      %2571 = vrot.lane.b32.xlu0 %v1694, 95
      %v2572 = vpop.permute.xlu0 %2571
      %2573 = vrot.lane.b32.xlu0 %v1695, 95
      %v2574 = vpop.permute.xlu0 %2573
      %2575 = vrot.lane.b32.xlu0 %v1709, 95
      %v2576 = vpop.permute.xlu0 %2575
      %vm2577 = vcmask 777216
      %v2578 = vsel %vm2577, %v2560, %v2562
      %v2579 = vsel %vm2577, %v2562, %v2564
      %v2580 = vsel %vm2577, %v2564, %v2566
      %v2581 = vsel %vm2577, %v2566, %v2568
      %v2582 = vsel %vm2577, %v2568, %v2570
      %v2583 = vsel %vm2577, %v2570, %v2572
      %v2584 = vsel %vm2577, %v2572, %v2574
      %v2585 = vsel %vm2577, %v2574, %v2576
      %v2595 = vrot.slane %v2239, 4
      %v2596 = vrot.slane %v2240, 4
      %v2597 = vrot.slane %v2241, 4
      %v2598 = vrot.slane %v2242, 4
      %v2599 = vrot.slane %v2243, 4
      %v2600 = vrot.slane %v2244, 4
      %v2601 = vrot.slane %v2245, 4
      %v2602 = vrot.slane %v2246, 4
      %v2603 = vrot.slane %v2247, 4
      %2604 = vrot.lane.b32.xlu0 %v2595, 94
      %v2605 = vpop.permute.xlu0 %2604
      %2606 = vrot.lane.b32.xlu0 %v2596, 94
      %v2607 = vpop.permute.xlu0 %2606
      %2608 = vrot.lane.b32.xlu0 %v2597, 94
      %v2609 = vpop.permute.xlu0 %2608
      %2610 = vrot.lane.b32.xlu0 %v2598, 94
      %v2611 = vpop.permute.xlu0 %2610
      %2612 = vrot.lane.b32.xlu0 %v2599, 94
      %v2613 = vpop.permute.xlu0 %2612
      %2614 = vrot.lane.b32.xlu0 %v2600, 94
      %v2615 = vpop.permute.xlu0 %2614
      %2616 = vrot.lane.b32.xlu0 %v2601, 94
      %v2617 = vpop.permute.xlu0 %2616
      %2618 = vrot.lane.b32.xlu0 %v2602, 94
      %v2619 = vpop.permute.xlu0 %2618
      %2620 = vrot.lane.b32.xlu0 %v2603, 94
      %v2621 = vpop.permute.xlu0 %2620
      %vm2622 = vcmask 769024
      %v2623 = vsel %vm2622, %v2605, %v2607
      %v2624 = vsel %vm2622, %v2607, %v2609
      %v2625 = vsel %vm2622, %v2609, %v2611
      %v2626 = vsel %vm2622, %v2611, %v2613
      %v2627 = vsel %vm2622, %v2613, %v2615
      %v2628 = vsel %vm2622, %v2615, %v2617
      %v2629 = vsel %vm2622, %v2617, %v2619
      %v2630 = vsel %vm2622, %v2619, %v2621
      %2640 = vrot.lane.b32.xlu0 %v2335, 64
      %v2641 = vpop.permute.xlu0 %2640
      %2642 = vrot.lane.b32.xlu0 %v2336, 64
      %v2643 = vpop.permute.xlu0 %2642
      %2644 = vrot.lane.b32.xlu0 %v2337, 64
      %v2645 = vpop.permute.xlu0 %2644
      %2646 = vrot.lane.b32.xlu0 %v2338, 64
      %v2647 = vpop.permute.xlu0 %2646
      %2648 = vrot.lane.b32.xlu0 %v2339, 64
      %v2649 = vpop.permute.xlu0 %2648
      %2650 = vrot.lane.b32.xlu0 %v2340, 64
      %v2651 = vpop.permute.xlu0 %2650
      %2652 = vrot.lane.b32.xlu0 %v2341, 64
      %v2653 = vpop.permute.xlu0 %2652
      %2654 = vrot.lane.b32.xlu0 %v2342, 64
      %v2655 = vpop.permute.xlu0 %2654
      %2656 = vrot.lane.b32.xlu0 %v2343, 64
      %v2657 = vpop.permute.xlu0 %2656
      %v2658 = vsel %vm2264, %v2641, %v2643
      %v2659 = vsel %vm2264, %v2643, %v2645
      %v2660 = vsel %vm2264, %v2645, %v2647
      %v2661 = vsel %vm2264, %v2647, %v2649
      %v2662 = vsel %vm2264, %v2649, %v2651
      %v2663 = vsel %vm2264, %v2651, %v2653
      %v2664 = vsel %vm2264, %v2653, %v2655
      %v2665 = vsel %vm2264, %v2655, %v2657
      %2666 = vrot.lane.b32.xlu0 %v2442, 63
      %v2667 = vpop.permute.xlu0 %2666
      %2668 = vrot.lane.b32.xlu0 %v2443, 63
      %v2669 = vpop.permute.xlu0 %2668
      %2670 = vrot.lane.b32.xlu0 %v2444, 63
      %v2671 = vpop.permute.xlu0 %2670
      %2672 = vrot.lane.b32.xlu0 %v2445, 63
      %v2673 = vpop.permute.xlu0 %2672
      %2674 = vrot.lane.b32.xlu0 %v2446, 63
      %v2675 = vpop.permute.xlu0 %2674
      %2676 = vrot.lane.b32.xlu0 %v2447, 63
      %v2677 = vpop.permute.xlu0 %2676
      %2678 = vrot.lane.b32.xlu0 %v2448, 63
      %v2679 = vpop.permute.xlu0 %2678
      %2680 = vrot.lane.b32.xlu0 %v2449, 63
      %v2681 = vpop.permute.xlu0 %2680
      %2682 = vrot.lane.b32.xlu0 %v2450, 63
      %v2683 = vpop.permute.xlu0 %2682
      %vm2684 = vcmask 515072
      %v2685 = vsel %vm2684, %v2667, %v2669
      %v2686 = vsel %vm2684, %v2669, %v2671
      %v2687 = vsel %vm2684, %v2671, %v2673
      %v2688 = vsel %vm2684, %v2673, %v2675
      %v2689 = vsel %vm2684, %v2675, %v2677
      %v2690 = vsel %vm2684, %v2677, %v2679
      %v2691 = vsel %vm2684, %v2679, %v2681
      %v2692 = vsel %vm2684, %v2681, %v2683
      %2702 = vrot.lane.b32.xlu0 %v2431, 62
      %v2703 = vpop.permute.xlu0 %2702
      %2704 = vrot.lane.b32.xlu0 %v2432, 62
      %v2705 = vpop.permute.xlu0 %2704
      %2706 = vrot.lane.b32.xlu0 %v2433, 62
      %v2707 = vpop.permute.xlu0 %2706
      %2708 = vrot.lane.b32.xlu0 %v2434, 62
      %v2709 = vpop.permute.xlu0 %2708
      %2710 = vrot.lane.b32.xlu0 %v2435, 62
      %v2711 = vpop.permute.xlu0 %2710
      %2712 = vrot.lane.b32.xlu0 %v2436, 62
      %v2713 = vpop.permute.xlu0 %2712
      %2714 = vrot.lane.b32.xlu0 %v2437, 62
      %v2715 = vpop.permute.xlu0 %2714
      %2716 = vrot.lane.b32.xlu0 %v2438, 62
      %v2717 = vpop.permute.xlu0 %2716
      %2718 = vrot.lane.b32.xlu0 %v2439, 62
      %v2719 = vpop.permute.xlu0 %2718
      %vm2720 = vcmask 506880
      %v2721 = vsel %vm2720, %v2703, %v2705
      %v2722 = vsel %vm2720, %v2705, %v2707
      %v2723 = vsel %vm2720, %v2707, %v2709
      %v2724 = vsel %vm2720, %v2709, %v2711
      %v2725 = vsel %vm2720, %v2711, %v2713
      %v2726 = vsel %vm2720, %v2713, %v2715
      %v2727 = vsel %vm2720, %v2715, %v2717
      %v2728 = vsel %vm2720, %v2717, %v2719
      %v2731 = vsel %vm863, %v1912, %v2470
      %v2735 = vsel %vm863, %v1913, %v2471
      %v2739 = vsel %vm863, %v1914, %v2472
      %v2743 = vsel %vm863, %v1915, %v2473
      %v2747 = vsel %vm863, %v1916, %v2474
      %v2751 = vsel %vm863, %v1917, %v2475
      %v2755 = vsel %vm863, %v1918, %v2476
      %v2759 = vsel %vm863, %v1919, %v2477
      %v2763 = vsel %vm863, %v2506, %v2551
      %v2767 = vsel %vm863, %v2507, %v2552
      %v2771 = vsel %vm863, %v2508, %v2553
      %v2775 = vsel %vm863, %v2509, %v2554
      %v2779 = vsel %vm863, %v2510, %v2555
      %v2783 = vsel %vm863, %v2511, %v2556
      %v2787 = vsel %vm863, %v2512, %v2557
      %v2791 = vsel %vm863, %v2513, %v2558
      %v2795 = vsel %vm863, %v2578, %v2623
      %v2799 = vsel %vm863, %v2579, %v2624
      %v2803 = vsel %vm863, %v2580, %v2625
      %v2807 = vsel %vm863, %v2581, %v2626
      %v2811 = vsel %vm863, %v2582, %v2627
      %v2815 = vsel %vm863, %v2583, %v2628
      %v2819 = vsel %vm863, %v2584, %v2629
      %v2823 = vsel %vm863, %v2585, %v2630
      %v2827 = vsel %vm863, %v2658, %v2685
      %v2831 = vsel %vm863, %v2659, %v2686
      %v2835 = vsel %vm863, %v2660, %v2687
      %v2839 = vsel %vm863, %v2661, %v2688
      %v2843 = vsel %vm863, %v2662, %v2689
      %v2847 = vsel %vm863, %v2663, %v2690
      %v2851 = vsel %vm863, %v2664, %v2691
      %v2855 = vsel %vm863, %v2665, %v2692
      %v2857 = vld [vmem:[%s12] sm:$0xf]
      %v2858 = vld [vmem:[%s13] sm:$0xff]
      %2860 = vset.pattern.permute.xlu0 0
      %2861 = vperm.xlu0 %2860, %v2858
      %v2862 = vpop.permute.xlu0 %2861
      %vm2864 = vcmask 588800
      %v2866 = vsel %vm2864, %v2857, 0
      %v2869 = vsel %vm863, %v2721, 0
      %v2872 = vsel %vm863, %v2722, 0
      %v2875 = vsel %vm863, %v2723, 0
      %v2878 = vsel %vm863, %v2724, 0
      %v2881 = vsel %vm863, %v2725, 0
      %v2884 = vsel %vm863, %v2726, 0
      %v2887 = vsel %vm863, %v2727, 0
      %v2890 = vsel %vm863, %v2728, 0
      %2892 = vmatpush.bf16.msra.mxu0 0
      %2893 = vmatpush.bf16.msra.mxu0 0
      %2894 = vmatpush.bf16.msra.mxu0 0
      %2895 = vmatpush.bf16.msra.mxu0 %v2869
      %2896 = vmatpush.bf16.msra.mxu0 %v2827
      %2897 = vmatpush.bf16.msra.mxu0 %v2795
      %2898 = vmatpush.bf16.msra.mxu0 %v2763
      %2899 = vmatpush.bf16.msra.mxu0 %v2731
      %2900 = vmatmul.bf16.gmra.mxu0 %v2866
      %v2901 = vpop.f32.mrf.mxu0
      %v2902 = vadd.f32 %v2862, %v2901
      %v2903 = vpop.f32.mrf.mxu0
      %2904 = vdwg.mxu0
      %2905 = vmatpush.bf16.msra.mxu0 0
      %2906 = vmatpush.bf16.msra.mxu0 0
      %2907 = vmatpush.bf16.msra.mxu0 0
      %2908 = vmatpush.bf16.msra.mxu0 %v2872
      %2909 = vmatpush.bf16.msra.mxu0 %v2831
      %2910 = vmatpush.bf16.msra.mxu0 %v2799
      %2911 = vmatpush.bf16.msra.mxu0 %v2767
      %2912 = vmatpush.bf16.msra.mxu0 %v2735
      %2913 = vmatmul.bf16.gmra.mxu0 %v2866
      %v2914 = vpop.f32.mrf.mxu0
      %v2915 = vadd.f32 %v2862, %v2914
      %v2916 = vpop.f32.mrf.mxu0
      %2917 = vdwg.mxu0
      %2918 = vmatpush.bf16.msra.mxu0 0
      %2919 = vmatpush.bf16.msra.mxu0 0
      %2920 = vmatpush.bf16.msra.mxu0 0
      %2921 = vmatpush.bf16.msra.mxu0 %v2875
      %2922 = vmatpush.bf16.msra.mxu0 %v2835
      %2923 = vmatpush.bf16.msra.mxu0 %v2803
      %2924 = vmatpush.bf16.msra.mxu0 %v2771
      %2925 = vmatpush.bf16.msra.mxu0 %v2739
      %2926 = vmatmul.bf16.gmra.mxu0 %v2866
      %v2927 = vpop.f32.mrf.mxu0
      %v2928 = vadd.f32 %v2862, %v2927
      %v2929 = vpop.f32.mrf.mxu0
      %2930 = vdwg.mxu0
      %2931 = vmatpush.bf16.msra.mxu0 0
      %2932 = vmatpush.bf16.msra.mxu0 0
      %2933 = vmatpush.bf16.msra.mxu0 0
      %2934 = vmatpush.bf16.msra.mxu0 %v2878
      %2935 = vmatpush.bf16.msra.mxu0 %v2839
      %2936 = vmatpush.bf16.msra.mxu0 %v2807
      %2937 = vmatpush.bf16.msra.mxu0 %v2775
      %2938 = vmatpush.bf16.msra.mxu0 %v2743
      %2939 = vmatmul.bf16.gmra.mxu0 %v2866
      %v2940 = vpop.f32.mrf.mxu0
      %v2941 = vadd.f32 %v2862, %v2940
      %v2942 = vpop.f32.mrf.mxu0
      %2943 = vdwg.mxu0
      %2944 = vmatpush.bf16.msra.mxu0 0
      %2945 = vmatpush.bf16.msra.mxu0 0
      %2946 = vmatpush.bf16.msra.mxu0 0
      %2947 = vmatpush.bf16.msra.mxu0 %v2881
      %2948 = vmatpush.bf16.msra.mxu0 %v2843
      %2949 = vmatpush.bf16.msra.mxu0 %v2811
      %2950 = vmatpush.bf16.msra.mxu0 %v2779
      %2951 = vmatpush.bf16.msra.mxu0 %v2747
      %2952 = vmatmul.bf16.gmra.mxu0 %v2866
      %v2953 = vpop.f32.mrf.mxu0
      %v2954 = vadd.f32 %v2862, %v2953
      %v2955 = vpop.f32.mrf.mxu0
      %2956 = vdwg.mxu0
      %2957 = vmatpush.bf16.msra.mxu0 0
      %2958 = vmatpush.bf16.msra.mxu0 0
      %2959 = vmatpush.bf16.msra.mxu0 0
      %2960 = vmatpush.bf16.msra.mxu0 %v2884
      %2961 = vmatpush.bf16.msra.mxu0 %v2847
      %2962 = vmatpush.bf16.msra.mxu0 %v2815
      %2963 = vmatpush.bf16.msra.mxu0 %v2783
      %2964 = vmatpush.bf16.msra.mxu0 %v2751
      %2965 = vmatmul.bf16.gmra.mxu0 %v2866
      %v2966 = vpop.f32.mrf.mxu0
      %v2967 = vadd.f32 %v2862, %v2966
      %v2968 = vpop.f32.mrf.mxu0
      %2969 = vdwg.mxu0
      %2970 = vmatpush.bf16.msra.mxu0 0
      %2971 = vmatpush.bf16.msra.mxu0 0
      %2972 = vmatpush.bf16.msra.mxu0 0
      %2973 = vmatpush.bf16.msra.mxu0 %v2887
      %2974 = vmatpush.bf16.msra.mxu0 %v2851
      %2975 = vmatpush.bf16.msra.mxu0 %v2819
      %2976 = vmatpush.bf16.msra.mxu0 %v2787
      %2977 = vmatpush.bf16.msra.mxu0 %v2755
      %2978 = vmatmul.bf16.gmra.mxu0 %v2866
      %v2979 = vpop.f32.mrf.mxu0
      %v2980 = vadd.f32 %v2862, %v2979
      %v2981 = vpop.f32.mrf.mxu0
      %2982 = vdwg.mxu0
      %2983 = vmatpush.bf16.msra.mxu0 0
      %2984 = vmatpush.bf16.msra.mxu0 0
      %2985 = vmatpush.bf16.msra.mxu0 0
      %2986 = vmatpush.bf16.msra.mxu0 %v2890
      %2987 = vmatpush.bf16.msra.mxu0 %v2855
      %2988 = vmatpush.bf16.msra.mxu0 %v2823
      %2989 = vmatpush.bf16.msra.mxu0 %v2791
      %2990 = vmatpush.bf16.msra.mxu0 %v2759
      %2991 = vmatmul.bf16.gmra.mxu0 %v2866
      %v2992 = vpop.f32.mrf.mxu0
      %v2993 = vadd.f32 %v2862, %v2992
      %v2994 = vpop.f32.mrf.mxu0
      %2995 = vdwg.mxu0
      %v2996 = vadd.f32 %v2902, %v2915
      %v2997 = vadd.f32 %v2996, %v2928
      %v2998 = vadd.f32 %v2997, %v2941
      %v2999 = vadd.f32 %v2998, %v2954
      %v3000 = vadd.f32 %v2999, %v2967
      %v3001 = vadd.f32 %v3000, %v2980
      %v3002 = vadd.f32 %v3001, %v2993
      %3003 = vadd.xlane.f32.xlu0 %v3002
      %v3004 = vpop.xlane.xlu0 %3003
      %v3005 = vmul.f32 %v3004, %v1593
      %v3006 = vsub.f32 %v2902, %v3005
      %v3007 = vsub.f32 %v2915, %v3005
      %v3008 = vsub.f32 %v2928, %v3005
      %v3009 = vsub.f32 %v2941, %v3005
      %v3010 = vsub.f32 %v2954, %v3005
      %v3011 = vsub.f32 %v2967, %v3005
      %v3012 = vsub.f32 %v2980, %v3005
      %v3013 = vsub.f32 %v2993, %v3005
      %v3014 = vmul.f32 %v3006, %v3006
      %v3015 = vmul.f32 %v3007, %v3007
      %v3016 = vmul.f32 %v3008, %v3008
      %v3017 = vmul.f32 %v3009, %v3009
      %v3018 = vmul.f32 %v3010, %v3010
      %v3019 = vmul.f32 %v3011, %v3011
      %v3020 = vmul.f32 %v3012, %v3012
      %v3021 = vmul.f32 %v3013, %v3013
      %v3022 = vadd.f32 %v3014, %v3015
      %v3023 = vadd.f32 %v3022, %v3016
      %v3024 = vadd.f32 %v3023, %v3017
      %v3025 = vadd.f32 %v3024, %v3018
      %v3026 = vadd.f32 %v3025, %v3019
      %v3027 = vadd.f32 %v3026, %v3020
      %v3028 = vadd.f32 %v3027, %v3021
      %3029 = vadd.xlane.f32.xlu0 %v3028
      %v3030 = vpop.xlane.xlu0 %3029
      %v3031 = vmul.f32 %v3030, %v1593
      %v3032 = vadd.f32 %v3031, 1e-05
      %v3033 = vrsqrt.pop %v3032
      %v3034 = vmul.f32 %v3033, %v3032
      %v3035 = vmul.f32 %v3034, %v3033
      %v3036 = vmul.f32 0.5, %v3035
      %v3037 = vsub.f32 1.5, %v3036
      %v3038 = vmul.f32 %v3033, %v3037
      %vm3039 = vweird.f32 %v3032
      %vm3040 = vweird.f32 %v3033
      %vm3041 = vmor %vm3039, %vm3040
      %v3042 = vsel %vm3041, %v3033, %v3038
      %v3043 = vmul.f32 %v3006, %v3042
      %v3044 = vmul.f32 %v3007, %v3042
      %v3045 = vmul.f32 %v3008, %v3042
      %v3046 = vmul.f32 %v3009, %v3042
      %v3047 = vmul.f32 %v3010, %v3042
      %v3048 = vmul.f32 %v3011, %v3042
      %v3049 = vmul.f32 %v3012, %v3042
      %v3050 = vmul.f32 %v3013, %v3042
      %v3051 = vmax.f32 %v3043, 0.0
      %v3052 = vmax.f32 %v3044, 0.0
      %v3053 = vmax.f32 %v3045, 0.0
      %v3054 = vmax.f32 %v3046, 0.0
      %v3055 = vmax.f32 %v3047, 0.0
      %v3056 = vmax.f32 %v3048, 0.0
      %v3057 = vmax.f32 %v3049, 0.0
      %v3058 = vmax.f32 %v3050, 0.0
      %v3059 = vpack.c.bf16 %v3051, %v3051
      %v3060 = vpack.c.bf16 %v3052, %v3052
      %v3061 = vpack.c.bf16 %v3053, %v3053
      %v3062 = vpack.c.bf16 %v3054, %v3054
      %v3063 = vpack.c.bf16 %v3055, %v3055
      %v3064 = vpack.c.bf16 %v3056, %v3056
      %v3065 = vpack.c.bf16 %v3057, %v3057
      %v3066 = vpack.c.bf16 %v3058, %v3058
      %v3067 = vld [vmem:[%s14] sm:$0xf]
      %v3068 = vld [vmem:[%s15] sm:$0xff]
      %3070 = vset.pattern.permute.xlu0 0
      %3071 = vperm.xlu0 %3070, %v3068
      %v3072 = vpop.permute.xlu0 %3071
      %v3075 = vsel %vm1446, %v3067, 0
      %v3078 = vsel %vm863, %v3059, 0
      %v3081 = vsel %vm863, %v3060, 0
      %v3084 = vsel %vm863, %v3061, 0
      %v3087 = vsel %vm863, %v3062, 0
      %v3090 = vsel %vm863, %v3063, 0
      %v3093 = vsel %vm863, %v3064, 0
      %v3096 = vsel %vm863, %v3065, 0
      %v3099 = vsel %vm863, %v3066, 0
      %3101 = vmatpush.bf16.msra.mxu0 0
      %3102 = vmatpush.bf16.msra.mxu0 0
      %3103 = vmatpush.bf16.msra.mxu0 0
      %3104 = vmatpush.bf16.msra.mxu0 0
      %3105 = vmatpush.bf16.msra.mxu0 0
      %3106 = vmatpush.bf16.msra.mxu0 0
      %3107 = vmatpush.bf16.msra.mxu0 0
      %3108 = vmatpush.bf16.msra.mxu0 %v3078
      %3109 = vmatmul.bf16.gmra.mxu0 %v3075
      %v3110 = vpop.f32.mrf.mxu0
      %v3111 = vadd.f32 %v3072, %v3110
      %v3112 = vpop.f32.mrf.mxu0
      %3113 = vdwg.mxu0
      %3114 = vmatpush.bf16.msra.mxu0 0
      %3115 = vmatpush.bf16.msra.mxu0 0
      %3116 = vmatpush.bf16.msra.mxu0 0
      %3117 = vmatpush.bf16.msra.mxu0 0
      %3118 = vmatpush.bf16.msra.mxu0 0
      %3119 = vmatpush.bf16.msra.mxu0 0
      %3120 = vmatpush.bf16.msra.mxu0 0
      %3121 = vmatpush.bf16.msra.mxu0 %v3081
      %3122 = vmatmul.bf16.gmra.mxu0 %v3075
      %v3123 = vpop.f32.mrf.mxu0
      %v3124 = vadd.f32 %v3072, %v3123
      %v3125 = vpop.f32.mrf.mxu0
      %3126 = vdwg.mxu0
      %3127 = vmatpush.bf16.msra.mxu0 0
      %3128 = vmatpush.bf16.msra.mxu0 0
      %3129 = vmatpush.bf16.msra.mxu0 0
      %3130 = vmatpush.bf16.msra.mxu0 0
      %3131 = vmatpush.bf16.msra.mxu0 0
      %3132 = vmatpush.bf16.msra.mxu0 0
      %3133 = vmatpush.bf16.msra.mxu0 0
      %3134 = vmatpush.bf16.msra.mxu0 %v3084
      %3135 = vmatmul.bf16.gmra.mxu0 %v3075
      %v3136 = vpop.f32.mrf.mxu0
      %v3137 = vadd.f32 %v3072, %v3136
      %v3138 = vpop.f32.mrf.mxu0
      %3139 = vdwg.mxu0
      %3140 = vmatpush.bf16.msra.mxu0 0
      %3141 = vmatpush.bf16.msra.mxu0 0
      %3142 = vmatpush.bf16.msra.mxu0 0
      %3143 = vmatpush.bf16.msra.mxu0 0
      %3144 = vmatpush.bf16.msra.mxu0 0
      %3145 = vmatpush.bf16.msra.mxu0 0
      %3146 = vmatpush.bf16.msra.mxu0 0
      %3147 = vmatpush.bf16.msra.mxu0 %v3087
      %3148 = vmatmul.bf16.gmra.mxu0 %v3075
      %v3149 = vpop.f32.mrf.mxu0
      %v3150 = vadd.f32 %v3072, %v3149
      %v3151 = vpop.f32.mrf.mxu0
      %3152 = vdwg.mxu0
      %3153 = vmatpush.bf16.msra.mxu0 0
      %3154 = vmatpush.bf16.msra.mxu0 0
      %3155 = vmatpush.bf16.msra.mxu0 0
      %3156 = vmatpush.bf16.msra.mxu0 0
      %3157 = vmatpush.bf16.msra.mxu0 0
      %3158 = vmatpush.bf16.msra.mxu0 0
      %3159 = vmatpush.bf16.msra.mxu0 0
      %3160 = vmatpush.bf16.msra.mxu0 %v3090
      %3161 = vmatmul.bf16.gmra.mxu0 %v3075
      %v3162 = vpop.f32.mrf.mxu0
      %v3163 = vadd.f32 %v3072, %v3162
      %v3164 = vpop.f32.mrf.mxu0
      %3165 = vdwg.mxu0
      %3166 = vmatpush.bf16.msra.mxu0 0
      %3167 = vmatpush.bf16.msra.mxu0 0
      %3168 = vmatpush.bf16.msra.mxu0 0
      %3169 = vmatpush.bf16.msra.mxu0 0
      %3170 = vmatpush.bf16.msra.mxu0 0
      %3171 = vmatpush.bf16.msra.mxu0 0
      %3172 = vmatpush.bf16.msra.mxu0 0
      %3173 = vmatpush.bf16.msra.mxu0 %v3093
      %3174 = vmatmul.bf16.gmra.mxu0 %v3075
      %v3175 = vpop.f32.mrf.mxu0
      %v3176 = vadd.f32 %v3072, %v3175
      %v3177 = vpop.f32.mrf.mxu0
      %3178 = vdwg.mxu0
      %3179 = vmatpush.bf16.msra.mxu0 0
      %3180 = vmatpush.bf16.msra.mxu0 0
      %3181 = vmatpush.bf16.msra.mxu0 0
      %3182 = vmatpush.bf16.msra.mxu0 0
      %3183 = vmatpush.bf16.msra.mxu0 0
      %3184 = vmatpush.bf16.msra.mxu0 0
      %3185 = vmatpush.bf16.msra.mxu0 0
      %3186 = vmatpush.bf16.msra.mxu0 %v3096
      %3187 = vmatmul.bf16.gmra.mxu0 %v3075
      %v3188 = vpop.f32.mrf.mxu0
      %v3189 = vadd.f32 %v3072, %v3188
      %v3190 = vpop.f32.mrf.mxu0
      %3191 = vdwg.mxu0
      %3192 = vmatpush.bf16.msra.mxu0 0
      %3193 = vmatpush.bf16.msra.mxu0 0
      %3194 = vmatpush.bf16.msra.mxu0 0
      %3195 = vmatpush.bf16.msra.mxu0 0
      %3196 = vmatpush.bf16.msra.mxu0 0
      %3197 = vmatpush.bf16.msra.mxu0 0
      %3198 = vmatpush.bf16.msra.mxu0 0
      %3199 = vmatpush.bf16.msra.mxu0 %v3099
      %3200 = vmatmul.bf16.gmra.mxu0 %v3075
      %v3201 = vpop.f32.mrf.mxu0
      %v3202 = vadd.f32 %v3072, %v3201
      %v3203 = vpop.f32.mrf.mxu0
      %3204 = vdwg.mxu0
      %v3205 = vadd.f32 %v3111, %v1423
      %v3206 = vadd.f32 %v3124, %v1424
      %v3207 = vadd.f32 %v3137, %v1425
      %v3208 = vadd.f32 %v3150, %v1426
      %v3209 = vadd.f32 %v3163, %v1427
      %v3210 = vadd.f32 %v3176, %v1428
      %v3211 = vadd.f32 %v3189, %v1429
      %v3212 = vadd.f32 %v3202, %v1430
      %v3213 = vadd.f32 %v3205, %v3206
      %v3214 = vadd.f32 %v3213, %v3207
      %v3215 = vadd.f32 %v3214, %v3208
      %v3216 = vadd.f32 %v3215, %v3209
      %v3217 = vadd.f32 %v3216, %v3210
      %v3218 = vadd.f32 %v3217, %v3211
      %v3219 = vadd.f32 %v3218, %v3212
      %3220 = vadd.xlane.f32.xlu0 %v3219
      %v3221 = vpop.xlane.xlu0 %3220
      %v3222 = vmul.f32 %v3221, %v1593
      %v3223 = vsub.f32 %v3205, %v3222
      %v3224 = vsub.f32 %v3206, %v3222
      %v3225 = vsub.f32 %v3207, %v3222
      %v3226 = vsub.f32 %v3208, %v3222
      %v3227 = vsub.f32 %v3209, %v3222
      %v3228 = vsub.f32 %v3210, %v3222
      %v3229 = vsub.f32 %v3211, %v3222
      %v3230 = vsub.f32 %v3212, %v3222
      %v3231 = vmul.f32 %v3223, %v3223
      %v3232 = vmul.f32 %v3224, %v3224
      %v3233 = vmul.f32 %v3225, %v3225
      %v3234 = vmul.f32 %v3226, %v3226
      %v3235 = vmul.f32 %v3227, %v3227
      %v3236 = vmul.f32 %v3228, %v3228
      %v3237 = vmul.f32 %v3229, %v3229
      %v3238 = vmul.f32 %v3230, %v3230
      %v3239 = vadd.f32 %v3231, %v3232
      %v3240 = vadd.f32 %v3239, %v3233
      %v3241 = vadd.f32 %v3240, %v3234
      %v3242 = vadd.f32 %v3241, %v3235
      %v3243 = vadd.f32 %v3242, %v3236
      %v3244 = vadd.f32 %v3243, %v3237
      %v3245 = vadd.f32 %v3244, %v3238
      %3246 = vadd.xlane.f32.xlu0 %v3245
      %v3247 = vpop.xlane.xlu0 %3246
      %v3248 = vmul.f32 %v3247, %v1593
      %v3249 = vadd.f32 %v3248, 1e-05
      %v3250 = vrsqrt.pop %v3249
      %v3251 = vmul.f32 %v3250, %v3249
      %v3252 = vmul.f32 %v3251, %v3250
      %v3253 = vmul.f32 0.5, %v3252
      %v3254 = vsub.f32 1.5, %v3253
      %v3255 = vmul.f32 %v3250, %v3254
      %vm3256 = vweird.f32 %v3249
      %vm3257 = vweird.f32 %v3250
      %vm3258 = vmor %vm3256, %vm3257
      %v3259 = vsel %vm3258, %v3250, %v3255
      %v3260 = vmul.f32 %v3223, %v3259
      %v3261 = vmul.f32 %v3224, %v3259
      %v3262 = vmul.f32 %v3225, %v3259
      %v3263 = vmul.f32 %v3226, %v3259
      %v3264 = vmul.f32 %v3227, %v3259
      %v3265 = vmul.f32 %v3228, %v3259
      %v3266 = vmul.f32 %v3229, %v3259
      %v3267 = vmul.f32 %v3230, %v3259
      %v3268 = vmax.f32 %v3260, 0.0
      %v3269 = vmax.f32 %v3261, 0.0
      %v3270 = vmax.f32 %v3262, 0.0
      %v3271 = vmax.f32 %v3263, 0.0
      %v3272 = vmax.f32 %v3264, 0.0
      %v3273 = vmax.f32 %v3265, 0.0
      %v3274 = vmax.f32 %v3266, 0.0
      %v3275 = vmax.f32 %v3267, 0.0
      %3276 = vst [vmem:[%s543] sm:$0xff] %v3268
      %3277 = vst [vmem:[%s543 + $0x8] sm:$0xff] %v3269
      %3278 = vst [vmem:[%s543 + $0x10] sm:$0xff] %v3270
      %3279 = vst [vmem:[%s543 + $0x18] sm:$0xff] %v3271
      %3280 = vst [vmem:[%s543 + $0x20] sm:$0xff] %v3272
      %3281 = vst [vmem:[%s543 + $0x28] sm:$0xff] %v3273
      %3282 = vst [vmem:[%s543 + $0x30] sm:$0xff] %v3274
      %3283 = vst [vmem:[%s543 + $0x38] sm:$0xff] %v3275
      %p3284 = scmp.lt.s32.totalorder %s29, 1
      %s3285 = scalar_select %p3284, %s29, 1
      %s3286 = smul.addr %s3285, 8
      %s3287 = smul.addr %s3286, 8
      %s3288 = scalar_lea.vmem %s16, %s3287
      // Predicated region
      $region85: #{attention_autoencoder_upsampling_block.3} parent=83 // pred_check
        %p3289 = pneg %p393
      $region86: #{attention_autoencoder_upsampling_block.3} parent=83 // pred_check_branch
        %3291 = sbr.rel (%p3289) target = $region88
      $region87: #{attention_autoencoder_upsampling_block.3} parent=83 // pred_region
        _
      $region88: #{attention_autoencoder_upsampling_block.3} parent=83 // pred_fallthru
        _
    $region84: #{attention_autoencoder_upsampling_block.3} parent=5 // pred_fallthru
      _
    %p3292 = scmp.le.s32.totalorder 2, %s24
    // Predicated region
    $region89: #{attention_autoencoder_upsampling_block.3} parent=5 // pred_check
      %p3293 = pneg %p3292
    $region90: #{attention_autoencoder_upsampling_block.3} parent=5 // pred_check_branch
      %3295 = sbr.rel (%p3293) target = $region92
    $region91: #{attention_autoencoder_upsampling_block.3} parent=5 // pred_region
      %s3296 = ssub.s32 %s24, 2
      // Predicated region
      $region93: #{attention_autoencoder_upsampling_block.3} parent=91 // pred_check
        %p3297 = pneg %p399
      $region94: #{attention_autoencoder_upsampling_block.3} parent=91 // pred_check_branch
        %3299 = sbr.rel (%p3297) target = $region96
      $region95: #{attention_autoencoder_upsampling_block.3} parent=91 // pred_region
        %p3300 = scmp.lt.s32.totalorder %s30, 1
        %s3301 = scalar_select %p3300, %s30, 1
        %s3302 = smul.addr %s3301, 8
        %s3303 = smul.addr %s3302, 8
        %s3304 = scalar_lea.vmem %s16, %s3303
      $region96: #{attention_autoencoder_upsampling_block.3} parent=91 // pred_fallthru
        _
    $region92: #{attention_autoencoder_upsampling_block.3} parent=5 // pred_fallthru
      _
  $region6: #{attention_autoencoder_upsampling_block.3} parent=0 // loop_footer
    %s28 = sadd.s32 1, %s24
  $region7: #{attention_autoencoder_upsampling_block.3} parent=0 // loop_footer_branch
    %23 = sbr.rel target = $region3
  $region8: #{attention_autoencoder_upsampling_block.3} parent=0 // loop_exit
    _

</llo_original>
